<compile_context>
chip_gen: v7x
topology: tpu7x:2x2x1
jax: 0.10.0
libtpu: 0.0.40
codegen_flags: <defaults>
</compile_context>

<pallas_src>
import jax
import jax.numpy as jnp
from jax.experimental import pallas as pl
from jax.experimental.pallas import tpu as pltpu


# ------------------------------ fused kernel --------------------------------

def _bi_lstm_kernel(x_ref, w_ih0_ref, w_hh0_ref, b0_ref,
                    w_ih1_ref, w_hh1_ref, b1_ref, w2_ref, b2_ref,
                    out_ref, gates_ref, act_f_ref, act_b_ref):
    """Fused 2-layer bidirectional LSTM + sigmoid head.

    x_ref:     (T*B, E)   time-major embedded inputs (row block t -> time t)
    w_ih0_ref: (E,  8H)   layer-0 input->gates, [fwd 4H | bwd 4H]
    w_hh0_ref: (H,  8H)   layer-0 hidden->gates, [fwd | bwd]
    b0_ref:    (1,  8H)   layer-0 (b_ih + b_hh), [fwd | bwd]
    w_ih1_ref: (2H, 8H)   layer-1 input->gates (input = [fwd act | bwd act])
    w_hh1_ref: (H,  8H)   layer-1 hidden->gates
    b1_ref:    (1,  8H)
    w2_ref:    (2H, C)    classifier weight (transposed)
    b2_ref:    (1,  C)
    out_ref:   (B,  C)    sigmoid probabilities
    gates_ref: (T*B, 8H)  scratch: hoisted per-step input gates (reused per layer)
    act_f_ref: (T*B, H)   scratch: layer-0 forward hidden sequence
    act_b_ref: (T*B, H)   scratch: layer-0 backward hidden sequence
    """
    TB, H = act_f_ref.shape
    B = out_ref.shape[0]
    T = TB // B
    G = 4 * H

    def cell(pre, h, c, w_hh):
        """One LSTM cell step. PyTorch gate order: i, f, g, o."""
        g = pre + jnp.dot(h, w_hh, preferred_element_type=jnp.float32)
        sg = jax.nn.sigmoid(g)     # whole-vector EUP pass
        tg = jnp.tanh(g)           # whole-vector EUP pass
        i_g = sg[:, 0:H]
        f_g = sg[:, H:2 * H]
        g_g = tg[:, 2 * H:3 * H]
        o_g = sg[:, 3 * H:4 * H]
        c_new = f_g * c + i_g * g_g
        h_new = o_g * jnp.tanh(c_new)
        return h_new, c_new

    zeros = jnp.zeros((B, H), jnp.float32)

    # Hoist weight reads out of the (fully unrolled) time loops.
    w_hh0 = w_hh0_ref[...]
    w_hh0_f, w_hh0_b = w_hh0[:, 0:G], w_hh0[:, G:2 * G]
    w_hh1 = w_hh1_ref[...]
    w_hh1_f, w_hh1_b = w_hh1[:, 0:G], w_hh1[:, G:2 * G]
    w_ih1 = w_ih1_ref[...]
    w2 = w2_ref[...]

    # ---- layer 0: input projection for all T steps and both directions ----
    gates_ref[...] = (
        jnp.dot(x_ref[...], w_ih0_ref[...], preferred_element_type=jnp.float32)
        + b0_ref[...])                                       # (T*B, 8H)

    # forward direction
    h, c = zeros, zeros
    for t in range(T):
        row = gates_ref[t * B:(t + 1) * B, :]
        h, c = cell(row[:, 0:G], h, c, w_hh0_f)
        act_f_ref[t * B:(t + 1) * B, :] = h

    # backward direction
    h, c = zeros, zeros
    for s in range(T):
        t = T - 1 - s
        row = gates_ref[t * B:(t + 1) * B, :]
        h, c = cell(row[:, G:2 * G], h, c, w_hh0_b)
        act_b_ref[t * B:(t + 1) * B, :] = h

    # TODO(synk): inter-layer dropout (p=0.5) applies only in training mode;
    # omitted here (inference semantics).

    # ---- layer 1: hoisted input projection from layer-0 activations ----
    gates_ref[...] = (
        jnp.dot(act_f_ref[...], w_ih1[0:H, :], preferred_element_type=jnp.float32)
        + jnp.dot(act_b_ref[...], w_ih1[H:2 * H, :], preferred_element_type=jnp.float32)
        + b1_ref[...])                                       # (T*B, 8H)

    # forward direction: only the final hidden state feeds the head.
    h, c = zeros, zeros
    for t in range(T):
        row = gates_ref[t * B:(t + 1) * B, :]
        h, c = cell(row[:, 0:G], h, c, w_hh1_f)
    h_fwd_last = h

    # backward direction at time T-1 is its FIRST step (zero initial state),
    # which is exactly what PyTorch's output[:, -1, H:2H] contains.
    row = gates_ref[(T - 1) * B:T * B, :]
    h_bwd_last, _ = cell(row[:, G:2 * G], zeros, zeros, w_hh1_b)

    # ---- head: sigmoid([h_fwd | h_bwd] @ W2 + b2) ----
    logits = (jnp.dot(h_fwd_last, w2[0:H, :], preferred_element_type=jnp.float32)
              + jnp.dot(h_bwd_last, w2[H:2 * H, :], preferred_element_type=jnp.float32)
              + b2_ref[...])
    out_ref[...] = jax.nn.sigmoid(logits)


# ------------------------------ parameter init -------------------------------

def init_params(key, *, vocab=10001, n_components=16, hidden_size=32,
                num_classes=43):
    """Build parameters directly in the fused [fwd | bwd] layout."""
    H = hidden_size
    ks = iter(jax.random.split(key, 32))

    def uniform(shape, bound):
        return jax.random.uniform(next(ks), shape, jnp.float32, -bound, bound)

    def direction(in_size, bound):
        w_ih = uniform((4 * H, in_size), bound)   # PyTorch (4H, in) layout
        w_hh = uniform((4 * H, H), bound)
        b_ih = uniform((4 * H,), bound)
        b_hh = uniform((4 * H,), bound)
        return w_ih.T, w_hh.T, b_ih + b_hh        # transposed for x @ W

    params = {}
    emb = 0.02 * jax.random.normal(next(ks), (vocab, n_components), jnp.float32)
    params["embedding"] = emb.at[0].set(0.0)      # padding_idx=0

    k_lstm = hidden_size ** -0.5
    # layer 0 (input = n_components)
    wih_f, whh_f, b_f = direction(n_components, k_lstm)
    wih_b, whh_b, b_b = direction(n_components, k_lstm)
    params["w_ih0"] = jnp.concatenate([wih_f, wih_b], axis=1)   # (E, 8H)
    params["w_hh0"] = jnp.concatenate([whh_f, whh_b], axis=1)   # (H, 8H)
    params["b0"] = jnp.concatenate([b_f, b_b]).reshape(1, -1)   # (1, 8H)
    # layer 1 (input = 2H)
    wih_f, whh_f, b_f = direction(2 * H, k_lstm)
    wih_b, whh_b, b_b = direction(2 * H, k_lstm)
    params["w_ih1"] = jnp.concatenate([wih_f, wih_b], axis=1)   # (2H, 8H)
    params["w_hh1"] = jnp.concatenate([whh_f, whh_b], axis=1)   # (H, 8H)
    params["b1"] = jnp.concatenate([b_f, b_b]).reshape(1, -1)   # (1, 8H)
    # head
    k_head = (2 * H) ** -0.5
    params["w2"] = uniform((num_classes, 2 * H), k_head).T      # (2H, C)
    params["b2"] = uniform((num_classes,), k_head).reshape(1, -1)
    return params


# ------------------------------- forward pass --------------------------------

@jax.jit
def bi_lstm_forward(tokens, params):
    """tokens: (B, T) int32 -> (B, num_classes) f32 sigmoid probabilities."""
    B, T = tokens.shape
    emb = jnp.take(params["embedding"], tokens, axis=0)          # (B, T, E)
    E = emb.shape[-1]
    x = jnp.transpose(emb, (1, 0, 2)).reshape(T * B, E)          # time-major
    H = params["w_hh0"].shape[0]
    C = params["w2"].shape[1]

    return pl.pallas_call(
        _bi_lstm_kernel,
        out_shape=jax.ShapeDtypeStruct((B, C), jnp.float32),
        scratch_shapes=[
            pltpu.VMEM((T * B, 8 * H), jnp.float32),   # hoisted input gates
            pltpu.VMEM((T * B, H), jnp.float32),       # layer-0 fwd hidden seq
            pltpu.VMEM((T * B, H), jnp.float32),       # layer-0 bwd hidden seq
        ],
    )(x, params["w_ih0"], params["w_hh0"], params["b0"],
      params["w_ih1"], params["w_hh1"], params["b1"],
      params["w2"], params["b2"])


# ----------------------------------- main ------------------------------------

if __name__ == "__main__":
    B, T = 2, 8
    VOCAB, E, H, C = 10001, 16, 32, 43

    key = jax.random.PRNGKey(0)
    k_tok, k_param = jax.random.split(key)

    tokens = jax.random.randint(k_tok, (B, T), 0, VOCAB, dtype=jnp.int32)
    params = init_params(k_param, vocab=VOCAB, n_components=E,
                         hidden_size=H, num_classes=C)

    out = jax.block_until_ready(bi_lstm_forward(tokens, params))

    assert out.shape == (B, C), out.shape
    assert out.dtype == jnp.float32
    assert bool(jnp.all(jnp.isfinite(out)))
    assert bool(jnp.all((out >= 0.0) & (out <= 1.0)))
    print("KERNEL_OK")
</pallas_src>

<mosaic_0001>
module attributes {stable_mosaic.version = 11 : i64} {
  func.func @_bi_lstm_kernel(%arg0: memref<16x16xf32, #tpu.memory_space<vmem>>, %arg1: memref<16x256xf32, #tpu.memory_space<vmem>>, %arg2: memref<32x256xf32, #tpu.memory_space<vmem>>, %arg3: memref<1x256xf32, #tpu.memory_space<vmem>>, %arg4: memref<64x256xf32, #tpu.memory_space<vmem>>, %arg5: memref<32x256xf32, #tpu.memory_space<vmem>>, %arg6: memref<1x256xf32, #tpu.memory_space<vmem>>, %arg7: memref<64x43xf32, #tpu.memory_space<vmem>>, %arg8: memref<1x43xf32, #tpu.memory_space<vmem>>, %arg9: memref<2x43xf32, #tpu.memory_space<vmem>>, %arg10: memref<16x256xf32, #tpu.memory_space<vmem>>, %arg11: memref<16x32xf32, #tpu.memory_space<vmem>>, %arg12: memref<16x32xf32, #tpu.memory_space<vmem>>) attributes {dimension_semantics = [], scalar_prefetch = 0 : i64, scratch_operands = 3 : i64, tpu.core_type = #tpu.core_type<tc>} {
    %cst = arith.constant 0.000000e+00 : f32
    %0 = vector.broadcast %cst : f32 to vector<2x32xf32>
    %c0 = arith.constant 0 : index
    %c0_0 = arith.constant 0 : index
    %1 = vector.load %arg2[%c0, %c0_0] : memref<32x256xf32, #tpu.memory_space<vmem>>, vector<32x256xf32>
    %2 = vector.extract_strided_slice %1 {offsets = [0, 0], sizes = [32, 128], strides = [1, 1]} : vector<32x256xf32> to vector<32x128xf32>
    %3 = vector.extract_strided_slice %1 {offsets = [0, 128], sizes = [32, 128], strides = [1, 1]} : vector<32x256xf32> to vector<32x128xf32>
    %c0_1 = arith.constant 0 : index
    %c0_2 = arith.constant 0 : index
    %4 = vector.load %arg5[%c0_1, %c0_2] : memref<32x256xf32, #tpu.memory_space<vmem>>, vector<32x256xf32>
    %5 = vector.extract_strided_slice %4 {offsets = [0, 0], sizes = [32, 128], strides = [1, 1]} : vector<32x256xf32> to vector<32x128xf32>
    %6 = vector.extract_strided_slice %4 {offsets = [0, 128], sizes = [32, 128], strides = [1, 1]} : vector<32x256xf32> to vector<32x128xf32>
    %c0_3 = arith.constant 0 : index
    %c0_4 = arith.constant 0 : index
    %7 = vector.load %arg4[%c0_3, %c0_4] : memref<64x256xf32, #tpu.memory_space<vmem>>, vector<64x256xf32>
    %c0_5 = arith.constant 0 : index
    %c0_6 = arith.constant 0 : index
    %8 = vector.load %arg7[%c0_5, %c0_6] : memref<64x43xf32, #tpu.memory_space<vmem>>, vector<64x43xf32>
    %c0_7 = arith.constant 0 : index
    %c0_8 = arith.constant 0 : index
    %9 = vector.load %arg0[%c0_7, %c0_8] : memref<16x16xf32, #tpu.memory_space<vmem>>, vector<16x16xf32>
    %c0_9 = arith.constant 0 : index
    %c0_10 = arith.constant 0 : index
    %10 = vector.load %arg1[%c0_9, %c0_10] : memref<16x256xf32, #tpu.memory_space<vmem>>, vector<16x256xf32>
    %cst_11 = arith.constant dense<0.000000e+00> : vector<16x256xf32>
    %11 = tpu.matmul %9, %10, %cst_11 {dimension_numbers = #tpu.dot_dimension_numbers<[1], [0], [0], [1], [0, 0, 1, 1], [], []>} : vector<16x16xf32>, vector<16x256xf32>, vector<16x256xf32> -> vector<16x256xf32>
    %c0_12 = arith.constant 0 : index
    %c0_13 = arith.constant 0 : index
    %12 = vector.load %arg3[%c0_12, %c0_13] : memref<1x256xf32, #tpu.memory_space<vmem>>, vector<1x256xf32>
    %13 = vector.broadcast %12 : vector<1x256xf32> to vector<16x256xf32>
    %14 = arith.addf %11, %13 : vector<16x256xf32>
    %c0_14 = arith.constant 0 : index
    %c0_15 = arith.constant 0 : index
    %15 = vector.load %arg10[%c0_14, %c0_15] : memref<16x256xf32, #tpu.memory_space<vmem>>, vector<16x256xf32>
    tpu.vector_store %arg10[%c0_14, %c0_15], %14 {strides = array<i32>} : memref<16x256xf32, #tpu.memory_space<vmem>>, vector<16x256xf32>,
    %c0_16 = arith.constant 0 : index
    %c0_17 = arith.constant 0 : index
    %16 = vector.load %arg10[%c0_16, %c0_17] : memref<16x256xf32, #tpu.memory_space<vmem>>, vector<2x256xf32>
    %17 = vector.extract_strided_slice %16 {offsets = [0, 0], sizes = [2, 128], strides = [1, 1]} : vector<2x256xf32> to vector<2x128xf32>
    %cst_18 = arith.constant dense<0.000000e+00> : vector<2x128xf32>
    %18 = tpu.matmul %0, %2, %cst_18 {dimension_numbers = #tpu.dot_dimension_numbers<[1], [0], [0], [1], [0, 0, 1, 1], [], []>} : vector<2x32xf32>, vector<32x128xf32>, vector<2x128xf32> -> vector<2x128xf32>
    %19 = arith.addf %17, %18 : vector<2x128xf32>
    %20 = arith.negf %19 : vector<2x128xf32>
    %21 = math.exp %20 : vector<2x128xf32>
    %cst_19 = arith.constant 1.000000e+00 : f32
    %22 = vector.broadcast %cst_19 : f32 to vector<2x128xf32>
    %23 = arith.addf %22, %21 : vector<2x128xf32>
    %24 = arith.divf %22, %23 : vector<2x128xf32>
    %25 = math.tanh %19 : vector<2x128xf32>
    %26 = vector.extract_strided_slice %24 {offsets = [0, 0], sizes = [2, 32], strides = [1, 1]} : vector<2x128xf32> to vector<2x32xf32>
    %27 = vector.extract_strided_slice %24 {offsets = [0, 32], sizes = [2, 32], strides = [1, 1]} : vector<2x128xf32> to vector<2x32xf32>
    %28 = vector.extract_strided_slice %25 {offsets = [0, 64], sizes = [2, 32], strides = [1, 1]} : vector<2x128xf32> to vector<2x32xf32>
    %29 = vector.extract_strided_slice %24 {offsets = [0, 96], sizes = [2, 32], strides = [1, 1]} : vector<2x128xf32> to vector<2x32xf32>
    %30 = arith.mulf %27, %0 : vector<2x32xf32>
    %31 = arith.mulf %26, %28 : vector<2x32xf32>
    %32 = arith.addf %30, %31 : vector<2x32xf32>
    %33 = math.tanh %32 : vector<2x32xf32>
    %34 = arith.mulf %29, %33 : vector<2x32xf32>
    %c0_20 = arith.constant 0 : index
    %c0_21 = arith.constant 0 : index
    %35 = vector.load %arg11[%c0_20, %c0_21] : memref<16x32xf32, #tpu.memory_space<vmem>>, vector<2x32xf32>
    tpu.vector_store %arg11[%c0_20, %c0_21], %34 {strides = array<i32>} : memref<16x32xf32, #tpu.memory_space<vmem>>, vector<2x32xf32>,
    %c2 = arith.constant 2 : index
    %c0_22 = arith.constant 0 : index
    %36 = vector.load %arg10[%c2, %c0_22] : memref<16x256xf32, #tpu.memory_space<vmem>>, vector<2x256xf32>
    %37 = vector.extract_strided_slice %36 {offsets = [0, 0], sizes = [2, 128], strides = [1, 1]} : vector<2x256xf32> to vector<2x128xf32>
    %cst_23 = arith.constant dense<0.000000e+00> : vector<2x128xf32>
    %38 = tpu.matmul %34, %2, %cst_23 {dimension_numbers = #tpu.dot_dimension_numbers<[1], [0], [0], [1], [0, 0, 1, 1], [], []>} : vector<2x32xf32>, vector<32x128xf32>, vector<2x128xf32> -> vector<2x128xf32>
    %39 = arith.addf %37, %38 : vector<2x128xf32>
    %40 = arith.negf %39 : vector<2x128xf32>
    %41 = math.exp %40 : vector<2x128xf32>
    %cst_24 = arith.constant 1.000000e+00 : f32
    %42 = vector.broadcast %cst_24 : f32 to vector<2x128xf32>
    %43 = arith.addf %42, %41 : vector<2x128xf32>
    %44 = arith.divf %42, %43 : vector<2x128xf32>
    %45 = math.tanh %39 : vector<2x128xf32>
    %46 = vector.extract_strided_slice %44 {offsets = [0, 0], sizes = [2, 32], strides = [1, 1]} : vector<2x128xf32> to vector<2x32xf32>
    %47 = vector.extract_strided_slice %44 {offsets = [0, 32], sizes = [2, 32], strides = [1, 1]} : vector<2x128xf32> to vector<2x32xf32>
    %48 = vector.extract_strided_slice %45 {offsets = [0, 64], sizes = [2, 32], strides = [1, 1]} : vector<2x128xf32> to vector<2x32xf32>
    %49 = vector.extract_strided_slice %44 {offsets = [0, 96], sizes = [2, 32], strides = [1, 1]} : vector<2x128xf32> to vector<2x32xf32>
    %50 = arith.mulf %47, %32 : vector<2x32xf32>
    %51 = arith.mulf %46, %48 : vector<2x32xf32>
    %52 = arith.addf %50, %51 : vector<2x32xf32>
    %53 = math.tanh %52 : vector<2x32xf32>
    %54 = arith.mulf %49, %53 : vector<2x32xf32>
    %c2_25 = arith.constant 2 : index
    %c0_26 = arith.constant 0 : index
    %55 = vector.load %arg11[%c2_25, %c0_26] : memref<16x32xf32, #tpu.memory_space<vmem>>, vector<2x32xf32>
    tpu.vector_store %arg11[%c2_25, %c0_26], %54 {strides = array<i32>} : memref<16x32xf32, #tpu.memory_space<vmem>>, vector<2x32xf32>,
    %c4 = arith.constant 4 : index
    %c0_27 = arith.constant 0 : index
    %56 = vector.load %arg10[%c4, %c0_27] : memref<16x256xf32, #tpu.memory_space<vmem>>, vector<2x256xf32>
    %57 = vector.extract_strided_slice %56 {offsets = [0, 0], sizes = [2, 128], strides = [1, 1]} : vector<2x256xf32> to vector<2x128xf32>
    %cst_28 = arith.constant dense<0.000000e+00> : vector<2x128xf32>
    %58 = tpu.matmul %54, %2, %cst_28 {dimension_numbers = #tpu.dot_dimension_numbers<[1], [0], [0], [1], [0, 0, 1, 1], [], []>} : vector<2x32xf32>, vector<32x128xf32>, vector<2x128xf32> -> vector<2x128xf32>
    %59 = arith.addf %57, %58 : vector<2x128xf32>
    %60 = arith.negf %59 : vector<2x128xf32>
    %61 = math.exp %60 : vector<2x128xf32>
    %cst_29 = arith.constant 1.000000e+00 : f32
    %62 = vector.broadcast %cst_29 : f32 to vector<2x128xf32>
    %63 = arith.addf %62, %61 : vector<2x128xf32>
    %64 = arith.divf %62, %63 : vector<2x128xf32>
    %65 = math.tanh %59 : vector<2x128xf32>
    %66 = vector.extract_strided_slice %64 {offsets = [0, 0], sizes = [2, 32], strides = [1, 1]} : vector<2x128xf32> to vector<2x32xf32>
    %67 = vector.extract_strided_slice %64 {offsets = [0, 32], sizes = [2, 32], strides = [1, 1]} : vector<2x128xf32> to vector<2x32xf32>
    %68 = vector.extract_strided_slice %65 {offsets = [0, 64], sizes = [2, 32], strides = [1, 1]} : vector<2x128xf32> to vector<2x32xf32>
    %69 = vector.extract_strided_slice %64 {offsets = [0, 96], sizes = [2, 32], strides = [1, 1]} : vector<2x128xf32> to vector<2x32xf32>
    %70 = arith.mulf %67, %52 : vector<2x32xf32>
    %71 = arith.mulf %66, %68 : vector<2x32xf32>
    %72 = arith.addf %70, %71 : vector<2x32xf32>
    %73 = math.tanh %72 : vector<2x32xf32>
    %74 = arith.mulf %69, %73 : vector<2x32xf32>
    %c4_30 = arith.constant 4 : index
    %c0_31 = arith.constant 0 : index
    %75 = vector.load %arg11[%c4_30, %c0_31] : memref<16x32xf32, #tpu.memory_space<vmem>>, vector<2x32xf32>
    tpu.vector_store %arg11[%c4_30, %c0_31], %74 {strides = array<i32>} : memref<16x32xf32, #tpu.memory_space<vmem>>, vector<2x32xf32>,
    %c6 = arith.constant 6 : index
    %c0_32 = arith.constant 0 : index
    %76 = vector.load %arg10[%c6, %c0_32] : memref<16x256xf32, #tpu.memory_space<vmem>>, vector<2x256xf32>
    %77 = vector.extract_strided_slice %76 {offsets = [0, 0], sizes = [2, 128], strides = [1, 1]} : vector<2x256xf32> to vector<2x128xf32>
    %cst_33 = arith.constant dense<0.000000e+00> : vector<2x128xf32>
    %78 = tpu.matmul %74, %2, %cst_33 {dimension_numbers = #tpu.dot_dimension_numbers<[1], [0], [0], [1], [0, 0, 1, 1], [], []>} : vector<2x32xf32>, vector<32x128xf32>, vector<2x128xf32> -> vector<2x128xf32>
    %79 = arith.addf %77, %78 : vector<2x128xf32>
    %80 = arith.negf %79 : vector<2x128xf32>
    %81 = math.exp %80 : vector<2x128xf32>
    %cst_34 = arith.constant 1.000000e+00 : f32
    %82 = vector.broadcast %cst_34 : f32 to vector<2x128xf32>
    %83 = arith.addf %82, %81 : vector<2x128xf32>
    %84 = arith.divf %82, %83 : vector<2x128xf32>
    %85 = math.tanh %79 : vector<2x128xf32>
    %86 = vector.extract_strided_slice %84 {offsets = [0, 0], sizes = [2, 32], strides = [1, 1]} : vector<2x128xf32> to vector<2x32xf32>
    %87 = vector.extract_strided_slice %84 {offsets = [0, 32], sizes = [2, 32], strides = [1, 1]} : vector<2x128xf32> to vector<2x32xf32>
    %88 = vector.extract_strided_slice %85 {offsets = [0, 64], sizes = [2, 32], strides = [1, 1]} : vector<2x128xf32> to vector<2x32xf32>
    %89 = vector.extract_strided_slice %84 {offsets = [0, 96], sizes = [2, 32], strides = [1, 1]} : vector<2x128xf32> to vector<2x32xf32>
    %90 = arith.mulf %87, %72 : vector<2x32xf32>
    %91 = arith.mulf %86, %88 : vector<2x32xf32>
    %92 = arith.addf %90, %91 : vector<2x32xf32>
    %93 = math.tanh %92 : vector<2x32xf32>
    %94 = arith.mulf %89, %93 : vector<2x32xf32>
    %c6_35 = arith.constant 6 : index
    %c0_36 = arith.constant 0 : index
    %95 = vector.load %arg11[%c6_35, %c0_36] : memref<16x32xf32, #tpu.memory_space<vmem>>, vector<2x32xf32>
    tpu.vector_store %arg11[%c6_35, %c0_36], %94 {strides = array<i32>} : memref<16x32xf32, #tpu.memory_space<vmem>>, vector<2x32xf32>,
    %c8 = arith.constant 8 : index
    %c0_37 = arith.constant 0 : index
    %96 = vector.load %arg10[%c8, %c0_37] : memref<16x256xf32, #tpu.memory_space<vmem>>, vector<2x256xf32>
    %97 = vector.extract_strided_slice %96 {offsets = [0, 0], sizes = [2, 128], strides = [1, 1]} : vector<2x256xf32> to vector<2x128xf32>
    %cst_38 = arith.constant dense<0.000000e+00> : vector<2x128xf32>
    %98 = tpu.matmul %94, %2, %cst_38 {dimension_numbers = #tpu.dot_dimension_numbers<[1], [0], [0], [1], [0, 0, 1, 1], [], []>} : vector<2x32xf32>, vector<32x128xf32>, vector<2x128xf32> -> vector<2x128xf32>
    %99 = arith.addf %97, %98 : vector<2x128xf32>
    %100 = arith.negf %99 : vector<2x128xf32>
    %101 = math.exp %100 : vector<2x128xf32>
    %cst_39 = arith.constant 1.000000e+00 : f32
    %102 = vector.broadcast %cst_39 : f32 to vector<2x128xf32>
    %103 = arith.addf %102, %101 : vector<2x128xf32>
    %104 = arith.divf %102, %103 : vector<2x128xf32>
    %105 = math.tanh %99 : vector<2x128xf32>
    %106 = vector.extract_strided_slice %104 {offsets = [0, 0], sizes = [2, 32], strides = [1, 1]} : vector<2x128xf32> to vector<2x32xf32>
    %107 = vector.extract_strided_slice %104 {offsets = [0, 32], sizes = [2, 32], strides = [1, 1]} : vector<2x128xf32> to vector<2x32xf32>
    %108 = vector.extract_strided_slice %105 {offsets = [0, 64], sizes = [2, 32], strides = [1, 1]} : vector<2x128xf32> to vector<2x32xf32>
    %109 = vector.extract_strided_slice %104 {offsets = [0, 96], sizes = [2, 32], strides = [1, 1]} : vector<2x128xf32> to vector<2x32xf32>
    %110 = arith.mulf %107, %92 : vector<2x32xf32>
    %111 = arith.mulf %106, %108 : vector<2x32xf32>
    %112 = arith.addf %110, %111 : vector<2x32xf32>
    %113 = math.tanh %112 : vector<2x32xf32>
    %114 = arith.mulf %109, %113 : vector<2x32xf32>
    %c8_40 = arith.constant 8 : index
    %c0_41 = arith.constant 0 : index
    %115 = vector.load %arg11[%c8_40, %c0_41] : memref<16x32xf32, #tpu.memory_space<vmem>>, vector<2x32xf32>
    tpu.vector_store %arg11[%c8_40, %c0_41], %114 {strides = array<i32>} : memref<16x32xf32, #tpu.memory_space<vmem>>, vector<2x32xf32>,
    %c10 = arith.constant 10 : index
    %c0_42 = arith.constant 0 : index
    %116 = vector.load %arg10[%c10, %c0_42] : memref<16x256xf32, #tpu.memory_space<vmem>>, vector<2x256xf32>
    %117 = vector.extract_strided_slice %116 {offsets = [0, 0], sizes = [2, 128], strides = [1, 1]} : vector<2x256xf32> to vector<2x128xf32>
    %cst_43 = arith.constant dense<0.000000e+00> : vector<2x128xf32>
    %118 = tpu.matmul %114, %2, %cst_43 {dimension_numbers = #tpu.dot_dimension_numbers<[1], [0], [0], [1], [0, 0, 1, 1], [], []>} : vector<2x32xf32>, vector<32x128xf32>, vector<2x128xf32> -> vector<2x128xf32>
    %119 = arith.addf %117, %118 : vector<2x128xf32>
    %120 = arith.negf %119 : vector<2x128xf32>
    %121 = math.exp %120 : vector<2x128xf32>
    %cst_44 = arith.constant 1.000000e+00 : f32
    %122 = vector.broadcast %cst_44 : f32 to vector<2x128xf32>
    %123 = arith.addf %122, %121 : vector<2x128xf32>
    %124 = arith.divf %122, %123 : vector<2x128xf32>
    %125 = math.tanh %119 : vector<2x128xf32>
    %126 = vector.extract_strided_slice %124 {offsets = [0, 0], sizes = [2, 32], strides = [1, 1]} : vector<2x128xf32> to vector<2x32xf32>
    %127 = vector.extract_strided_slice %124 {offsets = [0, 32], sizes = [2, 32], strides = [1, 1]} : vector<2x128xf32> to vector<2x32xf32>
    %128 = vector.extract_strided_slice %125 {offsets = [0, 64], sizes = [2, 32], strides = [1, 1]} : vector<2x128xf32> to vector<2x32xf32>
    %129 = vector.extract_strided_slice %124 {offsets = [0, 96], sizes = [2, 32], strides = [1, 1]} : vector<2x128xf32> to vector<2x32xf32>
    %130 = arith.mulf %127, %112 : vector<2x32xf32>
    %131 = arith.mulf %126, %128 : vector<2x32xf32>
    %132 = arith.addf %130, %131 : vector<2x32xf32>
    %133 = math.tanh %132 : vector<2x32xf32>
    %134 = arith.mulf %129, %133 : vector<2x32xf32>
    %c10_45 = arith.constant 10 : index
    %c0_46 = arith.constant 0 : index
    %135 = vector.load %arg11[%c10_45, %c0_46] : memref<16x32xf32, #tpu.memory_space<vmem>>, vector<2x32xf32>
    tpu.vector_store %arg11[%c10_45, %c0_46], %134 {strides = array<i32>} : memref<16x32xf32, #tpu.memory_space<vmem>>, vector<2x32xf32>,
    %c12 = arith.constant 12 : index
    %c0_47 = arith.constant 0 : index
    %136 = vector.load %arg10[%c12, %c0_47] : memref<16x256xf32, #tpu.memory_space<vmem>>, vector<2x256xf32>
    %137 = vector.extract_strided_slice %136 {offsets = [0, 0], sizes = [2, 128], strides = [1, 1]} : vector<2x256xf32> to vector<2x128xf32>
    %cst_48 = arith.constant dense<0.000000e+00> : vector<2x128xf32>
    %138 = tpu.matmul %134, %2, %cst_48 {dimension_numbers = #tpu.dot_dimension_numbers<[1], [0], [0], [1], [0, 0, 1, 1], [], []>} : vector<2x32xf32>, vector<32x128xf32>, vector<2x128xf32> -> vector<2x128xf32>
    %139 = arith.addf %137, %138 : vector<2x128xf32>
    %140 = arith.negf %139 : vector<2x128xf32>
    %141 = math.exp %140 : vector<2x128xf32>
    %cst_49 = arith.constant 1.000000e+00 : f32
    %142 = vector.broadcast %cst_49 : f32 to vector<2x128xf32>
    %143 = arith.addf %142, %141 : vector<2x128xf32>
    %144 = arith.divf %142, %143 : vector<2x128xf32>
    %145 = math.tanh %139 : vector<2x128xf32>
    %146 = vector.extract_strided_slice %144 {offsets = [0, 0], sizes = [2, 32], strides = [1, 1]} : vector<2x128xf32> to vector<2x32xf32>
    %147 = vector.extract_strided_slice %144 {offsets = [0, 32], sizes = [2, 32], strides = [1, 1]} : vector<2x128xf32> to vector<2x32xf32>
    %148 = vector.extract_strided_slice %145 {offsets = [0, 64], sizes = [2, 32], strides = [1, 1]} : vector<2x128xf32> to vector<2x32xf32>
    %149 = vector.extract_strided_slice %144 {offsets = [0, 96], sizes = [2, 32], strides = [1, 1]} : vector<2x128xf32> to vector<2x32xf32>
    %150 = arith.mulf %147, %132 : vector<2x32xf32>
    %151 = arith.mulf %146, %148 : vector<2x32xf32>
    %152 = arith.addf %150, %151 : vector<2x32xf32>
    %153 = math.tanh %152 : vector<2x32xf32>
    %154 = arith.mulf %149, %153 : vector<2x32xf32>
    %c12_50 = arith.constant 12 : index
    %c0_51 = arith.constant 0 : index
    %155 = vector.load %arg11[%c12_50, %c0_51] : memref<16x32xf32, #tpu.memory_space<vmem>>, vector<2x32xf32>
    tpu.vector_store %arg11[%c12_50, %c0_51], %154 {strides = array<i32>} : memref<16x32xf32, #tpu.memory_space<vmem>>, vector<2x32xf32>,
    %c14 = arith.constant 14 : index
    %c0_52 = arith.constant 0 : index
    %156 = vector.load %arg10[%c14, %c0_52] : memref<16x256xf32, #tpu.memory_space<vmem>>, vector<2x256xf32>
    %157 = vector.extract_strided_slice %156 {offsets = [0, 0], sizes = [2, 128], strides = [1, 1]} : vector<2x256xf32> to vector<2x128xf32>
    %cst_53 = arith.constant dense<0.000000e+00> : vector<2x128xf32>
    %158 = tpu.matmul %154, %2, %cst_53 {dimension_numbers = #tpu.dot_dimension_numbers<[1], [0], [0], [1], [0, 0, 1, 1], [], []>} : vector<2x32xf32>, vector<32x128xf32>, vector<2x128xf32> -> vector<2x128xf32>
    %159 = arith.addf %157, %158 : vector<2x128xf32>
    %160 = arith.negf %159 : vector<2x128xf32>
    %161 = math.exp %160 : vector<2x128xf32>
    %cst_54 = arith.constant 1.000000e+00 : f32
    %162 = vector.broadcast %cst_54 : f32 to vector<2x128xf32>
    %163 = arith.addf %162, %161 : vector<2x128xf32>
    %164 = arith.divf %162, %163 : vector<2x128xf32>
    %165 = math.tanh %159 : vector<2x128xf32>
    %166 = vector.extract_strided_slice %164 {offsets = [0, 0], sizes = [2, 32], strides = [1, 1]} : vector<2x128xf32> to vector<2x32xf32>
    %167 = vector.extract_strided_slice %164 {offsets = [0, 32], sizes = [2, 32], strides = [1, 1]} : vector<2x128xf32> to vector<2x32xf32>
    %168 = vector.extract_strided_slice %165 {offsets = [0, 64], sizes = [2, 32], strides = [1, 1]} : vector<2x128xf32> to vector<2x32xf32>
    %169 = vector.extract_strided_slice %164 {offsets = [0, 96], sizes = [2, 32], strides = [1, 1]} : vector<2x128xf32> to vector<2x32xf32>
    %170 = arith.mulf %167, %152 : vector<2x32xf32>
    %171 = arith.mulf %166, %168 : vector<2x32xf32>
    %172 = arith.addf %170, %171 : vector<2x32xf32>
    %173 = math.tanh %172 : vector<2x32xf32>
    %174 = arith.mulf %169, %173 : vector<2x32xf32>
    %c14_55 = arith.constant 14 : index
    %c0_56 = arith.constant 0 : index
    %175 = vector.load %arg11[%c14_55, %c0_56] : memref<16x32xf32, #tpu.memory_space<vmem>>, vector<2x32xf32>
    tpu.vector_store %arg11[%c14_55, %c0_56], %174 {strides = array<i32>} : memref<16x32xf32, #tpu.memory_space<vmem>>, vector<2x32xf32>,
    %c14_57 = arith.constant 14 : index
    %c0_58 = arith.constant 0 : index
    %176 = vector.load %arg10[%c14_57, %c0_58] : memref<16x256xf32, #tpu.memory_space<vmem>>, vector<2x256xf32>
    %177 = vector.extract_strided_slice %176 {offsets = [0, 128], sizes = [2, 128], strides = [1, 1]} : vector<2x256xf32> to vector<2x128xf32>
    %cst_59 = arith.constant dense<0.000000e+00> : vector<2x128xf32>
    %178 = tpu.matmul %0, %3, %cst_59 {dimension_numbers = #tpu.dot_dimension_numbers<[1], [0], [0], [1], [0, 0, 1, 1], [], []>} : vector<2x32xf32>, vector<32x128xf32>, vector<2x128xf32> -> vector<2x128xf32>
    %179 = arith.addf %177, %178 : vector<2x128xf32>
    %180 = arith.negf %179 : vector<2x128xf32>
    %181 = math.exp %180 : vector<2x128xf32>
    %cst_60 = arith.constant 1.000000e+00 : f32
    %182 = vector.broadcast %cst_60 : f32 to vector<2x128xf32>
    %183 = arith.addf %182, %181 : vector<2x128xf32>
    %184 = arith.divf %182, %183 : vector<2x128xf32>
    %185 = math.tanh %179 : vector<2x128xf32>
    %186 = vector.extract_strided_slice %184 {offsets = [0, 0], sizes = [2, 32], strides = [1, 1]} : vector<2x128xf32> to vector<2x32xf32>
    %187 = vector.extract_strided_slice %184 {offsets = [0, 32], sizes = [2, 32], strides = [1, 1]} : vector<2x128xf32> to vector<2x32xf32>
    %188 = vector.extract_strided_slice %185 {offsets = [0, 64], sizes = [2, 32], strides = [1, 1]} : vector<2x128xf32> to vector<2x32xf32>
    %189 = vector.extract_strided_slice %184 {offsets = [0, 96], sizes = [2, 32], strides = [1, 1]} : vector<2x128xf32> to vector<2x32xf32>
    %190 = arith.mulf %187, %0 : vector<2x32xf32>
    %191 = arith.mulf %186, %188 : vector<2x32xf32>
    %192 = arith.addf %190, %191 : vector<2x32xf32>
    %193 = math.tanh %192 : vector<2x32xf32>
    %194 = arith.mulf %189, %193 : vector<2x32xf32>
    %c14_61 = arith.constant 14 : index
    %c0_62 = arith.constant 0 : index
    %195 = vector.load %arg12[%c14_61, %c0_62] : memref<16x32xf32, #tpu.memory_space<vmem>>, vector<2x32xf32>
    tpu.vector_store %arg12[%c14_61, %c0_62], %194 {strides = array<i32>} : memref<16x32xf32, #tpu.memory_space<vmem>>, vector<2x32xf32>,
    %c12_63 = arith.constant 12 : index
    %c0_64 = arith.constant 0 : index
    %196 = vector.load %arg10[%c12_63, %c0_64] : memref<16x256xf32, #tpu.memory_space<vmem>>, vector<2x256xf32>
    %197 = vector.extract_strided_slice %196 {offsets = [0, 128], sizes = [2, 128], strides = [1, 1]} : vector<2x256xf32> to vector<2x128xf32>
    %cst_65 = arith.constant dense<0.000000e+00> : vector<2x128xf32>
    %198 = tpu.matmul %194, %3, %cst_65 {dimension_numbers = #tpu.dot_dimension_numbers<[1], [0], [0], [1], [0, 0, 1, 1], [], []>} : vector<2x32xf32>, vector<32x128xf32>, vector<2x128xf32> -> vector<2x128xf32>
    %199 = arith.addf %197, %198 : vector<2x128xf32>
    %200 = arith.negf %199 : vector<2x128xf32>
    %201 = math.exp %200 : vector<2x128xf32>
    %cst_66 = arith.constant 1.000000e+00 : f32
    %202 = vector.broadcast %cst_66 : f32 to vector<2x128xf32>
    %203 = arith.addf %202, %201 : vector<2x128xf32>
    %204 = arith.divf %202, %203 : vector<2x128xf32>
    %205 = math.tanh %199 : vector<2x128xf32>
    %206 = vector.extract_strided_slice %204 {offsets = [0, 0], sizes = [2, 32], strides = [1, 1]} : vector<2x128xf32> to vector<2x32xf32>
    %207 = vector.extract_strided_slice %204 {offsets = [0, 32], sizes = [2, 32], strides = [1, 1]} : vector<2x128xf32> to vector<2x32xf32>
    %208 = vector.extract_strided_slice %205 {offsets = [0, 64], sizes = [2, 32], strides = [1, 1]} : vector<2x128xf32> to vector<2x32xf32>
    %209 = vector.extract_strided_slice %204 {offsets = [0, 96], sizes = [2, 32], strides = [1, 1]} : vector<2x128xf32> to vector<2x32xf32>
    %210 = arith.mulf %207, %192 : vector<2x32xf32>
    %211 = arith.mulf %206, %208 : vector<2x32xf32>
    %212 = arith.addf %210, %211 : vector<2x32xf32>
    %213 = math.tanh %212 : vector<2x32xf32>
    %214 = arith.mulf %209, %213 : vector<2x32xf32>
    %c12_67 = arith.constant 12 : index
    %c0_68 = arith.constant 0 : index
    %215 = vector.load %arg12[%c12_67, %c0_68] : memref<16x32xf32, #tpu.memory_space<vmem>>, vector<2x32xf32>
    tpu.vector_store %arg12[%c12_67, %c0_68], %214 {strides = array<i32>} : memref<16x32xf32, #tpu.memory_space<vmem>>, vector<2x32xf32>,
    %c10_69 = arith.constant 10 : index
    %c0_70 = arith.constant 0 : index
    %216 = vector.load %arg10[%c10_69, %c0_70] : memref<16x256xf32, #tpu.memory_space<vmem>>, vector<2x256xf32>
    %217 = vector.extract_strided_slice %216 {offsets = [0, 128], sizes = [2, 128], strides = [1, 1]} : vector<2x256xf32> to vector<2x128xf32>
    %cst_71 = arith.constant dense<0.000000e+00> : vector<2x128xf32>
    %218 = tpu.matmul %214, %3, %cst_71 {dimension_numbers = #tpu.dot_dimension_numbers<[1], [0], [0], [1], [0, 0, 1, 1], [], []>} : vector<2x32xf32>, vector<32x128xf32>, vector<2x128xf32> -> vector<2x128xf32>
    %219 = arith.addf %217, %218 : vector<2x128xf32>
    %220 = arith.negf %219 : vector<2x128xf32>
    %221 = math.exp %220 : vector<2x128xf32>
    %cst_72 = arith.constant 1.000000e+00 : f32
    %222 = vector.broadcast %cst_72 : f32 to vector<2x128xf32>
    %223 = arith.addf %222, %221 : vector<2x128xf32>
    %224 = arith.divf %222, %223 : vector<2x128xf32>
    %225 = math.tanh %219 : vector<2x128xf32>
    %226 = vector.extract_strided_slice %224 {offsets = [0, 0], sizes = [2, 32], strides = [1, 1]} : vector<2x128xf32> to vector<2x32xf32>
    %227 = vector.extract_strided_slice %224 {offsets = [0, 32], sizes = [2, 32], strides = [1, 1]} : vector<2x128xf32> to vector<2x32xf32>
    %228 = vector.extract_strided_slice %225 {offsets = [0, 64], sizes = [2, 32], strides = [1, 1]} : vector<2x128xf32> to vector<2x32xf32>
    %229 = vector.extract_strided_slice %224 {offsets = [0, 96], sizes = [2, 32], strides = [1, 1]} : vector<2x128xf32> to vector<2x32xf32>
    %230 = arith.mulf %227, %212 : vector<2x32xf32>
    %231 = arith.mulf %226, %228 : vector<2x32xf32>
    %232 = arith.addf %230, %231 : vector<2x32xf32>
    %233 = math.tanh %232 : vector<2x32xf32>
    %234 = arith.mulf %229, %233 : vector<2x32xf32>
    %c10_73 = arith.constant 10 : index
    %c0_74 = arith.constant 0 : index
    %235 = vector.load %arg12[%c10_73, %c0_74] : memref<16x32xf32, #tpu.memory_space<vmem>>, vector<2x32xf32>
    tpu.vector_store %arg12[%c10_73, %c0_74], %234 {strides = array<i32>} : memref<16x32xf32, #tpu.memory_space<vmem>>, vector<2x32xf32>,
    %c8_75 = arith.constant 8 : index
    %c0_76 = arith.constant 0 : index
    %236 = vector.load %arg10[%c8_75, %c0_76] : memref<16x256xf32, #tpu.memory_space<vmem>>, vector<2x256xf32>
    %237 = vector.extract_strided_slice %236 {offsets = [0, 128], sizes = [2, 128], strides = [1, 1]} : vector<2x256xf32> to vector<2x128xf32>
    %cst_77 = arith.constant dense<0.000000e+00> : vector<2x128xf32>
    %238 = tpu.matmul %234, %3, %cst_77 {dimension_numbers = #tpu.dot_dimension_numbers<[1], [0], [0], [1], [0, 0, 1, 1], [], []>} : vector<2x32xf32>, vector<32x128xf32>, vector<2x128xf32> -> vector<2x128xf32>
    %239 = arith.addf %237, %238 : vector<2x128xf32>
    %240 = arith.negf %239 : vector<2x128xf32>
    %241 = math.exp %240 : vector<2x128xf32>
    %cst_78 = arith.constant 1.000000e+00 : f32
    %242 = vector.broadcast %cst_78 : f32 to vector<2x128xf32>
    %243 = arith.addf %242, %241 : vector<2x128xf32>
    %244 = arith.divf %242, %243 : vector<2x128xf32>
    %245 = math.tanh %239 : vector<2x128xf32>
    %246 = vector.extract_strided_slice %244 {offsets = [0, 0], sizes = [2, 32], strides = [1, 1]} : vector<2x128xf32> to vector<2x32xf32>
    %247 = vector.extract_strided_slice %244 {offsets = [0, 32], sizes = [2, 32], strides = [1, 1]} : vector<2x128xf32> to vector<2x32xf32>
    %248 = vector.extract_strided_slice %245 {offsets = [0, 64], sizes = [2, 32], strides = [1, 1]} : vector<2x128xf32> to vector<2x32xf32>
    %249 = vector.extract_strided_slice %244 {offsets = [0, 96], sizes = [2, 32], strides = [1, 1]} : vector<2x128xf32> to vector<2x32xf32>
    %250 = arith.mulf %247, %232 : vector<2x32xf32>
    %251 = arith.mulf %246, %248 : vector<2x32xf32>
    %252 = arith.addf %250, %251 : vector<2x32xf32>
    %253 = math.tanh %252 : vector<2x32xf32>
    %254 = arith.mulf %249, %253 : vector<2x32xf32>
    %c8_79 = arith.constant 8 : index
    %c0_80 = arith.constant 0 : index
    %255 = vector.load %arg12[%c8_79, %c0_80] : memref<16x32xf32, #tpu.memory_space<vmem>>, vector<2x32xf32>
    tpu.vector_store %arg12[%c8_79, %c0_80], %254 {strides = array<i32>} : memref<16x32xf32, #tpu.memory_space<vmem>>, vector<2x32xf32>,
    %c6_81 = arith.constant 6 : index
    %c0_82 = arith.constant 0 : index
    %256 = vector.load %arg10[%c6_81, %c0_82] : memref<16x256xf32, #tpu.memory_space<vmem>>, vector<2x256xf32>
    %257 = vector.extract_strided_slice %256 {offsets = [0, 128], sizes = [2, 128], strides = [1, 1]} : vector<2x256xf32> to vector<2x128xf32>
    %cst_83 = arith.constant dense<0.000000e+00> : vector<2x128xf32>
    %258 = tpu.matmul %254, %3, %cst_83 {dimension_numbers = #tpu.dot_dimension_numbers<[1], [0], [0], [1], [0, 0, 1, 1], [], []>} : vector<2x32xf32>, vector<32x128xf32>, vector<2x128xf32> -> vector<2x128xf32>
    %259 = arith.addf %257, %258 : vector<2x128xf32>
    %260 = arith.negf %259 : vector<2x128xf32>
    %261 = math.exp %260 : vector<2x128xf32>
    %cst_84 = arith.constant 1.000000e+00 : f32
    %262 = vector.broadcast %cst_84 : f32 to vector<2x128xf32>
    %263 = arith.addf %262, %261 : vector<2x128xf32>
    %264 = arith.divf %262, %263 : vector<2x128xf32>
    %265 = math.tanh %259 : vector<2x128xf32>
    %266 = vector.extract_strided_slice %264 {offsets = [0, 0], sizes = [2, 32], strides = [1, 1]} : vector<2x128xf32> to vector<2x32xf32>
    %267 = vector.extract_strided_slice %264 {offsets = [0, 32], sizes = [2, 32], strides = [1, 1]} : vector<2x128xf32> to vector<2x32xf32>
    %268 = vector.extract_strided_slice %265 {offsets = [0, 64], sizes = [2, 32], strides = [1, 1]} : vector<2x128xf32> to vector<2x32xf32>
    %269 = vector.extract_strided_slice %264 {offsets = [0, 96], sizes = [2, 32], strides = [1, 1]} : vector<2x128xf32> to vector<2x32xf32>
    %270 = arith.mulf %267, %252 : vector<2x32xf32>
    %271 = arith.mulf %266, %268 : vector<2x32xf32>
    %272 = arith.addf %270, %271 : vector<2x32xf32>
    %273 = math.tanh %272 : vector<2x32xf32>
    %274 = arith.mulf %269, %273 : vector<2x32xf32>
    %c6_85 = arith.constant 6 : index
    %c0_86 = arith.constant 0 : index
    %275 = vector.load %arg12[%c6_85, %c0_86] : memref<16x32xf32, #tpu.memory_space<vmem>>, vector<2x32xf32>
    tpu.vector_store %arg12[%c6_85, %c0_86], %274 {strides = array<i32>} : memref<16x32xf32, #tpu.memory_space<vmem>>, vector<2x32xf32>,
    %c4_87 = arith.constant 4 : index
    %c0_88 = arith.constant 0 : index
    %276 = vector.load %arg10[%c4_87, %c0_88] : memref<16x256xf32, #tpu.memory_space<vmem>>, vector<2x256xf32>
    %277 = vector.extract_strided_slice %276 {offsets = [0, 128], sizes = [2, 128], strides = [1, 1]} : vector<2x256xf32> to vector<2x128xf32>
    %cst_89 = arith.constant dense<0.000000e+00> : vector<2x128xf32>
    %278 = tpu.matmul %274, %3, %cst_89 {dimension_numbers = #tpu.dot_dimension_numbers<[1], [0], [0], [1], [0, 0, 1, 1], [], []>} : vector<2x32xf32>, vector<32x128xf32>, vector<2x128xf32> -> vector<2x128xf32>
    %279 = arith.addf %277, %278 : vector<2x128xf32>
    %280 = arith.negf %279 : vector<2x128xf32>
    %281 = math.exp %280 : vector<2x128xf32>
    %cst_90 = arith.constant 1.000000e+00 : f32
    %282 = vector.broadcast %cst_90 : f32 to vector<2x128xf32>
    %283 = arith.addf %282, %281 : vector<2x128xf32>
    %284 = arith.divf %282, %283 : vector<2x128xf32>
    %285 = math.tanh %279 : vector<2x128xf32>
    %286 = vector.extract_strided_slice %284 {offsets = [0, 0], sizes = [2, 32], strides = [1, 1]} : vector<2x128xf32> to vector<2x32xf32>
    %287 = vector.extract_strided_slice %284 {offsets = [0, 32], sizes = [2, 32], strides = [1, 1]} : vector<2x128xf32> to vector<2x32xf32>
    %288 = vector.extract_strided_slice %285 {offsets = [0, 64], sizes = [2, 32], strides = [1, 1]} : vector<2x128xf32> to vector<2x32xf32>
    %289 = vector.extract_strided_slice %284 {offsets = [0, 96], sizes = [2, 32], strides = [1, 1]} : vector<2x128xf32> to vector<2x32xf32>
    %290 = arith.mulf %287, %272 : vector<2x32xf32>
    %291 = arith.mulf %286, %288 : vector<2x32xf32>
    %292 = arith.addf %290, %291 : vector<2x32xf32>
    %293 = math.tanh %292 : vector<2x32xf32>
    %294 = arith.mulf %289, %293 : vector<2x32xf32>
    %c4_91 = arith.constant 4 : index
    %c0_92 = arith.constant 0 : index
    %295 = vector.load %arg12[%c4_91, %c0_92] : memref<16x32xf32, #tpu.memory_space<vmem>>, vector<2x32xf32>
    tpu.vector_store %arg12[%c4_91, %c0_92], %294 {strides = array<i32>} : memref<16x32xf32, #tpu.memory_space<vmem>>, vector<2x32xf32>,
    %c2_93 = arith.constant 2 : index
    %c0_94 = arith.constant 0 : index
    %296 = vector.load %arg10[%c2_93, %c0_94] : memref<16x256xf32, #tpu.memory_space<vmem>>, vector<2x256xf32>
    %297 = vector.extract_strided_slice %296 {offsets = [0, 128], sizes = [2, 128], strides = [1, 1]} : vector<2x256xf32> to vector<2x128xf32>
    %cst_95 = arith.constant dense<0.000000e+00> : vector<2x128xf32>
    %298 = tpu.matmul %294, %3, %cst_95 {dimension_numbers = #tpu.dot_dimension_numbers<[1], [0], [0], [1], [0, 0, 1, 1], [], []>} : vector<2x32xf32>, vector<32x128xf32>, vector<2x128xf32> -> vector<2x128xf32>
    %299 = arith.addf %297, %298 : vector<2x128xf32>
    %300 = arith.negf %299 : vector<2x128xf32>
    %301 = math.exp %300 : vector<2x128xf32>
    %cst_96 = arith.constant 1.000000e+00 : f32
    %302 = vector.broadcast %cst_96 : f32 to vector<2x128xf32>
    %303 = arith.addf %302, %301 : vector<2x128xf32>
    %304 = arith.divf %302, %303 : vector<2x128xf32>
    %305 = math.tanh %299 : vector<2x128xf32>
    %306 = vector.extract_strided_slice %304 {offsets = [0, 0], sizes = [2, 32], strides = [1, 1]} : vector<2x128xf32> to vector<2x32xf32>
    %307 = vector.extract_strided_slice %304 {offsets = [0, 32], sizes = [2, 32], strides = [1, 1]} : vector<2x128xf32> to vector<2x32xf32>
    %308 = vector.extract_strided_slice %305 {offsets = [0, 64], sizes = [2, 32], strides = [1, 1]} : vector<2x128xf32> to vector<2x32xf32>
    %309 = vector.extract_strided_slice %304 {offsets = [0, 96], sizes = [2, 32], strides = [1, 1]} : vector<2x128xf32> to vector<2x32xf32>
    %310 = arith.mulf %307, %292 : vector<2x32xf32>
    %311 = arith.mulf %306, %308 : vector<2x32xf32>
    %312 = arith.addf %310, %311 : vector<2x32xf32>
    %313 = math.tanh %312 : vector<2x32xf32>
    %314 = arith.mulf %309, %313 : vector<2x32xf32>
    %c2_97 = arith.constant 2 : index
    %c0_98 = arith.constant 0 : index
    %315 = vector.load %arg12[%c2_97, %c0_98] : memref<16x32xf32, #tpu.memory_space<vmem>>, vector<2x32xf32>
    tpu.vector_store %arg12[%c2_97, %c0_98], %314 {strides = array<i32>} : memref<16x32xf32, #tpu.memory_space<vmem>>, vector<2x32xf32>,
    %c0_99 = arith.constant 0 : index
    %c0_100 = arith.constant 0 : index
    %316 = vector.load %arg10[%c0_99, %c0_100] : memref<16x256xf32, #tpu.memory_space<vmem>>, vector<2x256xf32>
    %317 = vector.extract_strided_slice %316 {offsets = [0, 128], sizes = [2, 128], strides = [1, 1]} : vector<2x256xf32> to vector<2x128xf32>
    %cst_101 = arith.constant dense<0.000000e+00> : vector<2x128xf32>
    %318 = tpu.matmul %314, %3, %cst_101 {dimension_numbers = #tpu.dot_dimension_numbers<[1], [0], [0], [1], [0, 0, 1, 1], [], []>} : vector<2x32xf32>, vector<32x128xf32>, vector<2x128xf32> -> vector<2x128xf32>
    %319 = arith.addf %317, %318 : vector<2x128xf32>
    %320 = arith.negf %319 : vector<2x128xf32>
    %321 = math.exp %320 : vector<2x128xf32>
    %cst_102 = arith.constant 1.000000e+00 : f32
    %322 = vector.broadcast %cst_102 : f32 to vector<2x128xf32>
    %323 = arith.addf %322, %321 : vector<2x128xf32>
    %324 = arith.divf %322, %323 : vector<2x128xf32>
    %325 = math.tanh %319 : vector<2x128xf32>
    %326 = vector.extract_strided_slice %324 {offsets = [0, 0], sizes = [2, 32], strides = [1, 1]} : vector<2x128xf32> to vector<2x32xf32>
    %327 = vector.extract_strided_slice %324 {offsets = [0, 32], sizes = [2, 32], strides = [1, 1]} : vector<2x128xf32> to vector<2x32xf32>
    %328 = vector.extract_strided_slice %325 {offsets = [0, 64], sizes = [2, 32], strides = [1, 1]} : vector<2x128xf32> to vector<2x32xf32>
    %329 = vector.extract_strided_slice %324 {offsets = [0, 96], sizes = [2, 32], strides = [1, 1]} : vector<2x128xf32> to vector<2x32xf32>
    %330 = arith.mulf %327, %312 : vector<2x32xf32>
    %331 = arith.mulf %326, %328 : vector<2x32xf32>
    %332 = arith.addf %330, %331 : vector<2x32xf32>
    %333 = math.tanh %332 : vector<2x32xf32>
    %334 = arith.mulf %329, %333 : vector<2x32xf32>
    %c0_103 = arith.constant 0 : index
    %c0_104 = arith.constant 0 : index
    %335 = vector.load %arg12[%c0_103, %c0_104] : memref<16x32xf32, #tpu.memory_space<vmem>>, vector<2x32xf32>
    tpu.vector_store %arg12[%c0_103, %c0_104], %334 {strides = array<i32>} : memref<16x32xf32, #tpu.memory_space<vmem>>, vector<2x32xf32>,
    %c0_105 = arith.constant 0 : index
    %c0_106 = arith.constant 0 : index
    %336 = vector.load %arg11[%c0_105, %c0_106] : memref<16x32xf32, #tpu.memory_space<vmem>>, vector<16x32xf32>
    %337 = vector.extract_strided_slice %7 {offsets = [0, 0], sizes = [32, 256], strides = [1, 1]} : vector<64x256xf32> to vector<32x256xf32>
    %cst_107 = arith.constant dense<0.000000e+00> : vector<16x256xf32>
    %338 = tpu.matmul %336, %337, %cst_107 {dimension_numbers = #tpu.dot_dimension_numbers<[1], [0], [0], [1], [0, 0, 1, 1], [], []>} : vector<16x32xf32>, vector<32x256xf32>, vector<16x256xf32> -> vector<16x256xf32>
    %c0_108 = arith.constant 0 : index
    %c0_109 = arith.constant 0 : index
    %339 = vector.load %arg12[%c0_108, %c0_109] : memref<16x32xf32, #tpu.memory_space<vmem>>, vector<16x32xf32>
    %340 = vector.extract_strided_slice %7 {offsets = [32, 0], sizes = [32, 256], strides = [1, 1]} : vector<64x256xf32> to vector<32x256xf32>
    %cst_110 = arith.constant dense<0.000000e+00> : vector<16x256xf32>
    %341 = tpu.matmul %339, %340, %cst_110 {dimension_numbers = #tpu.dot_dimension_numbers<[1], [0], [0], [1], [0, 0, 1, 1], [], []>} : vector<16x32xf32>, vector<32x256xf32>, vector<16x256xf32> -> vector<16x256xf32>
    %342 = arith.addf %338, %341 : vector<16x256xf32>
    %c0_111 = arith.constant 0 : index
    %c0_112 = arith.constant 0 : index
    %343 = vector.load %arg6[%c0_111, %c0_112] : memref<1x256xf32, #tpu.memory_space<vmem>>, vector<1x256xf32>
    %344 = vector.broadcast %343 : vector<1x256xf32> to vector<16x256xf32>
    %345 = arith.addf %342, %344 : vector<16x256xf32>
    %c0_113 = arith.constant 0 : index
    %c0_114 = arith.constant 0 : index
    %346 = vector.load %arg10[%c0_113, %c0_114] : memref<16x256xf32, #tpu.memory_space<vmem>>, vector<16x256xf32>
    tpu.vector_store %arg10[%c0_113, %c0_114], %345 {strides = array<i32>} : memref<16x256xf32, #tpu.memory_space<vmem>>, vector<16x256xf32>,
    %c0_115 = arith.constant 0 : index
    %c0_116 = arith.constant 0 : index
    %347 = vector.load %arg10[%c0_115, %c0_116] : memref<16x256xf32, #tpu.memory_space<vmem>>, vector<2x256xf32>
    %348 = vector.extract_strided_slice %347 {offsets = [0, 0], sizes = [2, 128], strides = [1, 1]} : vector<2x256xf32> to vector<2x128xf32>
    %cst_117 = arith.constant dense<0.000000e+00> : vector<2x128xf32>
    %349 = tpu.matmul %0, %5, %cst_117 {dimension_numbers = #tpu.dot_dimension_numbers<[1], [0], [0], [1], [0, 0, 1, 1], [], []>} : vector<2x32xf32>, vector<32x128xf32>, vector<2x128xf32> -> vector<2x128xf32>
    %350 = arith.addf %348, %349 : vector<2x128xf32>
    %351 = arith.negf %350 : vector<2x128xf32>
    %352 = math.exp %351 : vector<2x128xf32>
    %cst_118 = arith.constant 1.000000e+00 : f32
    %353 = vector.broadcast %cst_118 : f32 to vector<2x128xf32>
    %354 = arith.addf %353, %352 : vector<2x128xf32>
    %355 = arith.divf %353, %354 : vector<2x128xf32>
    %356 = math.tanh %350 : vector<2x128xf32>
    %357 = vector.extract_strided_slice %355 {offsets = [0, 0], sizes = [2, 32], strides = [1, 1]} : vector<2x128xf32> to vector<2x32xf32>
    %358 = vector.extract_strided_slice %355 {offsets = [0, 32], sizes = [2, 32], strides = [1, 1]} : vector<2x128xf32> to vector<2x32xf32>
    %359 = vector.extract_strided_slice %356 {offsets = [0, 64], sizes = [2, 32], strides = [1, 1]} : vector<2x128xf32> to vector<2x32xf32>
    %360 = vector.extract_strided_slice %355 {offsets = [0, 96], sizes = [2, 32], strides = [1, 1]} : vector<2x128xf32> to vector<2x32xf32>
    %361 = arith.mulf %358, %0 : vector<2x32xf32>
    %362 = arith.mulf %357, %359 : vector<2x32xf32>
    %363 = arith.addf %361, %362 : vector<2x32xf32>
    %364 = math.tanh %363 : vector<2x32xf32>
    %365 = arith.mulf %360, %364 : vector<2x32xf32>
    %c2_119 = arith.constant 2 : index
    %c0_120 = arith.constant 0 : index
    %366 = vector.load %arg10[%c2_119, %c0_120] : memref<16x256xf32, #tpu.memory_space<vmem>>, vector<2x256xf32>
    %367 = vector.extract_strided_slice %366 {offsets = [0, 0], sizes = [2, 128], strides = [1, 1]} : vector<2x256xf32> to vector<2x128xf32>
    %cst_121 = arith.constant dense<0.000000e+00> : vector<2x128xf32>
    %368 = tpu.matmul %365, %5, %cst_121 {dimension_numbers = #tpu.dot_dimension_numbers<[1], [0], [0], [1], [0, 0, 1, 1], [], []>} : vector<2x32xf32>, vector<32x128xf32>, vector<2x128xf32> -> vector<2x128xf32>
    %369 = arith.addf %367, %368 : vector<2x128xf32>
    %370 = arith.negf %369 : vector<2x128xf32>
    %371 = math.exp %370 : vector<2x128xf32>
    %cst_122 = arith.constant 1.000000e+00 : f32
    %372 = vector.broadcast %cst_122 : f32 to vector<2x128xf32>
    %373 = arith.addf %372, %371 : vector<2x128xf32>
    %374 = arith.divf %372, %373 : vector<2x128xf32>
    %375 = math.tanh %369 : vector<2x128xf32>
    %376 = vector.extract_strided_slice %374 {offsets = [0, 0], sizes = [2, 32], strides = [1, 1]} : vector<2x128xf32> to vector<2x32xf32>
    %377 = vector.extract_strided_slice %374 {offsets = [0, 32], sizes = [2, 32], strides = [1, 1]} : vector<2x128xf32> to vector<2x32xf32>
    %378 = vector.extract_strided_slice %375 {offsets = [0, 64], sizes = [2, 32], strides = [1, 1]} : vector<2x128xf32> to vector<2x32xf32>
    %379 = vector.extract_strided_slice %374 {offsets = [0, 96], sizes = [2, 32], strides = [1, 1]} : vector<2x128xf32> to vector<2x32xf32>
    %380 = arith.mulf %377, %363 : vector<2x32xf32>
    %381 = arith.mulf %376, %378 : vector<2x32xf32>
    %382 = arith.addf %380, %381 : vector<2x32xf32>
    %383 = math.tanh %382 : vector<2x32xf32>
    %384 = arith.mulf %379, %383 : vector<2x32xf32>
    %c4_123 = arith.constant 4 : index
    %c0_124 = arith.constant 0 : index
    %385 = vector.load %arg10[%c4_123, %c0_124] : memref<16x256xf32, #tpu.memory_space<vmem>>, vector<2x256xf32>
    %386 = vector.extract_strided_slice %385 {offsets = [0, 0], sizes = [2, 128], strides = [1, 1]} : vector<2x256xf32> to vector<2x128xf32>
    %cst_125 = arith.constant dense<0.000000e+00> : vector<2x128xf32>
    %387 = tpu.matmul %384, %5, %cst_125 {dimension_numbers = #tpu.dot_dimension_numbers<[1], [0], [0], [1], [0, 0, 1, 1], [], []>} : vector<2x32xf32>, vector<32x128xf32>, vector<2x128xf32> -> vector<2x128xf32>
    %388 = arith.addf %386, %387 : vector<2x128xf32>
    %389 = arith.negf %388 : vector<2x128xf32>
    %390 = math.exp %389 : vector<2x128xf32>
    %cst_126 = arith.constant 1.000000e+00 : f32
    %391 = vector.broadcast %cst_126 : f32 to vector<2x128xf32>
    %392 = arith.addf %391, %390 : vector<2x128xf32>
    %393 = arith.divf %391, %392 : vector<2x128xf32>
    %394 = math.tanh %388 : vector<2x128xf32>
    %395 = vector.extract_strided_slice %393 {offsets = [0, 0], sizes = [2, 32], strides = [1, 1]} : vector<2x128xf32> to vector<2x32xf32>
    %396 = vector.extract_strided_slice %393 {offsets = [0, 32], sizes = [2, 32], strides = [1, 1]} : vector<2x128xf32> to vector<2x32xf32>
    %397 = vector.extract_strided_slice %394 {offsets = [0, 64], sizes = [2, 32], strides = [1, 1]} : vector<2x128xf32> to vector<2x32xf32>
    %398 = vector.extract_strided_slice %393 {offsets = [0, 96], sizes = [2, 32], strides = [1, 1]} : vector<2x128xf32> to vector<2x32xf32>
    %399 = arith.mulf %396, %382 : vector<2x32xf32>
    %400 = arith.mulf %395, %397 : vector<2x32xf32>
    %401 = arith.addf %399, %400 : vector<2x32xf32>
    %402 = math.tanh %401 : vector<2x32xf32>
    %403 = arith.mulf %398, %402 : vector<2x32xf32>
    %c6_127 = arith.constant 6 : index
    %c0_128 = arith.constant 0 : index
    %404 = vector.load %arg10[%c6_127, %c0_128] : memref<16x256xf32, #tpu.memory_space<vmem>>, vector<2x256xf32>
    %405 = vector.extract_strided_slice %404 {offsets = [0, 0], sizes = [2, 128], strides = [1, 1]} : vector<2x256xf32> to vector<2x128xf32>
    %cst_129 = arith.constant dense<0.000000e+00> : vector<2x128xf32>
    %406 = tpu.matmul %403, %5, %cst_129 {dimension_numbers = #tpu.dot_dimension_numbers<[1], [0], [0], [1], [0, 0, 1, 1], [], []>} : vector<2x32xf32>, vector<32x128xf32>, vector<2x128xf32> -> vector<2x128xf32>
    %407 = arith.addf %405, %406 : vector<2x128xf32>
    %408 = arith.negf %407 : vector<2x128xf32>
    %409 = math.exp %408 : vector<2x128xf32>
    %cst_130 = arith.constant 1.000000e+00 : f32
    %410 = vector.broadcast %cst_130 : f32 to vector<2x128xf32>
    %411 = arith.addf %410, %409 : vector<2x128xf32>
    %412 = arith.divf %410, %411 : vector<2x128xf32>
    %413 = math.tanh %407 : vector<2x128xf32>
    %414 = vector.extract_strided_slice %412 {offsets = [0, 0], sizes = [2, 32], strides = [1, 1]} : vector<2x128xf32> to vector<2x32xf32>
    %415 = vector.extract_strided_slice %412 {offsets = [0, 32], sizes = [2, 32], strides = [1, 1]} : vector<2x128xf32> to vector<2x32xf32>
    %416 = vector.extract_strided_slice %413 {offsets = [0, 64], sizes = [2, 32], strides = [1, 1]} : vector<2x128xf32> to vector<2x32xf32>
    %417 = vector.extract_strided_slice %412 {offsets = [0, 96], sizes = [2, 32], strides = [1, 1]} : vector<2x128xf32> to vector<2x32xf32>
    %418 = arith.mulf %415, %401 : vector<2x32xf32>
    %419 = arith.mulf %414, %416 : vector<2x32xf32>
    %420 = arith.addf %418, %419 : vector<2x32xf32>
    %421 = math.tanh %420 : vector<2x32xf32>
    %422 = arith.mulf %417, %421 : vector<2x32xf32>
    %c8_131 = arith.constant 8 : index
    %c0_132 = arith.constant 0 : index
    %423 = vector.load %arg10[%c8_131, %c0_132] : memref<16x256xf32, #tpu.memory_space<vmem>>, vector<2x256xf32>
    %424 = vector.extract_strided_slice %423 {offsets = [0, 0], sizes = [2, 128], strides = [1, 1]} : vector<2x256xf32> to vector<2x128xf32>
    %cst_133 = arith.constant dense<0.000000e+00> : vector<2x128xf32>
    %425 = tpu.matmul %422, %5, %cst_133 {dimension_numbers = #tpu.dot_dimension_numbers<[1], [0], [0], [1], [0, 0, 1, 1], [], []>} : vector<2x32xf32>, vector<32x128xf32>, vector<2x128xf32> -> vector<2x128xf32>
    %426 = arith.addf %424, %425 : vector<2x128xf32>
    %427 = arith.negf %426 : vector<2x128xf32>
    %428 = math.exp %427 : vector<2x128xf32>
    %cst_134 = arith.constant 1.000000e+00 : f32
    %429 = vector.broadcast %cst_134 : f32 to vector<2x128xf32>
    %430 = arith.addf %429, %428 : vector<2x128xf32>
    %431 = arith.divf %429, %430 : vector<2x128xf32>
    %432 = math.tanh %426 : vector<2x128xf32>
    %433 = vector.extract_strided_slice %431 {offsets = [0, 0], sizes = [2, 32], strides = [1, 1]} : vector<2x128xf32> to vector<2x32xf32>
    %434 = vector.extract_strided_slice %431 {offsets = [0, 32], sizes = [2, 32], strides = [1, 1]} : vector<2x128xf32> to vector<2x32xf32>
    %435 = vector.extract_strided_slice %432 {offsets = [0, 64], sizes = [2, 32], strides = [1, 1]} : vector<2x128xf32> to vector<2x32xf32>
    %436 = vector.extract_strided_slice %431 {offsets = [0, 96], sizes = [2, 32], strides = [1, 1]} : vector<2x128xf32> to vector<2x32xf32>
    %437 = arith.mulf %434, %420 : vector<2x32xf32>
    %438 = arith.mulf %433, %435 : vector<2x32xf32>
    %439 = arith.addf %437, %438 : vector<2x32xf32>
    %440 = math.tanh %439 : vector<2x32xf32>
    %441 = arith.mulf %436, %440 : vector<2x32xf32>
    %c10_135 = arith.constant 10 : index
    %c0_136 = arith.constant 0 : index
    %442 = vector.load %arg10[%c10_135, %c0_136] : memref<16x256xf32, #tpu.memory_space<vmem>>, vector<2x256xf32>
    %443 = vector.extract_strided_slice %442 {offsets = [0, 0], sizes = [2, 128], strides = [1, 1]} : vector<2x256xf32> to vector<2x128xf32>
    %cst_137 = arith.constant dense<0.000000e+00> : vector<2x128xf32>
    %444 = tpu.matmul %441, %5, %cst_137 {dimension_numbers = #tpu.dot_dimension_numbers<[1], [0], [0], [1], [0, 0, 1, 1], [], []>} : vector<2x32xf32>, vector<32x128xf32>, vector<2x128xf32> -> vector<2x128xf32>
    %445 = arith.addf %443, %444 : vector<2x128xf32>
    %446 = arith.negf %445 : vector<2x128xf32>
    %447 = math.exp %446 : vector<2x128xf32>
    %cst_138 = arith.constant 1.000000e+00 : f32
    %448 = vector.broadcast %cst_138 : f32 to vector<2x128xf32>
    %449 = arith.addf %448, %447 : vector<2x128xf32>
    %450 = arith.divf %448, %449 : vector<2x128xf32>
    %451 = math.tanh %445 : vector<2x128xf32>
    %452 = vector.extract_strided_slice %450 {offsets = [0, 0], sizes = [2, 32], strides = [1, 1]} : vector<2x128xf32> to vector<2x32xf32>
    %453 = vector.extract_strided_slice %450 {offsets = [0, 32], sizes = [2, 32], strides = [1, 1]} : vector<2x128xf32> to vector<2x32xf32>
    %454 = vector.extract_strided_slice %451 {offsets = [0, 64], sizes = [2, 32], strides = [1, 1]} : vector<2x128xf32> to vector<2x32xf32>
    %455 = vector.extract_strided_slice %450 {offsets = [0, 96], sizes = [2, 32], strides = [1, 1]} : vector<2x128xf32> to vector<2x32xf32>
    %456 = arith.mulf %453, %439 : vector<2x32xf32>
    %457 = arith.mulf %452, %454 : vector<2x32xf32>
    %458 = arith.addf %456, %457 : vector<2x32xf32>
    %459 = math.tanh %458 : vector<2x32xf32>
    %460 = arith.mulf %455, %459 : vector<2x32xf32>
    %c12_139 = arith.constant 12 : index
    %c0_140 = arith.constant 0 : index
    %461 = vector.load %arg10[%c12_139, %c0_140] : memref<16x256xf32, #tpu.memory_space<vmem>>, vector<2x256xf32>
    %462 = vector.extract_strided_slice %461 {offsets = [0, 0], sizes = [2, 128], strides = [1, 1]} : vector<2x256xf32> to vector<2x128xf32>
    %cst_141 = arith.constant dense<0.000000e+00> : vector<2x128xf32>
    %463 = tpu.matmul %460, %5, %cst_141 {dimension_numbers = #tpu.dot_dimension_numbers<[1], [0], [0], [1], [0, 0, 1, 1], [], []>} : vector<2x32xf32>, vector<32x128xf32>, vector<2x128xf32> -> vector<2x128xf32>
    %464 = arith.addf %462, %463 : vector<2x128xf32>
    %465 = arith.negf %464 : vector<2x128xf32>
    %466 = math.exp %465 : vector<2x128xf32>
    %cst_142 = arith.constant 1.000000e+00 : f32
    %467 = vector.broadcast %cst_142 : f32 to vector<2x128xf32>
    %468 = arith.addf %467, %466 : vector<2x128xf32>
    %469 = arith.divf %467, %468 : vector<2x128xf32>
    %470 = math.tanh %464 : vector<2x128xf32>
    %471 = vector.extract_strided_slice %469 {offsets = [0, 0], sizes = [2, 32], strides = [1, 1]} : vector<2x128xf32> to vector<2x32xf32>
    %472 = vector.extract_strided_slice %469 {offsets = [0, 32], sizes = [2, 32], strides = [1, 1]} : vector<2x128xf32> to vector<2x32xf32>
    %473 = vector.extract_strided_slice %470 {offsets = [0, 64], sizes = [2, 32], strides = [1, 1]} : vector<2x128xf32> to vector<2x32xf32>
    %474 = vector.extract_strided_slice %469 {offsets = [0, 96], sizes = [2, 32], strides = [1, 1]} : vector<2x128xf32> to vector<2x32xf32>
    %475 = arith.mulf %472, %458 : vector<2x32xf32>
    %476 = arith.mulf %471, %473 : vector<2x32xf32>
    %477 = arith.addf %475, %476 : vector<2x32xf32>
    %478 = math.tanh %477 : vector<2x32xf32>
    %479 = arith.mulf %474, %478 : vector<2x32xf32>
    %c14_143 = arith.constant 14 : index
    %c0_144 = arith.constant 0 : index
    %480 = vector.load %arg10[%c14_143, %c0_144] : memref<16x256xf32, #tpu.memory_space<vmem>>, vector<2x256xf32>
    %481 = vector.extract_strided_slice %480 {offsets = [0, 0], sizes = [2, 128], strides = [1, 1]} : vector<2x256xf32> to vector<2x128xf32>
    %cst_145 = arith.constant dense<0.000000e+00> : vector<2x128xf32>
    %482 = tpu.matmul %479, %5, %cst_145 {dimension_numbers = #tpu.dot_dimension_numbers<[1], [0], [0], [1], [0, 0, 1, 1], [], []>} : vector<2x32xf32>, vector<32x128xf32>, vector<2x128xf32> -> vector<2x128xf32>
    %483 = arith.addf %481, %482 : vector<2x128xf32>
    %484 = arith.negf %483 : vector<2x128xf32>
    %485 = math.exp %484 : vector<2x128xf32>
    %cst_146 = arith.constant 1.000000e+00 : f32
    %486 = vector.broadcast %cst_146 : f32 to vector<2x128xf32>
    %487 = arith.addf %486, %485 : vector<2x128xf32>
    %488 = arith.divf %486, %487 : vector<2x128xf32>
    %489 = math.tanh %483 : vector<2x128xf32>
    %490 = vector.extract_strided_slice %488 {offsets = [0, 0], sizes = [2, 32], strides = [1, 1]} : vector<2x128xf32> to vector<2x32xf32>
    %491 = vector.extract_strided_slice %488 {offsets = [0, 32], sizes = [2, 32], strides = [1, 1]} : vector<2x128xf32> to vector<2x32xf32>
    %492 = vector.extract_strided_slice %489 {offsets = [0, 64], sizes = [2, 32], strides = [1, 1]} : vector<2x128xf32> to vector<2x32xf32>
    %493 = vector.extract_strided_slice %488 {offsets = [0, 96], sizes = [2, 32], strides = [1, 1]} : vector<2x128xf32> to vector<2x32xf32>
    %494 = arith.mulf %491, %477 : vector<2x32xf32>
    %495 = arith.mulf %490, %492 : vector<2x32xf32>
    %496 = arith.addf %494, %495 : vector<2x32xf32>
    %497 = math.tanh %496 : vector<2x32xf32>
    %498 = arith.mulf %493, %497 : vector<2x32xf32>
    %c14_147 = arith.constant 14 : index
    %c0_148 = arith.constant 0 : index
    %499 = vector.load %arg10[%c14_147, %c0_148] : memref<16x256xf32, #tpu.memory_space<vmem>>, vector<2x256xf32>
    %500 = vector.extract_strided_slice %499 {offsets = [0, 128], sizes = [2, 128], strides = [1, 1]} : vector<2x256xf32> to vector<2x128xf32>
    %cst_149 = arith.constant dense<0.000000e+00> : vector<2x128xf32>
    %501 = tpu.matmul %0, %6, %cst_149 {dimension_numbers = #tpu.dot_dimension_numbers<[1], [0], [0], [1], [0, 0, 1, 1], [], []>} : vector<2x32xf32>, vector<32x128xf32>, vector<2x128xf32> -> vector<2x128xf32>
    %502 = arith.addf %500, %501 : vector<2x128xf32>
    %503 = arith.negf %502 : vector<2x128xf32>
    %504 = math.exp %503 : vector<2x128xf32>
    %cst_150 = arith.constant 1.000000e+00 : f32
    %505 = vector.broadcast %cst_150 : f32 to vector<2x128xf32>
    %506 = arith.addf %505, %504 : vector<2x128xf32>
    %507 = arith.divf %505, %506 : vector<2x128xf32>
    %508 = math.tanh %502 : vector<2x128xf32>
    %509 = vector.extract_strided_slice %507 {offsets = [0, 0], sizes = [2, 32], strides = [1, 1]} : vector<2x128xf32> to vector<2x32xf32>
    %510 = vector.extract_strided_slice %507 {offsets = [0, 32], sizes = [2, 32], strides = [1, 1]} : vector<2x128xf32> to vector<2x32xf32>
    %511 = vector.extract_strided_slice %508 {offsets = [0, 64], sizes = [2, 32], strides = [1, 1]} : vector<2x128xf32> to vector<2x32xf32>
    %512 = vector.extract_strided_slice %507 {offsets = [0, 96], sizes = [2, 32], strides = [1, 1]} : vector<2x128xf32> to vector<2x32xf32>
    %513 = arith.mulf %510, %0 : vector<2x32xf32>
    %514 = arith.mulf %509, %511 : vector<2x32xf32>
    %515 = arith.addf %513, %514 : vector<2x32xf32>
    %516 = math.tanh %515 : vector<2x32xf32>
    %517 = arith.mulf %512, %516 : vector<2x32xf32>
    %518 = vector.extract_strided_slice %8 {offsets = [0, 0], sizes = [32, 43], strides = [1, 1]} : vector<64x43xf32> to vector<32x43xf32>
    %cst_151 = arith.constant dense<0.000000e+00> : vector<2x43xf32>
    %519 = tpu.matmul %498, %518, %cst_151 {dimension_numbers = #tpu.dot_dimension_numbers<[1], [0], [0], [1], [0, 0, 1, 1], [], []>} : vector<2x32xf32>, vector<32x43xf32>, vector<2x43xf32> -> vector<2x43xf32>
    %520 = vector.extract_strided_slice %8 {offsets = [32, 0], sizes = [32, 43], strides = [1, 1]} : vector<64x43xf32> to vector<32x43xf32>
    %cst_152 = arith.constant dense<0.000000e+00> : vector<2x43xf32>
    %521 = tpu.matmul %517, %520, %cst_152 {dimension_numbers = #tpu.dot_dimension_numbers<[1], [0], [0], [1], [0, 0, 1, 1], [], []>} : vector<2x32xf32>, vector<32x43xf32>, vector<2x43xf32> -> vector<2x43xf32>
    %522 = arith.addf %519, %521 : vector<2x43xf32>
    %c0_153 = arith.constant 0 : index
    %c0_154 = arith.constant 0 : index
    %523 = vector.load %arg8[%c0_153, %c0_154] : memref<1x43xf32, #tpu.memory_space<vmem>>, vector<1x43xf32>
    %524 = vector.broadcast %523 : vector<1x43xf32> to vector<2x43xf32>
    %525 = arith.addf %522, %524 : vector<2x43xf32>
    %526 = arith.negf %525 : vector<2x43xf32>
    %527 = math.exp %526 : vector<2x43xf32>
    %cst_155 = arith.constant 1.000000e+00 : f32
    %528 = vector.broadcast %cst_155 : f32 to vector<2x43xf32>
    %529 = arith.addf %528, %527 : vector<2x43xf32>
    %530 = arith.divf %528, %529 : vector<2x43xf32>
    %c0_156 = arith.constant 0 : index
    %c0_157 = arith.constant 0 : index
    %531 = vector.load %arg9[%c0_156, %c0_157] : memref<2x43xf32, #tpu.memory_space<vmem>>, vector<2x43xf32>
    tpu.vector_store %arg9[%c0_156, %c0_157], %530 {strides = array<i32>} : memref<2x43xf32, #tpu.memory_space<vmem>>, vector<2x43xf32>,
    return
  }
}

</mosaic_0001>

<llo_original>
// kernel: bi_lstm_forward.1
$region0: #{bi_lstm_forward.1}
  #allocation0 [shape = 'u32[]', space=smem, size = 0x4, offset = 0x4, fixed_abs, tag = 'smem constant byte address 0x4 - core index']
  #allocation1 [shape = 'u32[144,128]{1,0:T(1,128)}', space=vmem, size = 0x12000, scoped, tag = 'internal scratch']
  #allocation2 [shape = 'f32[16,256]{1,0:T(8,128)}', space=vmem, size = 0x4000, scoped, tag = 'scratch operand']
  #allocation3 [shape = 'f32[16,32]{1,0:T(8,128)}', space=vmem, size = 0x2000, scoped, tag = 'scratch operand']
  #allocation4 [shape = 'f32[16,32]{1,0:T(8,128)}', space=vmem, size = 0x2000, scoped, tag = 'scratch operand']
  %s0 = inlined_call_operand.vmem [shape: f32[16,16], index: 0, kind: input, shape index: {}]
  %s1 = inlined_call_operand.vmem [shape: f32[16,256], index: 1, kind: input, shape index: {}]
  %s2 = inlined_call_operand.vmem [shape: f32[32,256], index: 2, kind: input, shape index: {}]
  %s3 = inlined_call_operand.vmem [shape: f32[1,256], index: 3, kind: input, shape index: {}]
  %s4 = inlined_call_operand.vmem [shape: f32[64,256], index: 4, kind: input, shape index: {}]
  %s5 = inlined_call_operand.vmem [shape: f32[32,256], index: 5, kind: input, shape index: {}]
  %s6 = inlined_call_operand.vmem [shape: f32[1,256], index: 6, kind: input, shape index: {}]
  %s7 = inlined_call_operand.vmem [shape: f32[64,43], index: 7, kind: input, shape index: {}]
  %s8 = inlined_call_operand.vmem [shape: f32[1,43], index: 8, kind: input, shape index: {}]
  %s9 = inlined_call_operand.hbm [shape: f32[2,43], index: 9, kind: output, shape index: {}]
  %s10 = sld [smem:[#allocation0]]
  $region46: #{bi_lstm_forward.1} parent=0
    _
  %s12 = ssub.s32 1, %s10
  %s13 = scalar_select 0, %s12, %s10
  $region1: #{bi_lstm_forward.1} parent=0
    #allocation5 [shape = 'u8[1024]{0}', space=vmem, size = 0x400, scoped, tag = 'output window, operand 0, single buffered']
    #allocation6 [shape = 's32[1]{0}', space=sflag, size = 0x4, scoped, tag = 'scoped memory for bi_lstm_forward.1']
    %14 = vsyncpa [#allocation6], 0
    // Predicated region
    $region2: #{bi_lstm_forward.1} parent=1 // pred_check
      _
    $region3: #{bi_lstm_forward.1} parent=1 // pred_check_branch
      %16 = sbr.rel (0) target = $region5
    $region4: #{bi_lstm_forward.1} parent=1 // pred_region
      _
    $region5: #{bi_lstm_forward.1} parent=1 // pred_fallthru
      _
    // Predicated region
    $region6: #{bi_lstm_forward.1} parent=1 // pred_check
      _
    $region7: #{bi_lstm_forward.1} parent=1 // pred_check_branch
      %18 = sbr.rel (0) target = $region9
    $region8: #{bi_lstm_forward.1} parent=1 // pred_region
      _
    $region9: #{bi_lstm_forward.1} parent=1 // pred_fallthru
      _
    // Predicated region
    $region10: #{bi_lstm_forward.1} parent=1 // pred_check
      _
    $region11: #{bi_lstm_forward.1} parent=1 // pred_check_branch
      %20 = sbr.rel (0) target = $region13
    $region12: #{bi_lstm_forward.1} parent=1 // pred_region
      _
    $region13: #{bi_lstm_forward.1} parent=1 // pred_fallthru
      _
    // Predicated region
    $region14: #{bi_lstm_forward.1} parent=1 // pred_check
      _
    $region15: #{bi_lstm_forward.1} parent=1 // pred_check_branch
      %22 = sbr.rel (0) target = $region17
    $region16: #{bi_lstm_forward.1} parent=1 // pred_region
      _
    $region17: #{bi_lstm_forward.1} parent=1 // pred_fallthru
      _
    // Predicated region
    $region18: #{bi_lstm_forward.1} parent=1 // pred_check
      _
    $region19: #{bi_lstm_forward.1} parent=1 // pred_check_branch
      %24 = sbr.rel (0) target = $region21
    $region20: #{bi_lstm_forward.1} parent=1 // pred_region
      _
    $region21: #{bi_lstm_forward.1} parent=1 // pred_fallthru
      _
    // Predicated region
    $region22: #{bi_lstm_forward.1} parent=1 // pred_check
      _
    $region23: #{bi_lstm_forward.1} parent=1 // pred_check_branch
      %26 = sbr.rel (0) target = $region25
    $region24: #{bi_lstm_forward.1} parent=1 // pred_region
      _
    $region25: #{bi_lstm_forward.1} parent=1 // pred_fallthru
      _
    // Predicated region
    $region26: #{bi_lstm_forward.1} parent=1 // pred_check
      _
    $region27: #{bi_lstm_forward.1} parent=1 // pred_check_branch
      %28 = sbr.rel (0) target = $region29
    $region28: #{bi_lstm_forward.1} parent=1 // pred_region
      _
    $region29: #{bi_lstm_forward.1} parent=1 // pred_fallthru
      _
    // Predicated region
    $region30: #{bi_lstm_forward.1} parent=1 // pred_check
      _
    $region31: #{bi_lstm_forward.1} parent=1 // pred_check_branch
      %30 = sbr.rel (0) target = $region33
    $region32: #{bi_lstm_forward.1} parent=1 // pred_region
      _
    $region33: #{bi_lstm_forward.1} parent=1 // pred_fallthru
      _
    // Predicated region
    $region34: #{bi_lstm_forward.1} parent=1 // pred_check
      _
    $region35: #{bi_lstm_forward.1} parent=1 // pred_check_branch
      %32 = sbr.rel (0) target = $region37
    $region36: #{bi_lstm_forward.1} parent=1 // pred_region
      _
    $region37: #{bi_lstm_forward.1} parent=1 // pred_fallthru
      _
    %v33 = vld [vmem:[%s2] sm:$0xff]
    %v34 = vld [vmem:[%s2 + $0x8] sm:$0xff]
    %v35 = vld [vmem:[%s2 + $0x10] sm:$0xff]
    %v36 = vld [vmem:[%s2 + $0x18] sm:$0xff]
    %v37 = vld [vmem:[%s2 + $0x20] sm:$0xff]
    %v38 = vld [vmem:[%s2 + $0x28] sm:$0xff]
    %v39 = vld [vmem:[%s2 + $0x30] sm:$0xff]
    %v40 = vld [vmem:[%s2 + $0x38] sm:$0xff]
    %v41 = vld [vmem:[%s5] sm:$0xff]
    %v42 = vld [vmem:[%s5 + $0x8] sm:$0xff]
    %v43 = vld [vmem:[%s5 + $0x10] sm:$0xff]
    %v44 = vld [vmem:[%s5 + $0x18] sm:$0xff]
    %v45 = vld [vmem:[%s5 + $0x20] sm:$0xff]
    %v46 = vld [vmem:[%s5 + $0x28] sm:$0xff]
    %v47 = vld [vmem:[%s5 + $0x30] sm:$0xff]
    %v48 = vld [vmem:[%s5 + $0x38] sm:$0xff]
    %v49 = vld [vmem:[%s4] sm:$0xff]
    %v50 = vld [vmem:[%s4 + $0x8] sm:$0xff]
    %v51 = vld [vmem:[%s4 + $0x10] sm:$0xff]
    %v52 = vld [vmem:[%s4 + $0x18] sm:$0xff]
    %v53 = vld [vmem:[%s4 + $0x20] sm:$0xff]
    %v54 = vld [vmem:[%s4 + $0x28] sm:$0xff]
    %v55 = vld [vmem:[%s4 + $0x30] sm:$0xff]
    %v56 = vld [vmem:[%s4 + $0x38] sm:$0xff]
    %v57 = vld [vmem:[%s4 + $0x40] sm:$0xff]
    %v58 = vld [vmem:[%s4 + $0x48] sm:$0xff]
    %v59 = vld [vmem:[%s4 + $0x50] sm:$0xff]
    %v60 = vld [vmem:[%s4 + $0x58] sm:$0xff]
    %v61 = vld [vmem:[%s4 + $0x60] sm:$0xff]
    %v62 = vld [vmem:[%s4 + $0x68] sm:$0xff]
    %v63 = vld [vmem:[%s4 + $0x70] sm:$0xff]
    %v64 = vld [vmem:[%s4 + $0x78] sm:$0xff]
    %v65 = vld [vmem:[%s7] sm:$0xff]
    %v66 = vld [vmem:[%s7 + $0x8] sm:$0xff]
    %v67 = vld [vmem:[%s7 + $0x10] sm:$0xff]
    %v68 = vld [vmem:[%s7 + $0x18] sm:$0xff]
    %v69 = vld [vmem:[%s7 + $0x20] sm:$0xff]
    %v70 = vld [vmem:[%s7 + $0x28] sm:$0xff]
    %v71 = vld [vmem:[%s7 + $0x30] sm:$0xff]
    %v72 = vld [vmem:[%s7 + $0x38] sm:$0xff]
    %v73 = vld [vmem:[%s0] sm:$0xff]
    %v74 = vld [vmem:[%s0 + $0x8] sm:$0xff]
    %v75 = vld [vmem:[%s1] sm:$0xff]
    %v76 = vld [vmem:[%s1 + $0x8] sm:$0xff]
    %v77 = vld [vmem:[%s1 + $0x10] sm:$0xff]
    %v78 = vld [vmem:[%s1 + $0x18] sm:$0xff]
    %v79 = vld [vmem:[%s3] sm:$0x3]
    %v81 = vlaneseq
    %v82 = vshrl.u32 %v81, 7
    %v83 = vsub.s32 0, %v82
    %v84 = vrot.slane %v79, %v83
    %v85 = vlaneseq
    %v86 = vshrl.u32 %v85, 7
    %v87 = vsub.s32 1, %v86
    %v88 = vrot.slane %v79, %v87
    %vm91 = vcmask 130048
    %v93 = vsel %vm91, %v73, 0
    %v96 = vsel %vm91, %v74, 0
    %98 = vmatprep.subr.mxu0 %v76
    %99 = vmatpush1.msra.mxu0 %v75
    %100 = vmatprep.subr.mxu0 %v78
    %101 = vmatpush1.msra.mxu0 %v77
    %102 = vmatprep.subr.mxu0 0.0
    %103 = vmatpush1.msra.mxu0 0.0
    %104 = vmatprep.subr.mxu0 0.0
    %105 = vmatpush1.msra.mxu0 0.0
    %106 = vmatprep.subr.mxu0 0.0
    %107 = vmatpush1.msra.mxu0 0.0
    %108 = vmatprep.subr.mxu0 0.0
    %109 = vmatpush1.msra.mxu0 0.0
    %110 = vmatprep.subr.mxu0 0.0
    %111 = vmatpush1.msra.mxu0 0.0
    %112 = vmatprep.subr.mxu0 0.0
    %113 = vmatpush1.msra.mxu0 0.0
    %114 = vmatprep.subr.mxu0 0.0
    %115 = vmatpush1.msra.mxu0 0.0
    %116 = vmatprep.subr.mxu0 0.0
    %117 = vmatpush1.msra.mxu0 0.0
    %118 = vmatprep.subr.mxu0 0.0
    %119 = vmatpush1.msra.mxu0 0.0
    %120 = vmatprep.subr.mxu0 0.0
    %121 = vmatpush1.msra.mxu0 0.0
    %122 = vmatprep.subr.mxu0 0.0
    %123 = vmatpush1.msra.mxu0 0.0
    %124 = vmatprep.subr.mxu0 0.0
    %125 = vmatpush1.msra.mxu0 0.0
    %126 = vmatprep.subr.mxu0 0.0
    %127 = vmatpush1.msra.mxu0 0.0
    %128 = vmatprep.subr.mxu0 0.0
    %129 = vmatpush1.msra.mxu0 0.0
    %130 = vmatprep.subr.mxu0 0.0
    %131 = vmatpush1.msra.mxu0 0.0
    %132 = vmatprep.subr.mxu0 0.0
    %133 = vmatpush1.msra.mxu0 0.0
    %134 = vmatprep.subr.mxu0 0.0
    %135 = vmatpush1.msra.mxu0 0.0
    %136 = vmatprep.subr.mxu0 0.0
    %137 = vmatpush1.msra.mxu0 0.0
    %138 = vmatprep.subr.mxu0 0.0
    %139 = vmatpush1.msra.mxu0 0.0
    %140 = vmatprep.subr.mxu0 0.0
    %141 = vmatpush1.msra.mxu0 0.0
    %142 = vmatprep.subr.mxu0 0.0
    %143 = vmatpush1.msra.mxu0 0.0
    %144 = vmatprep.subr.mxu0 0.0
    %145 = vmatpush1.msra.mxu0 0.0
    %146 = vmatprep.subr.mxu0 0.0
    %147 = vmatpush1.msra.mxu0 0.0
    %148 = vmatprep.subr.mxu0 0.0
    %149 = vmatpush1.msra.mxu0 0.0
    %150 = vmatprep.subr.mxu0 0.0
    %151 = vmatpush1.msra.mxu0 0.0
    %152 = vmatprep.subr.mxu0 0.0
    %153 = vmatpush1.msra.mxu0 0.0
    %154 = vmatprep.subr.mxu0 0.0
    %155 = vmatpush1.msra.mxu0 0.0
    %156 = vmatprep.subr.mxu0 0.0
    %157 = vmatpush1.msra.mxu0 0.0
    %158 = vmatprep.subr.mxu0 0.0
    %159 = vmatpush1.msra.mxu0 0.0
    %160 = vmatprep.subr.mxu0 0.0
    %161 = vmatpush1.msra.mxu0 0.0
    %162 = vmatprep.mubr.f32.mxu0 0.0
    %163 = vmatmul.mubr.f32.gmra.mrb[0].mxu0 %v93
    %v164 = vpop.f32.mrb[0].mxu0
    %v165 = vadd.f32 %v84, %v164
    %v166 = vpop.f32.mrb[0].mxu0
    %v167 = vadd.f32 %v88, %v166
    %168 = vmatprep.mubr.f32.mxu0 0.0
    %169 = vmatmul.mubr.f32.gmra.mrb[0].mxu0 %v96
    %v170 = vpop.f32.mrb[0].mxu0
    %v171 = vadd.f32 %v84, %v170
    %v172 = vpop.f32.mrb[0].mxu0
    %v173 = vadd.f32 %v88, %v172
    %174 = vdwg.mxu0
    %175 = vst [vmem:[#allocation2] sm:$0xff] %v165
    %176 = vst [vmem:[#allocation2 + $0x8] sm:$0xff] %v167
    %177 = vst [vmem:[#allocation2 + $0x10] sm:$0xff] %v171
    %178 = vst [vmem:[#allocation2 + $0x18] sm:$0xff] %v173
    %v179 = vld [vmem:[#allocation2] sm:$0x3]
    %vm180 = vcmask 261120
    %v182 = vsel %vm180, 0.0, 0
    %184 = vmatprep.subr.mxu0 0.0
    %185 = vmatpush1.msra.mxu0 %v33
    %186 = vmatprep.subr.mxu0 0.0
    %187 = vmatpush1.msra.mxu0 %v35
    %188 = vmatprep.subr.mxu0 0.0
    %189 = vmatpush1.msra.mxu0 %v37
    %190 = vmatprep.subr.mxu0 0.0
    %191 = vmatpush1.msra.mxu0 %v39
    %192 = vmatprep.subr.mxu0 0.0
    %193 = vmatpush1.msra.mxu0 0.0
    %194 = vmatprep.subr.mxu0 0.0
    %195 = vmatpush1.msra.mxu0 0.0
    %196 = vmatprep.subr.mxu0 0.0
    %197 = vmatpush1.msra.mxu0 0.0
    %198 = vmatprep.subr.mxu0 0.0
    %199 = vmatpush1.msra.mxu0 0.0
    %200 = vmatprep.subr.mxu0 0.0
    %201 = vmatpush1.msra.mxu0 0.0
    %202 = vmatprep.subr.mxu0 0.0
    %203 = vmatpush1.msra.mxu0 0.0
    %204 = vmatprep.subr.mxu0 0.0
    %205 = vmatpush1.msra.mxu0 0.0
    %206 = vmatprep.subr.mxu0 0.0
    %207 = vmatpush1.msra.mxu0 0.0
    %208 = vmatprep.subr.mxu0 0.0
    %209 = vmatpush1.msra.mxu0 0.0
    %210 = vmatprep.subr.mxu0 0.0
    %211 = vmatpush1.msra.mxu0 0.0
    %212 = vmatprep.subr.mxu0 0.0
    %213 = vmatpush1.msra.mxu0 0.0
    %214 = vmatprep.subr.mxu0 0.0
    %215 = vmatpush1.msra.mxu0 0.0
    %216 = vmatprep.subr.mxu0 0.0
    %217 = vmatpush1.msra.mxu0 0.0
    %218 = vmatprep.subr.mxu0 0.0
    %219 = vmatpush1.msra.mxu0 0.0
    %220 = vmatprep.subr.mxu0 0.0
    %221 = vmatpush1.msra.mxu0 0.0
    %222 = vmatprep.subr.mxu0 0.0
    %223 = vmatpush1.msra.mxu0 0.0
    %224 = vmatprep.subr.mxu0 0.0
    %225 = vmatpush1.msra.mxu0 0.0
    %226 = vmatprep.subr.mxu0 0.0
    %227 = vmatpush1.msra.mxu0 0.0
    %228 = vmatprep.subr.mxu0 0.0
    %229 = vmatpush1.msra.mxu0 0.0
    %230 = vmatprep.subr.mxu0 0.0
    %231 = vmatpush1.msra.mxu0 0.0
    %232 = vmatprep.subr.mxu0 0.0
    %233 = vmatpush1.msra.mxu0 0.0
    %234 = vmatprep.subr.mxu0 0.0
    %235 = vmatpush1.msra.mxu0 0.0
    %236 = vmatprep.subr.mxu0 0.0
    %237 = vmatpush1.msra.mxu0 0.0
    %238 = vmatprep.subr.mxu0 0.0
    %239 = vmatpush1.msra.mxu0 0.0
    %240 = vmatprep.subr.mxu0 0.0
    %241 = vmatpush1.msra.mxu0 0.0
    %242 = vmatprep.subr.mxu0 0.0
    %243 = vmatpush1.msra.mxu0 0.0
    %244 = vmatprep.subr.mxu0 0.0
    %245 = vmatpush1.msra.mxu0 0.0
    %246 = vmatprep.subr.mxu0 0.0
    %247 = vmatpush1.msra.mxu0 0.0
    %248 = vmatprep.mubr.f32.mxu0 0.0
    %249 = vmatmul.mubr.f32.gmra.mrb[0].mxu0 %v182
    %v250 = vpop.f32.mrb[0].mxu0
    %v251 = vadd.f32 0.0, %v250
    %v252 = vpop.f32.mrb[0].mxu0
    %253 = vdwg.mxu0
    %v254 = vadd.f32 %v179, %v251
    %v255 = vxor.u32 %v254, 2147483648
    %v256 = vmul.f32 %v255, 1.442695
    %v257 = vpow.pop %v256
    %v258 = vadd.f32 %v257, 1.0
    %v259 = vrcp.pop %v258
    %v260 = vmul.f32 1.0, %v259
    %v261 = vtanh.pop %v254
    %v262 = vmul.f32 %v260, 0.0
    %264 = vrot.lane.b32.xlu0 %v261, 64
    %v265 = vpop.permute.xlu0 %264
    %v267 = vmul.f32 %v260, %v265
    %269 = vrot.lane.b32.xlu0 %v267, 32
    %v270 = vpop.permute.xlu0 %269
    %v272 = vadd.f32 %v262, %v270
    %v273 = vtanh.pop %v272
    %275 = vrot.lane.b32.xlu0 %v273, 64
    %v276 = vpop.permute.xlu0 %275
    %v278 = vmul.f32 %v260, %v276
    %280 = vrot.lane.b32.xlu0 %v278, 32
    %v281 = vpop.permute.xlu0 %280
    %vm283 = vcmask 254976
    %284 = vst.msk [vmem:[#allocation3] sm:$0x3] %vm283, %v281
    %v285 = vld [vmem:[#allocation2] sm:$0xc]
    %v286 = vsel %vm180, %v281, 0
    %288 = vmatprep.subr.mxu0 0.0
    %289 = vmatpush1.msra.mxu0 %v33
    %290 = vmatprep.subr.mxu0 0.0
    %291 = vmatpush1.msra.mxu0 %v35
    %292 = vmatprep.subr.mxu0 0.0
    %293 = vmatpush1.msra.mxu0 %v37
    %294 = vmatprep.subr.mxu0 0.0
    %295 = vmatpush1.msra.mxu0 %v39
    %296 = vmatprep.subr.mxu0 0.0
    %297 = vmatpush1.msra.mxu0 0.0
    %298 = vmatprep.subr.mxu0 0.0
    %299 = vmatpush1.msra.mxu0 0.0
    %300 = vmatprep.subr.mxu0 0.0
    %301 = vmatpush1.msra.mxu0 0.0
    %302 = vmatprep.subr.mxu0 0.0
    %303 = vmatpush1.msra.mxu0 0.0
    %304 = vmatprep.subr.mxu0 0.0
    %305 = vmatpush1.msra.mxu0 0.0
    %306 = vmatprep.subr.mxu0 0.0
    %307 = vmatpush1.msra.mxu0 0.0
    %308 = vmatprep.subr.mxu0 0.0
    %309 = vmatpush1.msra.mxu0 0.0
    %310 = vmatprep.subr.mxu0 0.0
    %311 = vmatpush1.msra.mxu0 0.0
    %312 = vmatprep.subr.mxu0 0.0
    %313 = vmatpush1.msra.mxu0 0.0
    %314 = vmatprep.subr.mxu0 0.0
    %315 = vmatpush1.msra.mxu0 0.0
    %316 = vmatprep.subr.mxu0 0.0
    %317 = vmatpush1.msra.mxu0 0.0
    %318 = vmatprep.subr.mxu0 0.0
    %319 = vmatpush1.msra.mxu0 0.0
    %320 = vmatprep.subr.mxu0 0.0
    %321 = vmatpush1.msra.mxu0 0.0
    %322 = vmatprep.subr.mxu0 0.0
    %323 = vmatpush1.msra.mxu0 0.0
    %324 = vmatprep.subr.mxu0 0.0
    %325 = vmatpush1.msra.mxu0 0.0
    %326 = vmatprep.subr.mxu0 0.0
    %327 = vmatpush1.msra.mxu0 0.0
    %328 = vmatprep.subr.mxu0 0.0
    %329 = vmatpush1.msra.mxu0 0.0
    %330 = vmatprep.subr.mxu0 0.0
    %331 = vmatpush1.msra.mxu0 0.0
    %332 = vmatprep.subr.mxu0 0.0
    %333 = vmatpush1.msra.mxu0 0.0
    %334 = vmatprep.subr.mxu0 0.0
    %335 = vmatpush1.msra.mxu0 0.0
    %336 = vmatprep.subr.mxu0 0.0
    %337 = vmatpush1.msra.mxu0 0.0
    %338 = vmatprep.subr.mxu0 0.0
    %339 = vmatpush1.msra.mxu0 0.0
    %340 = vmatprep.subr.mxu0 0.0
    %341 = vmatpush1.msra.mxu0 0.0
    %342 = vmatprep.subr.mxu0 0.0
    %343 = vmatpush1.msra.mxu0 0.0
    %344 = vmatprep.subr.mxu0 0.0
    %345 = vmatpush1.msra.mxu0 0.0
    %346 = vmatprep.subr.mxu0 0.0
    %347 = vmatpush1.msra.mxu0 0.0
    %348 = vmatprep.subr.mxu0 0.0
    %349 = vmatpush1.msra.mxu0 0.0
    %350 = vmatprep.subr.mxu0 0.0
    %351 = vmatpush1.msra.mxu0 0.0
    %352 = vmatprep.mubr.f32.mxu0 0.0
    %353 = vmatmul.mubr.f32.gmra.mrb[0].mxu0 %v286
    %v354 = vpop.f32.mrb[0].mxu0
    %v355 = vadd.f32 0.0, %v354
    %v356 = vpop.f32.mrb[0].mxu0
    %357 = vdwg.mxu0
    %v359 = vrot.slane %v355, 6
    %v361 = vadd.f32 %v285, %v359
    %v362 = vxor.u32 %v361, 2147483648
    %v363 = vmul.f32 %v362, 1.442695
    %v364 = vpow.pop %v363
    %v365 = vadd.f32 %v364, 1.0
    %v366 = vrcp.pop %v365
    %v367 = vmul.f32 1.0, %v366
    %v368 = vtanh.pop %v361
    %v370 = vrot.slane %v272, 6
    %v372 = vmul.f32 %v367, %v370
    %374 = vrot.lane.b32.xlu0 %v368, 64
    %v375 = vpop.permute.xlu0 %374
    %v377 = vmul.f32 %v367, %v375
    %379 = vrot.lane.b32.xlu0 %v377, 32
    %v380 = vpop.permute.xlu0 %379
    %v382 = vadd.f32 %v372, %v380
    %v383 = vtanh.pop %v382
    %385 = vrot.lane.b32.xlu0 %v383, 64
    %v386 = vpop.permute.xlu0 %385
    %v388 = vmul.f32 %v367, %v386
    %390 = vrot.lane.b32.xlu0 %v388, 32
    %v391 = vpop.permute.xlu0 %390
    %vm393 = vcmask 257026
    %394 = vst.msk [vmem:[#allocation3] sm:$0xc] %vm393, %v391
    %v395 = vld [vmem:[#allocation2] sm:$0x30]
    %v396 = vrot.slane %v388, 2
    %397 = vrot.lane.b32.xlu0 %v396, 32
    %v398 = vpop.permute.xlu0 %397
    %v399 = vsel %vm180, %v398, 0
    %401 = vmatprep.subr.mxu0 0.0
    %402 = vmatpush1.msra.mxu0 %v33
    %403 = vmatprep.subr.mxu0 0.0
    %404 = vmatpush1.msra.mxu0 %v35
    %405 = vmatprep.subr.mxu0 0.0
    %406 = vmatpush1.msra.mxu0 %v37
    %407 = vmatprep.subr.mxu0 0.0
    %408 = vmatpush1.msra.mxu0 %v39
    %409 = vmatprep.subr.mxu0 0.0
    %410 = vmatpush1.msra.mxu0 0.0
    %411 = vmatprep.subr.mxu0 0.0
    %412 = vmatpush1.msra.mxu0 0.0
    %413 = vmatprep.subr.mxu0 0.0
    %414 = vmatpush1.msra.mxu0 0.0
    %415 = vmatprep.subr.mxu0 0.0
    %416 = vmatpush1.msra.mxu0 0.0
    %417 = vmatprep.subr.mxu0 0.0
    %418 = vmatpush1.msra.mxu0 0.0
    %419 = vmatprep.subr.mxu0 0.0
    %420 = vmatpush1.msra.mxu0 0.0
    %421 = vmatprep.subr.mxu0 0.0
    %422 = vmatpush1.msra.mxu0 0.0
    %423 = vmatprep.subr.mxu0 0.0
    %424 = vmatpush1.msra.mxu0 0.0
    %425 = vmatprep.subr.mxu0 0.0
    %426 = vmatpush1.msra.mxu0 0.0
    %427 = vmatprep.subr.mxu0 0.0
    %428 = vmatpush1.msra.mxu0 0.0
    %429 = vmatprep.subr.mxu0 0.0
    %430 = vmatpush1.msra.mxu0 0.0
    %431 = vmatprep.subr.mxu0 0.0
    %432 = vmatpush1.msra.mxu0 0.0
    %433 = vmatprep.subr.mxu0 0.0
    %434 = vmatpush1.msra.mxu0 0.0
    %435 = vmatprep.subr.mxu0 0.0
    %436 = vmatpush1.msra.mxu0 0.0
    %437 = vmatprep.subr.mxu0 0.0
    %438 = vmatpush1.msra.mxu0 0.0
    %439 = vmatprep.subr.mxu0 0.0
    %440 = vmatpush1.msra.mxu0 0.0
    %441 = vmatprep.subr.mxu0 0.0
    %442 = vmatpush1.msra.mxu0 0.0
    %443 = vmatprep.subr.mxu0 0.0
    %444 = vmatpush1.msra.mxu0 0.0
    %445 = vmatprep.subr.mxu0 0.0
    %446 = vmatpush1.msra.mxu0 0.0
    %447 = vmatprep.subr.mxu0 0.0
    %448 = vmatpush1.msra.mxu0 0.0
    %449 = vmatprep.subr.mxu0 0.0
    %450 = vmatpush1.msra.mxu0 0.0
    %451 = vmatprep.subr.mxu0 0.0
    %452 = vmatpush1.msra.mxu0 0.0
    %453 = vmatprep.subr.mxu0 0.0
    %454 = vmatpush1.msra.mxu0 0.0
    %455 = vmatprep.subr.mxu0 0.0
    %456 = vmatpush1.msra.mxu0 0.0
    %457 = vmatprep.subr.mxu0 0.0
    %458 = vmatpush1.msra.mxu0 0.0
    %459 = vmatprep.subr.mxu0 0.0
    %460 = vmatpush1.msra.mxu0 0.0
    %461 = vmatprep.subr.mxu0 0.0
    %462 = vmatpush1.msra.mxu0 0.0
    %463 = vmatprep.subr.mxu0 0.0
    %464 = vmatpush1.msra.mxu0 0.0
    %465 = vmatprep.mubr.f32.mxu0 0.0
    %466 = vmatmul.mubr.f32.gmra.mrb[0].mxu0 %v399
    %v467 = vpop.f32.mrb[0].mxu0
    %v468 = vadd.f32 0.0, %v467
    %v469 = vpop.f32.mrb[0].mxu0
    %470 = vdwg.mxu0
    %v472 = vrot.slane %v468, 4
    %v474 = vadd.f32 %v395, %v472
    %v475 = vxor.u32 %v474, 2147483648
    %v476 = vmul.f32 %v475, 1.442695
    %v477 = vpow.pop %v476
    %v478 = vadd.f32 %v477, 1.0
    %v479 = vrcp.pop %v478
    %v480 = vmul.f32 1.0, %v479
    %v481 = vtanh.pop %v474
    %v483 = vrot.slane %v382, 6
    %v485 = vmul.f32 %v480, %v483
    %487 = vrot.lane.b32.xlu0 %v481, 64
    %v488 = vpop.permute.xlu0 %487
    %v490 = vmul.f32 %v480, %v488
    %492 = vrot.lane.b32.xlu0 %v490, 32
    %v493 = vpop.permute.xlu0 %492
    %v495 = vadd.f32 %v485, %v493
    %v496 = vtanh.pop %v495
    %498 = vrot.lane.b32.xlu0 %v496, 64
    %v499 = vpop.permute.xlu0 %498
    %v501 = vmul.f32 %v480, %v499
    %503 = vrot.lane.b32.xlu0 %v501, 32
    %v504 = vpop.permute.xlu0 %503
    %vm506 = vcmask 259076
    %507 = vst.msk [vmem:[#allocation3] sm:$0x30] %vm506, %v504
    %v508 = vld [vmem:[#allocation2] sm:$0xc0]
    %v509 = vrot.slane %v501, 4
    %510 = vrot.lane.b32.xlu0 %v509, 32
    %v511 = vpop.permute.xlu0 %510
    %v512 = vsel %vm180, %v511, 0
    %514 = vmatprep.subr.mxu0 0.0
    %515 = vmatpush1.msra.mxu0 %v33
    %516 = vmatprep.subr.mxu0 0.0
    %517 = vmatpush1.msra.mxu0 %v35
    %518 = vmatprep.subr.mxu0 0.0
    %519 = vmatpush1.msra.mxu0 %v37
    %520 = vmatprep.subr.mxu0 0.0
    %521 = vmatpush1.msra.mxu0 %v39
    %522 = vmatprep.subr.mxu0 0.0
    %523 = vmatpush1.msra.mxu0 0.0
    %524 = vmatprep.subr.mxu0 0.0
    %525 = vmatpush1.msra.mxu0 0.0
    %526 = vmatprep.subr.mxu0 0.0
    %527 = vmatpush1.msra.mxu0 0.0
    %528 = vmatprep.subr.mxu0 0.0
    %529 = vmatpush1.msra.mxu0 0.0
    %530 = vmatprep.subr.mxu0 0.0
    %531 = vmatpush1.msra.mxu0 0.0
    %532 = vmatprep.subr.mxu0 0.0
    %533 = vmatpush1.msra.mxu0 0.0
    %534 = vmatprep.subr.mxu0 0.0
    %535 = vmatpush1.msra.mxu0 0.0
    %536 = vmatprep.subr.mxu0 0.0
    %537 = vmatpush1.msra.mxu0 0.0
    %538 = vmatprep.subr.mxu0 0.0
    %539 = vmatpush1.msra.mxu0 0.0
    %540 = vmatprep.subr.mxu0 0.0
    %541 = vmatpush1.msra.mxu0 0.0
    %542 = vmatprep.subr.mxu0 0.0
    %543 = vmatpush1.msra.mxu0 0.0
    %544 = vmatprep.subr.mxu0 0.0
    %545 = vmatpush1.msra.mxu0 0.0
    %546 = vmatprep.subr.mxu0 0.0
    %547 = vmatpush1.msra.mxu0 0.0
    %548 = vmatprep.subr.mxu0 0.0
    %549 = vmatpush1.msra.mxu0 0.0
    %550 = vmatprep.subr.mxu0 0.0
    %551 = vmatpush1.msra.mxu0 0.0
    %552 = vmatprep.subr.mxu0 0.0
    %553 = vmatpush1.msra.mxu0 0.0
    %554 = vmatprep.subr.mxu0 0.0
    %555 = vmatpush1.msra.mxu0 0.0
    %556 = vmatprep.subr.mxu0 0.0
    %557 = vmatpush1.msra.mxu0 0.0
    %558 = vmatprep.subr.mxu0 0.0
    %559 = vmatpush1.msra.mxu0 0.0
    %560 = vmatprep.subr.mxu0 0.0
    %561 = vmatpush1.msra.mxu0 0.0
    %562 = vmatprep.subr.mxu0 0.0
    %563 = vmatpush1.msra.mxu0 0.0
    %564 = vmatprep.subr.mxu0 0.0
    %565 = vmatpush1.msra.mxu0 0.0
    %566 = vmatprep.subr.mxu0 0.0
    %567 = vmatpush1.msra.mxu0 0.0
    %568 = vmatprep.subr.mxu0 0.0
    %569 = vmatpush1.msra.mxu0 0.0
    %570 = vmatprep.subr.mxu0 0.0
    %571 = vmatpush1.msra.mxu0 0.0
    %572 = vmatprep.subr.mxu0 0.0
    %573 = vmatpush1.msra.mxu0 0.0
    %574 = vmatprep.subr.mxu0 0.0
    %575 = vmatpush1.msra.mxu0 0.0
    %576 = vmatprep.subr.mxu0 0.0
    %577 = vmatpush1.msra.mxu0 0.0
    %578 = vmatprep.mubr.f32.mxu0 0.0
    %579 = vmatmul.mubr.f32.gmra.mrb[0].mxu0 %v512
    %v580 = vpop.f32.mrb[0].mxu0
    %v581 = vadd.f32 0.0, %v580
    %v582 = vpop.f32.mrb[0].mxu0
    %583 = vdwg.mxu0
    %v585 = vrot.slane %v581, 2
    %v587 = vadd.f32 %v508, %v585
    %v588 = vxor.u32 %v587, 2147483648
    %v589 = vmul.f32 %v588, 1.442695
    %v590 = vpow.pop %v589
    %v591 = vadd.f32 %v590, 1.0
    %v592 = vrcp.pop %v591
    %v593 = vmul.f32 1.0, %v592
    %v594 = vtanh.pop %v587
    %v596 = vrot.slane %v495, 6
    %v598 = vmul.f32 %v593, %v596
    %600 = vrot.lane.b32.xlu0 %v594, 64
    %v601 = vpop.permute.xlu0 %600
    %v603 = vmul.f32 %v593, %v601
    %605 = vrot.lane.b32.xlu0 %v603, 32
    %v606 = vpop.permute.xlu0 %605
    %v608 = vadd.f32 %v598, %v606
    %v609 = vtanh.pop %v608
    %611 = vrot.lane.b32.xlu0 %v609, 64
    %v612 = vpop.permute.xlu0 %611
    %v614 = vmul.f32 %v593, %v612
    %616 = vrot.lane.b32.xlu0 %v614, 32
    %v617 = vpop.permute.xlu0 %616
    %vm619 = vcmask 261126
    %620 = vst.msk [vmem:[#allocation3] sm:$0xc0] %vm619, %v617
    %v621 = vld [vmem:[#allocation2 + $0x10] sm:$0x3]
    %v622 = vrot.slane %v614, 6
    %623 = vrot.lane.b32.xlu0 %v622, 32
    %v624 = vpop.permute.xlu0 %623
    %v625 = vsel %vm180, %v624, 0
    %627 = vmatprep.subr.mxu0 0.0
    %628 = vmatpush1.msra.mxu0 %v33
    %629 = vmatprep.subr.mxu0 0.0
    %630 = vmatpush1.msra.mxu0 %v35
    %631 = vmatprep.subr.mxu0 0.0
    %632 = vmatpush1.msra.mxu0 %v37
    %633 = vmatprep.subr.mxu0 0.0
    %634 = vmatpush1.msra.mxu0 %v39
    %635 = vmatprep.subr.mxu0 0.0
    %636 = vmatpush1.msra.mxu0 0.0
    %637 = vmatprep.subr.mxu0 0.0
    %638 = vmatpush1.msra.mxu0 0.0
    %639 = vmatprep.subr.mxu0 0.0
    %640 = vmatpush1.msra.mxu0 0.0
    %641 = vmatprep.subr.mxu0 0.0
    %642 = vmatpush1.msra.mxu0 0.0
    %643 = vmatprep.subr.mxu0 0.0
    %644 = vmatpush1.msra.mxu0 0.0
    %645 = vmatprep.subr.mxu0 0.0
    %646 = vmatpush1.msra.mxu0 0.0
    %647 = vmatprep.subr.mxu0 0.0
    %648 = vmatpush1.msra.mxu0 0.0
    %649 = vmatprep.subr.mxu0 0.0
    %650 = vmatpush1.msra.mxu0 0.0
    %651 = vmatprep.subr.mxu0 0.0
    %652 = vmatpush1.msra.mxu0 0.0
    %653 = vmatprep.subr.mxu0 0.0
    %654 = vmatpush1.msra.mxu0 0.0
    %655 = vmatprep.subr.mxu0 0.0
    %656 = vmatpush1.msra.mxu0 0.0
    %657 = vmatprep.subr.mxu0 0.0
    %658 = vmatpush1.msra.mxu0 0.0
    %659 = vmatprep.subr.mxu0 0.0
    %660 = vmatpush1.msra.mxu0 0.0
    %661 = vmatprep.subr.mxu0 0.0
    %662 = vmatpush1.msra.mxu0 0.0
    %663 = vmatprep.subr.mxu0 0.0
    %664 = vmatpush1.msra.mxu0 0.0
    %665 = vmatprep.subr.mxu0 0.0
    %666 = vmatpush1.msra.mxu0 0.0
    %667 = vmatprep.subr.mxu0 0.0
    %668 = vmatpush1.msra.mxu0 0.0
    %669 = vmatprep.subr.mxu0 0.0
    %670 = vmatpush1.msra.mxu0 0.0
    %671 = vmatprep.subr.mxu0 0.0
    %672 = vmatpush1.msra.mxu0 0.0
    %673 = vmatprep.subr.mxu0 0.0
    %674 = vmatpush1.msra.mxu0 0.0
    %675 = vmatprep.subr.mxu0 0.0
    %676 = vmatpush1.msra.mxu0 0.0
    %677 = vmatprep.subr.mxu0 0.0
    %678 = vmatpush1.msra.mxu0 0.0
    %679 = vmatprep.subr.mxu0 0.0
    %680 = vmatpush1.msra.mxu0 0.0
    %681 = vmatprep.subr.mxu0 0.0
    %682 = vmatpush1.msra.mxu0 0.0
    %683 = vmatprep.subr.mxu0 0.0
    %684 = vmatpush1.msra.mxu0 0.0
    %685 = vmatprep.subr.mxu0 0.0
    %686 = vmatpush1.msra.mxu0 0.0
    %687 = vmatprep.subr.mxu0 0.0
    %688 = vmatpush1.msra.mxu0 0.0
    %689 = vmatprep.subr.mxu0 0.0
    %690 = vmatpush1.msra.mxu0 0.0
    %691 = vmatprep.mubr.f32.mxu0 0.0
    %692 = vmatmul.mubr.f32.gmra.mrb[0].mxu0 %v625
    %v693 = vpop.f32.mrb[0].mxu0
    %v694 = vadd.f32 0.0, %v693
    %v695 = vpop.f32.mrb[0].mxu0
    %696 = vdwg.mxu0
    %v697 = vadd.f32 %v621, %v694
    %v698 = vxor.u32 %v697, 2147483648
    %v699 = vmul.f32 %v698, 1.442695
    %v700 = vpow.pop %v699
    %v701 = vadd.f32 %v700, 1.0
    %v702 = vrcp.pop %v701
    %v703 = vmul.f32 1.0, %v702
    %v704 = vtanh.pop %v697
    %v706 = vrot.slane %v608, 6
    %v708 = vmul.f32 %v703, %v706
    %710 = vrot.lane.b32.xlu0 %v704, 64
    %v711 = vpop.permute.xlu0 %710
    %v713 = vmul.f32 %v703, %v711
    %715 = vrot.lane.b32.xlu0 %v713, 32
    %v716 = vpop.permute.xlu0 %715
    %v718 = vadd.f32 %v708, %v716
    %v719 = vtanh.pop %v718
    %721 = vrot.lane.b32.xlu0 %v719, 64
    %v722 = vpop.permute.xlu0 %721
    %v724 = vmul.f32 %v703, %v722
    %726 = vrot.lane.b32.xlu0 %v724, 32
    %v727 = vpop.permute.xlu0 %726
    %729 = vst.msk [vmem:[#allocation3 + $0x8] sm:$0x3] %vm283, %v727
    %v730 = vld [vmem:[#allocation2 + $0x10] sm:$0xc]
    %v731 = vsel %vm180, %v727, 0
    %733 = vmatprep.subr.mxu0 0.0
    %734 = vmatpush1.msra.mxu0 %v33
    %735 = vmatprep.subr.mxu0 0.0
    %736 = vmatpush1.msra.mxu0 %v35
    %737 = vmatprep.subr.mxu0 0.0
    %738 = vmatpush1.msra.mxu0 %v37
    %739 = vmatprep.subr.mxu0 0.0
    %740 = vmatpush1.msra.mxu0 %v39
    %741 = vmatprep.subr.mxu0 0.0
    %742 = vmatpush1.msra.mxu0 0.0
    %743 = vmatprep.subr.mxu0 0.0
    %744 = vmatpush1.msra.mxu0 0.0
    %745 = vmatprep.subr.mxu0 0.0
    %746 = vmatpush1.msra.mxu0 0.0
    %747 = vmatprep.subr.mxu0 0.0
    %748 = vmatpush1.msra.mxu0 0.0
    %749 = vmatprep.subr.mxu0 0.0
    %750 = vmatpush1.msra.mxu0 0.0
    %751 = vmatprep.subr.mxu0 0.0
    %752 = vmatpush1.msra.mxu0 0.0
    %753 = vmatprep.subr.mxu0 0.0
    %754 = vmatpush1.msra.mxu0 0.0
    %755 = vmatprep.subr.mxu0 0.0
    %756 = vmatpush1.msra.mxu0 0.0
    %757 = vmatprep.subr.mxu0 0.0
    %758 = vmatpush1.msra.mxu0 0.0
    %759 = vmatprep.subr.mxu0 0.0
    %760 = vmatpush1.msra.mxu0 0.0
    %761 = vmatprep.subr.mxu0 0.0
    %762 = vmatpush1.msra.mxu0 0.0
    %763 = vmatprep.subr.mxu0 0.0
    %764 = vmatpush1.msra.mxu0 0.0
    %765 = vmatprep.subr.mxu0 0.0
    %766 = vmatpush1.msra.mxu0 0.0
    %767 = vmatprep.subr.mxu0 0.0
    %768 = vmatpush1.msra.mxu0 0.0
    %769 = vmatprep.subr.mxu0 0.0
    %770 = vmatpush1.msra.mxu0 0.0
    %771 = vmatprep.subr.mxu0 0.0
    %772 = vmatpush1.msra.mxu0 0.0
    %773 = vmatprep.subr.mxu0 0.0
    %774 = vmatpush1.msra.mxu0 0.0
    %775 = vmatprep.subr.mxu0 0.0
    %776 = vmatpush1.msra.mxu0 0.0
    %777 = vmatprep.subr.mxu0 0.0
    %778 = vmatpush1.msra.mxu0 0.0
    %779 = vmatprep.subr.mxu0 0.0
    %780 = vmatpush1.msra.mxu0 0.0
    %781 = vmatprep.subr.mxu0 0.0
    %782 = vmatpush1.msra.mxu0 0.0
    %783 = vmatprep.subr.mxu0 0.0
    %784 = vmatpush1.msra.mxu0 0.0
    %785 = vmatprep.subr.mxu0 0.0
    %786 = vmatpush1.msra.mxu0 0.0
    %787 = vmatprep.subr.mxu0 0.0
    %788 = vmatpush1.msra.mxu0 0.0
    %789 = vmatprep.subr.mxu0 0.0
    %790 = vmatpush1.msra.mxu0 0.0
    %791 = vmatprep.subr.mxu0 0.0
    %792 = vmatpush1.msra.mxu0 0.0
    %793 = vmatprep.subr.mxu0 0.0
    %794 = vmatpush1.msra.mxu0 0.0
    %795 = vmatprep.subr.mxu0 0.0
    %796 = vmatpush1.msra.mxu0 0.0
    %797 = vmatprep.mubr.f32.mxu0 0.0
    %798 = vmatmul.mubr.f32.gmra.mrb[0].mxu0 %v731
    %v799 = vpop.f32.mrb[0].mxu0
    %v800 = vadd.f32 0.0, %v799
    %v801 = vpop.f32.mrb[0].mxu0
    %802 = vdwg.mxu0
    %v804 = vrot.slane %v800, 6
    %v806 = vadd.f32 %v730, %v804
    %v807 = vxor.u32 %v806, 2147483648
    %v808 = vmul.f32 %v807, 1.442695
    %v809 = vpow.pop %v808
    %v810 = vadd.f32 %v809, 1.0
    %v811 = vrcp.pop %v810
    %v812 = vmul.f32 1.0, %v811
    %v813 = vtanh.pop %v806
    %v815 = vrot.slane %v718, 6
    %v817 = vmul.f32 %v812, %v815
    %819 = vrot.lane.b32.xlu0 %v813, 64
    %v820 = vpop.permute.xlu0 %819
    %v822 = vmul.f32 %v812, %v820
    %824 = vrot.lane.b32.xlu0 %v822, 32
    %v825 = vpop.permute.xlu0 %824
    %v827 = vadd.f32 %v817, %v825
    %v828 = vtanh.pop %v827
    %830 = vrot.lane.b32.xlu0 %v828, 64
    %v831 = vpop.permute.xlu0 %830
    %v833 = vmul.f32 %v812, %v831
    %835 = vrot.lane.b32.xlu0 %v833, 32
    %v836 = vpop.permute.xlu0 %835
    %838 = vst.msk [vmem:[#allocation3 + $0x8] sm:$0xc] %vm393, %v836
    %v839 = vld [vmem:[#allocation2 + $0x10] sm:$0x30]
    %v840 = vrot.slane %v833, 2
    %841 = vrot.lane.b32.xlu0 %v840, 32
    %v842 = vpop.permute.xlu0 %841
    %v843 = vsel %vm180, %v842, 0
    %845 = vmatprep.subr.mxu0 0.0
    %846 = vmatpush1.msra.mxu0 %v33
    %847 = vmatprep.subr.mxu0 0.0
    %848 = vmatpush1.msra.mxu0 %v35
    %849 = vmatprep.subr.mxu0 0.0
    %850 = vmatpush1.msra.mxu0 %v37
    %851 = vmatprep.subr.mxu0 0.0
    %852 = vmatpush1.msra.mxu0 %v39
    %853 = vmatprep.subr.mxu0 0.0
    %854 = vmatpush1.msra.mxu0 0.0
    %855 = vmatprep.subr.mxu0 0.0
    %856 = vmatpush1.msra.mxu0 0.0
    %857 = vmatprep.subr.mxu0 0.0
    %858 = vmatpush1.msra.mxu0 0.0
    %859 = vmatprep.subr.mxu0 0.0
    %860 = vmatpush1.msra.mxu0 0.0
    %861 = vmatprep.subr.mxu0 0.0
    %862 = vmatpush1.msra.mxu0 0.0
    %863 = vmatprep.subr.mxu0 0.0
    %864 = vmatpush1.msra.mxu0 0.0
    %865 = vmatprep.subr.mxu0 0.0
    %866 = vmatpush1.msra.mxu0 0.0
    %867 = vmatprep.subr.mxu0 0.0
    %868 = vmatpush1.msra.mxu0 0.0
    %869 = vmatprep.subr.mxu0 0.0
    %870 = vmatpush1.msra.mxu0 0.0
    %871 = vmatprep.subr.mxu0 0.0
    %872 = vmatpush1.msra.mxu0 0.0
    %873 = vmatprep.subr.mxu0 0.0
    %874 = vmatpush1.msra.mxu0 0.0
    %875 = vmatprep.subr.mxu0 0.0
    %876 = vmatpush1.msra.mxu0 0.0
    %877 = vmatprep.subr.mxu0 0.0
    %878 = vmatpush1.msra.mxu0 0.0
    %879 = vmatprep.subr.mxu0 0.0
    %880 = vmatpush1.msra.mxu0 0.0
    %881 = vmatprep.subr.mxu0 0.0
    %882 = vmatpush1.msra.mxu0 0.0
    %883 = vmatprep.subr.mxu0 0.0
    %884 = vmatpush1.msra.mxu0 0.0
    %885 = vmatprep.subr.mxu0 0.0
    %886 = vmatpush1.msra.mxu0 0.0
    %887 = vmatprep.subr.mxu0 0.0
    %888 = vmatpush1.msra.mxu0 0.0
    %889 = vmatprep.subr.mxu0 0.0
    %890 = vmatpush1.msra.mxu0 0.0
    %891 = vmatprep.subr.mxu0 0.0
    %892 = vmatpush1.msra.mxu0 0.0
    %893 = vmatprep.subr.mxu0 0.0
    %894 = vmatpush1.msra.mxu0 0.0
    %895 = vmatprep.subr.mxu0 0.0
    %896 = vmatpush1.msra.mxu0 0.0
    %897 = vmatprep.subr.mxu0 0.0
    %898 = vmatpush1.msra.mxu0 0.0
    %899 = vmatprep.subr.mxu0 0.0
    %900 = vmatpush1.msra.mxu0 0.0
    %901 = vmatprep.subr.mxu0 0.0
    %902 = vmatpush1.msra.mxu0 0.0
    %903 = vmatprep.subr.mxu0 0.0
    %904 = vmatpush1.msra.mxu0 0.0
    %905 = vmatprep.subr.mxu0 0.0
    %906 = vmatpush1.msra.mxu0 0.0
    %907 = vmatprep.subr.mxu0 0.0
    %908 = vmatpush1.msra.mxu0 0.0
    %909 = vmatprep.mubr.f32.mxu0 0.0
    %910 = vmatmul.mubr.f32.gmra.mrb[0].mxu0 %v843
    %v911 = vpop.f32.mrb[0].mxu0
    %v912 = vadd.f32 0.0, %v911
    %v913 = vpop.f32.mrb[0].mxu0
    %914 = vdwg.mxu0
    %v916 = vrot.slane %v912, 4
    %v918 = vadd.f32 %v839, %v916
    %v919 = vxor.u32 %v918, 2147483648
    %v920 = vmul.f32 %v919, 1.442695
    %v921 = vpow.pop %v920
    %v922 = vadd.f32 %v921, 1.0
    %v923 = vrcp.pop %v922
    %v924 = vmul.f32 1.0, %v923
    %v925 = vtanh.pop %v918
    %v927 = vrot.slane %v827, 6
    %v929 = vmul.f32 %v924, %v927
    %931 = vrot.lane.b32.xlu0 %v925, 64
    %v932 = vpop.permute.xlu0 %931
    %v934 = vmul.f32 %v924, %v932
    %936 = vrot.lane.b32.xlu0 %v934, 32
    %v937 = vpop.permute.xlu0 %936
    %v939 = vadd.f32 %v929, %v937
    %v940 = vtanh.pop %v939
    %942 = vrot.lane.b32.xlu0 %v940, 64
    %v943 = vpop.permute.xlu0 %942
    %v945 = vmul.f32 %v924, %v943
    %947 = vrot.lane.b32.xlu0 %v945, 32
    %v948 = vpop.permute.xlu0 %947
    %950 = vst.msk [vmem:[#allocation3 + $0x8] sm:$0x30] %vm506, %v948
    %v951 = vld [vmem:[#allocation2 + $0x10] sm:$0xc0]
    %v952 = vrot.slane %v945, 4
    %953 = vrot.lane.b32.xlu0 %v952, 32
    %v954 = vpop.permute.xlu0 %953
    %v955 = vsel %vm180, %v954, 0
    %957 = vmatprep.subr.mxu0 0.0
    %958 = vmatpush1.msra.mxu0 %v33
    %959 = vmatprep.subr.mxu0 0.0
    %960 = vmatpush1.msra.mxu0 %v35
    %961 = vmatprep.subr.mxu0 0.0
    %962 = vmatpush1.msra.mxu0 %v37
    %963 = vmatprep.subr.mxu0 0.0
    %964 = vmatpush1.msra.mxu0 %v39
    %965 = vmatprep.subr.mxu0 0.0
    %966 = vmatpush1.msra.mxu0 0.0
    %967 = vmatprep.subr.mxu0 0.0
    %968 = vmatpush1.msra.mxu0 0.0
    %969 = vmatprep.subr.mxu0 0.0
    %970 = vmatpush1.msra.mxu0 0.0
    %971 = vmatprep.subr.mxu0 0.0
    %972 = vmatpush1.msra.mxu0 0.0
    %973 = vmatprep.subr.mxu0 0.0
    %974 = vmatpush1.msra.mxu0 0.0
    %975 = vmatprep.subr.mxu0 0.0
    %976 = vmatpush1.msra.mxu0 0.0
    %977 = vmatprep.subr.mxu0 0.0
    %978 = vmatpush1.msra.mxu0 0.0
    %979 = vmatprep.subr.mxu0 0.0
    %980 = vmatpush1.msra.mxu0 0.0
    %981 = vmatprep.subr.mxu0 0.0
    %982 = vmatpush1.msra.mxu0 0.0
    %983 = vmatprep.subr.mxu0 0.0
    %984 = vmatpush1.msra.mxu0 0.0
    %985 = vmatprep.subr.mxu0 0.0
    %986 = vmatpush1.msra.mxu0 0.0
    %987 = vmatprep.subr.mxu0 0.0
    %988 = vmatpush1.msra.mxu0 0.0
    %989 = vmatprep.subr.mxu0 0.0
    %990 = vmatpush1.msra.mxu0 0.0
    %991 = vmatprep.subr.mxu0 0.0
    %992 = vmatpush1.msra.mxu0 0.0
    %993 = vmatprep.subr.mxu0 0.0
    %994 = vmatpush1.msra.mxu0 0.0
    %995 = vmatprep.subr.mxu0 0.0
    %996 = vmatpush1.msra.mxu0 0.0
    %997 = vmatprep.subr.mxu0 0.0
    %998 = vmatpush1.msra.mxu0 0.0
    %999 = vmatprep.subr.mxu0 0.0
    %1000 = vmatpush1.msra.mxu0 0.0
    %1001 = vmatprep.subr.mxu0 0.0
    %1002 = vmatpush1.msra.mxu0 0.0
    %1003 = vmatprep.subr.mxu0 0.0
    %1004 = vmatpush1.msra.mxu0 0.0
    %1005 = vmatprep.subr.mxu0 0.0
    %1006 = vmatpush1.msra.mxu0 0.0
    %1007 = vmatprep.subr.mxu0 0.0
    %1008 = vmatpush1.msra.mxu0 0.0
    %1009 = vmatprep.subr.mxu0 0.0
    %1010 = vmatpush1.msra.mxu0 0.0
    %1011 = vmatprep.subr.mxu0 0.0
    %1012 = vmatpush1.msra.mxu0 0.0
    %1013 = vmatprep.subr.mxu0 0.0
    %1014 = vmatpush1.msra.mxu0 0.0
    %1015 = vmatprep.subr.mxu0 0.0
    %1016 = vmatpush1.msra.mxu0 0.0
    %1017 = vmatprep.subr.mxu0 0.0
    %1018 = vmatpush1.msra.mxu0 0.0
    %1019 = vmatprep.subr.mxu0 0.0
    %1020 = vmatpush1.msra.mxu0 0.0
    %1021 = vmatprep.mubr.f32.mxu0 0.0
    %1022 = vmatmul.mubr.f32.gmra.mrb[0].mxu0 %v955
    %v1023 = vpop.f32.mrb[0].mxu0
    %v1024 = vadd.f32 0.0, %v1023
    %v1025 = vpop.f32.mrb[0].mxu0
    %1026 = vdwg.mxu0
    %v1028 = vrot.slane %v1024, 2
    %v1030 = vadd.f32 %v951, %v1028
    %v1031 = vxor.u32 %v1030, 2147483648
    %v1032 = vmul.f32 %v1031, 1.442695
    %v1033 = vpow.pop %v1032
    %v1034 = vadd.f32 %v1033, 1.0
    %v1035 = vrcp.pop %v1034
    %v1036 = vmul.f32 1.0, %v1035
    %v1037 = vtanh.pop %v1030
    %v1039 = vrot.slane %v939, 6
    %v1041 = vmul.f32 %v1036, %v1039
    %1043 = vrot.lane.b32.xlu0 %v1037, 64
    %v1044 = vpop.permute.xlu0 %1043
    %v1046 = vmul.f32 %v1036, %v1044
    %1048 = vrot.lane.b32.xlu0 %v1046, 32
    %v1049 = vpop.permute.xlu0 %1048
    %v1051 = vadd.f32 %v1041, %v1049
    %v1052 = vtanh.pop %v1051
    %1054 = vrot.lane.b32.xlu0 %v1052, 64
    %v1055 = vpop.permute.xlu0 %1054
    %v1057 = vmul.f32 %v1036, %v1055
    %1059 = vrot.lane.b32.xlu0 %v1057, 32
    %v1060 = vpop.permute.xlu0 %1059
    %1062 = vst.msk [vmem:[#allocation3 + $0x8] sm:$0xc0] %vm619, %v1060
    %v1063 = vld [vmem:[#allocation2 + $0x18] sm:$0xc0]
    %1064 = vmatprep.subr.mxu0 0.0
    %1065 = vmatpush1.msra.mxu0 %v34
    %1066 = vmatprep.subr.mxu0 0.0
    %1067 = vmatpush1.msra.mxu0 %v36
    %1068 = vmatprep.subr.mxu0 0.0
    %1069 = vmatpush1.msra.mxu0 %v38
    %1070 = vmatprep.subr.mxu0 0.0
    %1071 = vmatpush1.msra.mxu0 %v40
    %1072 = vmatprep.subr.mxu0 0.0
    %1073 = vmatpush1.msra.mxu0 0.0
    %1074 = vmatprep.subr.mxu0 0.0
    %1075 = vmatpush1.msra.mxu0 0.0
    %1076 = vmatprep.subr.mxu0 0.0
    %1077 = vmatpush1.msra.mxu0 0.0
    %1078 = vmatprep.subr.mxu0 0.0
    %1079 = vmatpush1.msra.mxu0 0.0
    %1080 = vmatprep.subr.mxu0 0.0
    %1081 = vmatpush1.msra.mxu0 0.0
    %1082 = vmatprep.subr.mxu0 0.0
    %1083 = vmatpush1.msra.mxu0 0.0
    %1084 = vmatprep.subr.mxu0 0.0
    %1085 = vmatpush1.msra.mxu0 0.0
    %1086 = vmatprep.subr.mxu0 0.0
    %1087 = vmatpush1.msra.mxu0 0.0
    %1088 = vmatprep.subr.mxu0 0.0
    %1089 = vmatpush1.msra.mxu0 0.0
    %1090 = vmatprep.subr.mxu0 0.0
    %1091 = vmatpush1.msra.mxu0 0.0
    %1092 = vmatprep.subr.mxu0 0.0
    %1093 = vmatpush1.msra.mxu0 0.0
    %1094 = vmatprep.subr.mxu0 0.0
    %1095 = vmatpush1.msra.mxu0 0.0
    %1096 = vmatprep.subr.mxu0 0.0
    %1097 = vmatpush1.msra.mxu0 0.0
    %1098 = vmatprep.subr.mxu0 0.0
    %1099 = vmatpush1.msra.mxu0 0.0
    %1100 = vmatprep.subr.mxu0 0.0
    %1101 = vmatpush1.msra.mxu0 0.0
    %1102 = vmatprep.subr.mxu0 0.0
    %1103 = vmatpush1.msra.mxu0 0.0
    %1104 = vmatprep.subr.mxu0 0.0
    %1105 = vmatpush1.msra.mxu0 0.0
    %1106 = vmatprep.subr.mxu0 0.0
    %1107 = vmatpush1.msra.mxu0 0.0
    %1108 = vmatprep.subr.mxu0 0.0
    %1109 = vmatpush1.msra.mxu0 0.0
    %1110 = vmatprep.subr.mxu0 0.0
    %1111 = vmatpush1.msra.mxu0 0.0
    %1112 = vmatprep.subr.mxu0 0.0
    %1113 = vmatpush1.msra.mxu0 0.0
    %1114 = vmatprep.subr.mxu0 0.0
    %1115 = vmatpush1.msra.mxu0 0.0
    %1116 = vmatprep.subr.mxu0 0.0
    %1117 = vmatpush1.msra.mxu0 0.0
    %1118 = vmatprep.subr.mxu0 0.0
    %1119 = vmatpush1.msra.mxu0 0.0
    %1120 = vmatprep.subr.mxu0 0.0
    %1121 = vmatpush1.msra.mxu0 0.0
    %1122 = vmatprep.subr.mxu0 0.0
    %1123 = vmatpush1.msra.mxu0 0.0
    %1124 = vmatprep.subr.mxu0 0.0
    %1125 = vmatpush1.msra.mxu0 0.0
    %1126 = vmatprep.subr.mxu0 0.0
    %1127 = vmatpush1.msra.mxu0 0.0
    %1128 = vmatprep.mubr.f32.mxu0 0.0
    %1129 = vmatmul.mubr.f32.gmra.mrb[0].mxu0 %v182
    %v1130 = vpop.f32.mrb[0].mxu0
    %v1131 = vadd.f32 0.0, %v1130
    %v1132 = vpop.f32.mrb[0].mxu0
    %1133 = vdwg.mxu0
    %v1135 = vrot.slane %v1131, 2
    %v1137 = vadd.f32 %v1063, %v1135
    %v1138 = vxor.u32 %v1137, 2147483648
    %v1139 = vmul.f32 %v1138, 1.442695
    %v1140 = vpow.pop %v1139
    %v1141 = vadd.f32 %v1140, 1.0
    %v1142 = vrcp.pop %v1141
    %v1143 = vmul.f32 1.0, %v1142
    %v1144 = vtanh.pop %v1137
    %v1145 = vmul.f32 %v1143, 0.0
    %1147 = vrot.lane.b32.xlu0 %v1144, 64
    %v1148 = vpop.permute.xlu0 %1147
    %v1150 = vmul.f32 %v1143, %v1148
    %1152 = vrot.lane.b32.xlu0 %v1150, 32
    %v1153 = vpop.permute.xlu0 %1152
    %v1155 = vadd.f32 %v1145, %v1153
    %v1156 = vtanh.pop %v1155
    %1158 = vrot.lane.b32.xlu0 %v1156, 64
    %v1159 = vpop.permute.xlu0 %1158
    %v1161 = vmul.f32 %v1143, %v1159
    %1163 = vrot.lane.b32.xlu0 %v1161, 32
    %v1164 = vpop.permute.xlu0 %1163
    %1166 = vst.msk [vmem:[#allocation4 + $0x8] sm:$0xc0] %vm619, %v1164
    %v1167 = vld [vmem:[#allocation2 + $0x18] sm:$0x30]
    %v1168 = vrot.slane %v1161, 6
    %1169 = vrot.lane.b32.xlu0 %v1168, 32
    %v1170 = vpop.permute.xlu0 %1169
    %v1171 = vsel %vm180, %v1170, 0
    %1173 = vmatprep.subr.mxu0 0.0
    %1174 = vmatpush1.msra.mxu0 %v34
    %1175 = vmatprep.subr.mxu0 0.0
    %1176 = vmatpush1.msra.mxu0 %v36
    %1177 = vmatprep.subr.mxu0 0.0
    %1178 = vmatpush1.msra.mxu0 %v38
    %1179 = vmatprep.subr.mxu0 0.0
    %1180 = vmatpush1.msra.mxu0 %v40
    %1181 = vmatprep.subr.mxu0 0.0
    %1182 = vmatpush1.msra.mxu0 0.0
    %1183 = vmatprep.subr.mxu0 0.0
    %1184 = vmatpush1.msra.mxu0 0.0
    %1185 = vmatprep.subr.mxu0 0.0
    %1186 = vmatpush1.msra.mxu0 0.0
    %1187 = vmatprep.subr.mxu0 0.0
    %1188 = vmatpush1.msra.mxu0 0.0
    %1189 = vmatprep.subr.mxu0 0.0
    %1190 = vmatpush1.msra.mxu0 0.0
    %1191 = vmatprep.subr.mxu0 0.0
    %1192 = vmatpush1.msra.mxu0 0.0
    %1193 = vmatprep.subr.mxu0 0.0
    %1194 = vmatpush1.msra.mxu0 0.0
    %1195 = vmatprep.subr.mxu0 0.0
    %1196 = vmatpush1.msra.mxu0 0.0
    %1197 = vmatprep.subr.mxu0 0.0
    %1198 = vmatpush1.msra.mxu0 0.0
    %1199 = vmatprep.subr.mxu0 0.0
    %1200 = vmatpush1.msra.mxu0 0.0
    %1201 = vmatprep.subr.mxu0 0.0
    %1202 = vmatpush1.msra.mxu0 0.0
    %1203 = vmatprep.subr.mxu0 0.0
    %1204 = vmatpush1.msra.mxu0 0.0
    %1205 = vmatprep.subr.mxu0 0.0
    %1206 = vmatpush1.msra.mxu0 0.0
    %1207 = vmatprep.subr.mxu0 0.0
    %1208 = vmatpush1.msra.mxu0 0.0
    %1209 = vmatprep.subr.mxu0 0.0
    %1210 = vmatpush1.msra.mxu0 0.0
    %1211 = vmatprep.subr.mxu0 0.0
    %1212 = vmatpush1.msra.mxu0 0.0
    %1213 = vmatprep.subr.mxu0 0.0
    %1214 = vmatpush1.msra.mxu0 0.0
    %1215 = vmatprep.subr.mxu0 0.0
    %1216 = vmatpush1.msra.mxu0 0.0
    %1217 = vmatprep.subr.mxu0 0.0
    %1218 = vmatpush1.msra.mxu0 0.0
    %1219 = vmatprep.subr.mxu0 0.0
    %1220 = vmatpush1.msra.mxu0 0.0
    %1221 = vmatprep.subr.mxu0 0.0
    %1222 = vmatpush1.msra.mxu0 0.0
    %1223 = vmatprep.subr.mxu0 0.0
    %1224 = vmatpush1.msra.mxu0 0.0
    %1225 = vmatprep.subr.mxu0 0.0
    %1226 = vmatpush1.msra.mxu0 0.0
    %1227 = vmatprep.subr.mxu0 0.0
    %1228 = vmatpush1.msra.mxu0 0.0
    %1229 = vmatprep.subr.mxu0 0.0
    %1230 = vmatpush1.msra.mxu0 0.0
    %1231 = vmatprep.subr.mxu0 0.0
    %1232 = vmatpush1.msra.mxu0 0.0
    %1233 = vmatprep.subr.mxu0 0.0
    %1234 = vmatpush1.msra.mxu0 0.0
    %1235 = vmatprep.subr.mxu0 0.0
    %1236 = vmatpush1.msra.mxu0 0.0
    %1237 = vmatprep.mubr.f32.mxu0 0.0
    %1238 = vmatmul.mubr.f32.gmra.mrb[0].mxu0 %v1171
    %v1239 = vpop.f32.mrb[0].mxu0
    %v1240 = vadd.f32 0.0, %v1239
    %v1241 = vpop.f32.mrb[0].mxu0
    %1242 = vdwg.mxu0
    %v1244 = vrot.slane %v1240, 4
    %v1246 = vadd.f32 %v1167, %v1244
    %v1247 = vxor.u32 %v1246, 2147483648
    %v1248 = vmul.f32 %v1247, 1.442695
    %v1249 = vpow.pop %v1248
    %v1250 = vadd.f32 %v1249, 1.0
    %v1251 = vrcp.pop %v1250
    %v1252 = vmul.f32 1.0, %v1251
    %v1253 = vtanh.pop %v1246
    %v1255 = vrot.slane %v1155, 2
    %v1257 = vmul.f32 %v1252, %v1255
    %1259 = vrot.lane.b32.xlu0 %v1253, 64
    %v1260 = vpop.permute.xlu0 %1259
    %v1262 = vmul.f32 %v1252, %v1260
    %1264 = vrot.lane.b32.xlu0 %v1262, 32
    %v1265 = vpop.permute.xlu0 %1264
    %v1267 = vadd.f32 %v1257, %v1265
    %v1268 = vtanh.pop %v1267
    %1270 = vrot.lane.b32.xlu0 %v1268, 64
    %v1271 = vpop.permute.xlu0 %1270
    %v1273 = vmul.f32 %v1252, %v1271
    %1275 = vrot.lane.b32.xlu0 %v1273, 32
    %v1276 = vpop.permute.xlu0 %1275
    %1278 = vst.msk [vmem:[#allocation4 + $0x8] sm:$0x30] %vm506, %v1276
    %v1279 = vld [vmem:[#allocation2 + $0x18] sm:$0xc]
    %v1280 = vrot.slane %v1273, 4
    %1281 = vrot.lane.b32.xlu0 %v1280, 32
    %v1282 = vpop.permute.xlu0 %1281
    %v1283 = vsel %vm180, %v1282, 0
    %1285 = vmatprep.subr.mxu0 0.0
    %1286 = vmatpush1.msra.mxu0 %v34
    %1287 = vmatprep.subr.mxu0 0.0
    %1288 = vmatpush1.msra.mxu0 %v36
    %1289 = vmatprep.subr.mxu0 0.0
    %1290 = vmatpush1.msra.mxu0 %v38
    %1291 = vmatprep.subr.mxu0 0.0
    %1292 = vmatpush1.msra.mxu0 %v40
    %1293 = vmatprep.subr.mxu0 0.0
    %1294 = vmatpush1.msra.mxu0 0.0
    %1295 = vmatprep.subr.mxu0 0.0
    %1296 = vmatpush1.msra.mxu0 0.0
    %1297 = vmatprep.subr.mxu0 0.0
    %1298 = vmatpush1.msra.mxu0 0.0
    %1299 = vmatprep.subr.mxu0 0.0
    %1300 = vmatpush1.msra.mxu0 0.0
    %1301 = vmatprep.subr.mxu0 0.0
    %1302 = vmatpush1.msra.mxu0 0.0
    %1303 = vmatprep.subr.mxu0 0.0
    %1304 = vmatpush1.msra.mxu0 0.0
    %1305 = vmatprep.subr.mxu0 0.0
    %1306 = vmatpush1.msra.mxu0 0.0
    %1307 = vmatprep.subr.mxu0 0.0
    %1308 = vmatpush1.msra.mxu0 0.0
    %1309 = vmatprep.subr.mxu0 0.0
    %1310 = vmatpush1.msra.mxu0 0.0
    %1311 = vmatprep.subr.mxu0 0.0
    %1312 = vmatpush1.msra.mxu0 0.0
    %1313 = vmatprep.subr.mxu0 0.0
    %1314 = vmatpush1.msra.mxu0 0.0
    %1315 = vmatprep.subr.mxu0 0.0
    %1316 = vmatpush1.msra.mxu0 0.0
    %1317 = vmatprep.subr.mxu0 0.0
    %1318 = vmatpush1.msra.mxu0 0.0
    %1319 = vmatprep.subr.mxu0 0.0
    %1320 = vmatpush1.msra.mxu0 0.0
    %1321 = vmatprep.subr.mxu0 0.0
    %1322 = vmatpush1.msra.mxu0 0.0
    %1323 = vmatprep.subr.mxu0 0.0
    %1324 = vmatpush1.msra.mxu0 0.0
    %1325 = vmatprep.subr.mxu0 0.0
    %1326 = vmatpush1.msra.mxu0 0.0
    %1327 = vmatprep.subr.mxu0 0.0
    %1328 = vmatpush1.msra.mxu0 0.0
    %1329 = vmatprep.subr.mxu0 0.0
    %1330 = vmatpush1.msra.mxu0 0.0
    %1331 = vmatprep.subr.mxu0 0.0
    %1332 = vmatpush1.msra.mxu0 0.0
    %1333 = vmatprep.subr.mxu0 0.0
    %1334 = vmatpush1.msra.mxu0 0.0
    %1335 = vmatprep.subr.mxu0 0.0
    %1336 = vmatpush1.msra.mxu0 0.0
    %1337 = vmatprep.subr.mxu0 0.0
    %1338 = vmatpush1.msra.mxu0 0.0
    %1339 = vmatprep.subr.mxu0 0.0
    %1340 = vmatpush1.msra.mxu0 0.0
    %1341 = vmatprep.subr.mxu0 0.0
    %1342 = vmatpush1.msra.mxu0 0.0
    %1343 = vmatprep.subr.mxu0 0.0
    %1344 = vmatpush1.msra.mxu0 0.0
    %1345 = vmatprep.subr.mxu0 0.0
    %1346 = vmatpush1.msra.mxu0 0.0
    %1347 = vmatprep.subr.mxu0 0.0
    %1348 = vmatpush1.msra.mxu0 0.0
    %1349 = vmatprep.mubr.f32.mxu0 0.0
    %1350 = vmatmul.mubr.f32.gmra.mrb[0].mxu0 %v1283
    %v1351 = vpop.f32.mrb[0].mxu0
    %v1352 = vadd.f32 0.0, %v1351
    %v1353 = vpop.f32.mrb[0].mxu0
    %1354 = vdwg.mxu0
    %v1356 = vrot.slane %v1352, 6
    %v1358 = vadd.f32 %v1279, %v1356
    %v1359 = vxor.u32 %v1358, 2147483648
    %v1360 = vmul.f32 %v1359, 1.442695
    %v1361 = vpow.pop %v1360
    %v1362 = vadd.f32 %v1361, 1.0
    %v1363 = vrcp.pop %v1362
    %v1364 = vmul.f32 1.0, %v1363
    %v1365 = vtanh.pop %v1358
    %v1367 = vrot.slane %v1267, 2
    %v1369 = vmul.f32 %v1364, %v1367
    %1371 = vrot.lane.b32.xlu0 %v1365, 64
    %v1372 = vpop.permute.xlu0 %1371
    %v1374 = vmul.f32 %v1364, %v1372
    %1376 = vrot.lane.b32.xlu0 %v1374, 32
    %v1377 = vpop.permute.xlu0 %1376
    %v1379 = vadd.f32 %v1369, %v1377
    %v1380 = vtanh.pop %v1379
    %1382 = vrot.lane.b32.xlu0 %v1380, 64
    %v1383 = vpop.permute.xlu0 %1382
    %v1385 = vmul.f32 %v1364, %v1383
    %1387 = vrot.lane.b32.xlu0 %v1385, 32
    %v1388 = vpop.permute.xlu0 %1387
    %1390 = vst.msk [vmem:[#allocation4 + $0x8] sm:$0xc] %vm393, %v1388
    %v1391 = vld [vmem:[#allocation2 + $0x18] sm:$0x3]
    %v1392 = vrot.slane %v1385, 2
    %1393 = vrot.lane.b32.xlu0 %v1392, 32
    %v1394 = vpop.permute.xlu0 %1393
    %v1395 = vsel %vm180, %v1394, 0
    %1397 = vmatprep.subr.mxu0 0.0
    %1398 = vmatpush1.msra.mxu0 %v34
    %1399 = vmatprep.subr.mxu0 0.0
    %1400 = vmatpush1.msra.mxu0 %v36
    %1401 = vmatprep.subr.mxu0 0.0
    %1402 = vmatpush1.msra.mxu0 %v38
    %1403 = vmatprep.subr.mxu0 0.0
    %1404 = vmatpush1.msra.mxu0 %v40
    %1405 = vmatprep.subr.mxu0 0.0
    %1406 = vmatpush1.msra.mxu0 0.0
    %1407 = vmatprep.subr.mxu0 0.0
    %1408 = vmatpush1.msra.mxu0 0.0
    %1409 = vmatprep.subr.mxu0 0.0
    %1410 = vmatpush1.msra.mxu0 0.0
    %1411 = vmatprep.subr.mxu0 0.0
    %1412 = vmatpush1.msra.mxu0 0.0
    %1413 = vmatprep.subr.mxu0 0.0
    %1414 = vmatpush1.msra.mxu0 0.0
    %1415 = vmatprep.subr.mxu0 0.0
    %1416 = vmatpush1.msra.mxu0 0.0
    %1417 = vmatprep.subr.mxu0 0.0
    %1418 = vmatpush1.msra.mxu0 0.0
    %1419 = vmatprep.subr.mxu0 0.0
    %1420 = vmatpush1.msra.mxu0 0.0
    %1421 = vmatprep.subr.mxu0 0.0
    %1422 = vmatpush1.msra.mxu0 0.0
    %1423 = vmatprep.subr.mxu0 0.0
    %1424 = vmatpush1.msra.mxu0 0.0
    %1425 = vmatprep.subr.mxu0 0.0
    %1426 = vmatpush1.msra.mxu0 0.0
    %1427 = vmatprep.subr.mxu0 0.0
    %1428 = vmatpush1.msra.mxu0 0.0
    %1429 = vmatprep.subr.mxu0 0.0
    %1430 = vmatpush1.msra.mxu0 0.0
    %1431 = vmatprep.subr.mxu0 0.0
    %1432 = vmatpush1.msra.mxu0 0.0
    %1433 = vmatprep.subr.mxu0 0.0
    %1434 = vmatpush1.msra.mxu0 0.0
    %1435 = vmatprep.subr.mxu0 0.0
    %1436 = vmatpush1.msra.mxu0 0.0
    %1437 = vmatprep.subr.mxu0 0.0
    %1438 = vmatpush1.msra.mxu0 0.0
    %1439 = vmatprep.subr.mxu0 0.0
    %1440 = vmatpush1.msra.mxu0 0.0
    %1441 = vmatprep.subr.mxu0 0.0
    %1442 = vmatpush1.msra.mxu0 0.0
    %1443 = vmatprep.subr.mxu0 0.0
    %1444 = vmatpush1.msra.mxu0 0.0
    %1445 = vmatprep.subr.mxu0 0.0
    %1446 = vmatpush1.msra.mxu0 0.0
    %1447 = vmatprep.subr.mxu0 0.0
    %1448 = vmatpush1.msra.mxu0 0.0
    %1449 = vmatprep.subr.mxu0 0.0
    %1450 = vmatpush1.msra.mxu0 0.0
    %1451 = vmatprep.subr.mxu0 0.0
    %1452 = vmatpush1.msra.mxu0 0.0
    %1453 = vmatprep.subr.mxu0 0.0
    %1454 = vmatpush1.msra.mxu0 0.0
    %1455 = vmatprep.subr.mxu0 0.0
    %1456 = vmatpush1.msra.mxu0 0.0
    %1457 = vmatprep.subr.mxu0 0.0
    %1458 = vmatpush1.msra.mxu0 0.0
    %1459 = vmatprep.subr.mxu0 0.0
    %1460 = vmatpush1.msra.mxu0 0.0
    %1461 = vmatprep.mubr.f32.mxu0 0.0
    %1462 = vmatmul.mubr.f32.gmra.mrb[0].mxu0 %v1395
    %v1463 = vpop.f32.mrb[0].mxu0
    %v1464 = vadd.f32 0.0, %v1463
    %v1465 = vpop.f32.mrb[0].mxu0
    %1466 = vdwg.mxu0
    %v1467 = vadd.f32 %v1391, %v1464
    %v1468 = vxor.u32 %v1467, 2147483648
    %v1469 = vmul.f32 %v1468, 1.442695
    %v1470 = vpow.pop %v1469
    %v1471 = vadd.f32 %v1470, 1.0
    %v1472 = vrcp.pop %v1471
    %v1473 = vmul.f32 1.0, %v1472
    %v1474 = vtanh.pop %v1467
    %v1476 = vrot.slane %v1379, 2
    %v1478 = vmul.f32 %v1473, %v1476
    %1480 = vrot.lane.b32.xlu0 %v1474, 64
    %v1481 = vpop.permute.xlu0 %1480
    %v1483 = vmul.f32 %v1473, %v1481
    %1485 = vrot.lane.b32.xlu0 %v1483, 32
    %v1486 = vpop.permute.xlu0 %1485
    %v1488 = vadd.f32 %v1478, %v1486
    %v1489 = vtanh.pop %v1488
    %1491 = vrot.lane.b32.xlu0 %v1489, 64
    %v1492 = vpop.permute.xlu0 %1491
    %v1494 = vmul.f32 %v1473, %v1492
    %1496 = vrot.lane.b32.xlu0 %v1494, 32
    %v1497 = vpop.permute.xlu0 %1496
    %1499 = vst.msk [vmem:[#allocation4 + $0x8] sm:$0x3] %vm283, %v1497
    %v1500 = vld [vmem:[#allocation2 + $0x8] sm:$0xc0]
    %v1501 = vsel %vm180, %v1497, 0
    %1503 = vmatprep.subr.mxu0 0.0
    %1504 = vmatpush1.msra.mxu0 %v34
    %1505 = vmatprep.subr.mxu0 0.0
    %1506 = vmatpush1.msra.mxu0 %v36
    %1507 = vmatprep.subr.mxu0 0.0
    %1508 = vmatpush1.msra.mxu0 %v38
    %1509 = vmatprep.subr.mxu0 0.0
    %1510 = vmatpush1.msra.mxu0 %v40
    %1511 = vmatprep.subr.mxu0 0.0
    %1512 = vmatpush1.msra.mxu0 0.0
    %1513 = vmatprep.subr.mxu0 0.0
    %1514 = vmatpush1.msra.mxu0 0.0
    %1515 = vmatprep.subr.mxu0 0.0
    %1516 = vmatpush1.msra.mxu0 0.0
    %1517 = vmatprep.subr.mxu0 0.0
    %1518 = vmatpush1.msra.mxu0 0.0
    %1519 = vmatprep.subr.mxu0 0.0
    %1520 = vmatpush1.msra.mxu0 0.0
    %1521 = vmatprep.subr.mxu0 0.0
    %1522 = vmatpush1.msra.mxu0 0.0
    %1523 = vmatprep.subr.mxu0 0.0
    %1524 = vmatpush1.msra.mxu0 0.0
    %1525 = vmatprep.subr.mxu0 0.0
    %1526 = vmatpush1.msra.mxu0 0.0
    %1527 = vmatprep.subr.mxu0 0.0
    %1528 = vmatpush1.msra.mxu0 0.0
    %1529 = vmatprep.subr.mxu0 0.0
    %1530 = vmatpush1.msra.mxu0 0.0
    %1531 = vmatprep.subr.mxu0 0.0
    %1532 = vmatpush1.msra.mxu0 0.0
    %1533 = vmatprep.subr.mxu0 0.0
    %1534 = vmatpush1.msra.mxu0 0.0
    %1535 = vmatprep.subr.mxu0 0.0
    %1536 = vmatpush1.msra.mxu0 0.0
    %1537 = vmatprep.subr.mxu0 0.0
    %1538 = vmatpush1.msra.mxu0 0.0
    %1539 = vmatprep.subr.mxu0 0.0
    %1540 = vmatpush1.msra.mxu0 0.0
    %1541 = vmatprep.subr.mxu0 0.0
    %1542 = vmatpush1.msra.mxu0 0.0
    %1543 = vmatprep.subr.mxu0 0.0
    %1544 = vmatpush1.msra.mxu0 0.0
    %1545 = vmatprep.subr.mxu0 0.0
    %1546 = vmatpush1.msra.mxu0 0.0
    %1547 = vmatprep.subr.mxu0 0.0
    %1548 = vmatpush1.msra.mxu0 0.0
    %1549 = vmatprep.subr.mxu0 0.0
    %1550 = vmatpush1.msra.mxu0 0.0
    %1551 = vmatprep.subr.mxu0 0.0
    %1552 = vmatpush1.msra.mxu0 0.0
    %1553 = vmatprep.subr.mxu0 0.0
    %1554 = vmatpush1.msra.mxu0 0.0
    %1555 = vmatprep.subr.mxu0 0.0
    %1556 = vmatpush1.msra.mxu0 0.0
    %1557 = vmatprep.subr.mxu0 0.0
    %1558 = vmatpush1.msra.mxu0 0.0
    %1559 = vmatprep.subr.mxu0 0.0
    %1560 = vmatpush1.msra.mxu0 0.0
    %1561 = vmatprep.subr.mxu0 0.0
    %1562 = vmatpush1.msra.mxu0 0.0
    %1563 = vmatprep.subr.mxu0 0.0
    %1564 = vmatpush1.msra.mxu0 0.0
    %1565 = vmatprep.subr.mxu0 0.0
    %1566 = vmatpush1.msra.mxu0 0.0
    %1567 = vmatprep.mubr.f32.mxu0 0.0
    %1568 = vmatmul.mubr.f32.gmra.mrb[0].mxu0 %v1501
    %v1569 = vpop.f32.mrb[0].mxu0
    %v1570 = vadd.f32 0.0, %v1569
    %v1571 = vpop.f32.mrb[0].mxu0
    %1572 = vdwg.mxu0
    %v1574 = vrot.slane %v1570, 2
    %v1576 = vadd.f32 %v1500, %v1574
    %v1577 = vxor.u32 %v1576, 2147483648
    %v1578 = vmul.f32 %v1577, 1.442695
    %v1579 = vpow.pop %v1578
    %v1580 = vadd.f32 %v1579, 1.0
    %v1581 = vrcp.pop %v1580
    %v1582 = vmul.f32 1.0, %v1581
    %v1583 = vtanh.pop %v1576
    %v1585 = vrot.slane %v1488, 2
    %v1587 = vmul.f32 %v1582, %v1585
    %1589 = vrot.lane.b32.xlu0 %v1583, 64
    %v1590 = vpop.permute.xlu0 %1589
    %v1592 = vmul.f32 %v1582, %v1590
    %1594 = vrot.lane.b32.xlu0 %v1592, 32
    %v1595 = vpop.permute.xlu0 %1594
    %v1597 = vadd.f32 %v1587, %v1595
    %v1598 = vtanh.pop %v1597
    %1600 = vrot.lane.b32.xlu0 %v1598, 64
    %v1601 = vpop.permute.xlu0 %1600
    %v1603 = vmul.f32 %v1582, %v1601
    %1605 = vrot.lane.b32.xlu0 %v1603, 32
    %v1606 = vpop.permute.xlu0 %1605
    %1608 = vst.msk [vmem:[#allocation4] sm:$0xc0] %vm619, %v1606
    %v1609 = vld [vmem:[#allocation2 + $0x8] sm:$0x30]
    %v1610 = vrot.slane %v1603, 6
    %1611 = vrot.lane.b32.xlu0 %v1610, 32
    %v1612 = vpop.permute.xlu0 %1611
    %v1613 = vsel %vm180, %v1612, 0
    %1615 = vmatprep.subr.mxu0 0.0
    %1616 = vmatpush1.msra.mxu0 %v34
    %1617 = vmatprep.subr.mxu0 0.0
    %1618 = vmatpush1.msra.mxu0 %v36
    %1619 = vmatprep.subr.mxu0 0.0
    %1620 = vmatpush1.msra.mxu0 %v38
    %1621 = vmatprep.subr.mxu0 0.0
    %1622 = vmatpush1.msra.mxu0 %v40
    %1623 = vmatprep.subr.mxu0 0.0
    %1624 = vmatpush1.msra.mxu0 0.0
    %1625 = vmatprep.subr.mxu0 0.0
    %1626 = vmatpush1.msra.mxu0 0.0
    %1627 = vmatprep.subr.mxu0 0.0
    %1628 = vmatpush1.msra.mxu0 0.0
    %1629 = vmatprep.subr.mxu0 0.0
    %1630 = vmatpush1.msra.mxu0 0.0
    %1631 = vmatprep.subr.mxu0 0.0
    %1632 = vmatpush1.msra.mxu0 0.0
    %1633 = vmatprep.subr.mxu0 0.0
    %1634 = vmatpush1.msra.mxu0 0.0
    %1635 = vmatprep.subr.mxu0 0.0
    %1636 = vmatpush1.msra.mxu0 0.0
    %1637 = vmatprep.subr.mxu0 0.0
    %1638 = vmatpush1.msra.mxu0 0.0
    %1639 = vmatprep.subr.mxu0 0.0
    %1640 = vmatpush1.msra.mxu0 0.0
    %1641 = vmatprep.subr.mxu0 0.0
    %1642 = vmatpush1.msra.mxu0 0.0
    %1643 = vmatprep.subr.mxu0 0.0
    %1644 = vmatpush1.msra.mxu0 0.0
    %1645 = vmatprep.subr.mxu0 0.0
    %1646 = vmatpush1.msra.mxu0 0.0
    %1647 = vmatprep.subr.mxu0 0.0
    %1648 = vmatpush1.msra.mxu0 0.0
    %1649 = vmatprep.subr.mxu0 0.0
    %1650 = vmatpush1.msra.mxu0 0.0
    %1651 = vmatprep.subr.mxu0 0.0
    %1652 = vmatpush1.msra.mxu0 0.0
    %1653 = vmatprep.subr.mxu0 0.0
    %1654 = vmatpush1.msra.mxu0 0.0
    %1655 = vmatprep.subr.mxu0 0.0
    %1656 = vmatpush1.msra.mxu0 0.0
    %1657 = vmatprep.subr.mxu0 0.0
    %1658 = vmatpush1.msra.mxu0 0.0
    %1659 = vmatprep.subr.mxu0 0.0
    %1660 = vmatpush1.msra.mxu0 0.0
    %1661 = vmatprep.subr.mxu0 0.0
    %1662 = vmatpush1.msra.mxu0 0.0
    %1663 = vmatprep.subr.mxu0 0.0
    %1664 = vmatpush1.msra.mxu0 0.0
    %1665 = vmatprep.subr.mxu0 0.0
    %1666 = vmatpush1.msra.mxu0 0.0
    %1667 = vmatprep.subr.mxu0 0.0
    %1668 = vmatpush1.msra.mxu0 0.0
    %1669 = vmatprep.subr.mxu0 0.0
    %1670 = vmatpush1.msra.mxu0 0.0
    %1671 = vmatprep.subr.mxu0 0.0
    %1672 = vmatpush1.msra.mxu0 0.0
    %1673 = vmatprep.subr.mxu0 0.0
    %1674 = vmatpush1.msra.mxu0 0.0
    %1675 = vmatprep.subr.mxu0 0.0
    %1676 = vmatpush1.msra.mxu0 0.0
    %1677 = vmatprep.subr.mxu0 0.0
    %1678 = vmatpush1.msra.mxu0 0.0
    %1679 = vmatprep.mubr.f32.mxu0 0.0
    %1680 = vmatmul.mubr.f32.gmra.mrb[0].mxu0 %v1613
    %v1681 = vpop.f32.mrb[0].mxu0
    %v1682 = vadd.f32 0.0, %v1681
    %v1683 = vpop.f32.mrb[0].mxu0
    %1684 = vdwg.mxu0
    %v1686 = vrot.slane %v1682, 4
    %v1688 = vadd.f32 %v1609, %v1686
    %v1689 = vxor.u32 %v1688, 2147483648
    %v1690 = vmul.f32 %v1689, 1.442695
    %v1691 = vpow.pop %v1690
    %v1692 = vadd.f32 %v1691, 1.0
    %v1693 = vrcp.pop %v1692
    %v1694 = vmul.f32 1.0, %v1693
    %v1695 = vtanh.pop %v1688
    %v1697 = vrot.slane %v1597, 2
    %v1699 = vmul.f32 %v1694, %v1697
    %1701 = vrot.lane.b32.xlu0 %v1695, 64
    %v1702 = vpop.permute.xlu0 %1701
    %v1704 = vmul.f32 %v1694, %v1702
    %1706 = vrot.lane.b32.xlu0 %v1704, 32
    %v1707 = vpop.permute.xlu0 %1706
    %v1709 = vadd.f32 %v1699, %v1707
    %v1710 = vtanh.pop %v1709
    %1712 = vrot.lane.b32.xlu0 %v1710, 64
    %v1713 = vpop.permute.xlu0 %1712
    %v1715 = vmul.f32 %v1694, %v1713
    %1717 = vrot.lane.b32.xlu0 %v1715, 32
    %v1718 = vpop.permute.xlu0 %1717
    %1720 = vst.msk [vmem:[#allocation4] sm:$0x30] %vm506, %v1718
    %v1721 = vld [vmem:[#allocation2 + $0x8] sm:$0xc]
    %v1722 = vrot.slane %v1715, 4
    %1723 = vrot.lane.b32.xlu0 %v1722, 32
    %v1724 = vpop.permute.xlu0 %1723
    %v1725 = vsel %vm180, %v1724, 0
    %1727 = vmatprep.subr.mxu0 0.0
    %1728 = vmatpush1.msra.mxu0 %v34
    %1729 = vmatprep.subr.mxu0 0.0
    %1730 = vmatpush1.msra.mxu0 %v36
    %1731 = vmatprep.subr.mxu0 0.0
    %1732 = vmatpush1.msra.mxu0 %v38
    %1733 = vmatprep.subr.mxu0 0.0
    %1734 = vmatpush1.msra.mxu0 %v40
    %1735 = vmatprep.subr.mxu0 0.0
    %1736 = vmatpush1.msra.mxu0 0.0
    %1737 = vmatprep.subr.mxu0 0.0
    %1738 = vmatpush1.msra.mxu0 0.0
    %1739 = vmatprep.subr.mxu0 0.0
    %1740 = vmatpush1.msra.mxu0 0.0
    %1741 = vmatprep.subr.mxu0 0.0
    %1742 = vmatpush1.msra.mxu0 0.0
    %1743 = vmatprep.subr.mxu0 0.0
    %1744 = vmatpush1.msra.mxu0 0.0
    %1745 = vmatprep.subr.mxu0 0.0
    %1746 = vmatpush1.msra.mxu0 0.0
    %1747 = vmatprep.subr.mxu0 0.0
    %1748 = vmatpush1.msra.mxu0 0.0
    %1749 = vmatprep.subr.mxu0 0.0
    %1750 = vmatpush1.msra.mxu0 0.0
    %1751 = vmatprep.subr.mxu0 0.0
    %1752 = vmatpush1.msra.mxu0 0.0
    %1753 = vmatprep.subr.mxu0 0.0
    %1754 = vmatpush1.msra.mxu0 0.0
    %1755 = vmatprep.subr.mxu0 0.0
    %1756 = vmatpush1.msra.mxu0 0.0
    %1757 = vmatprep.subr.mxu0 0.0
    %1758 = vmatpush1.msra.mxu0 0.0
    %1759 = vmatprep.subr.mxu0 0.0
    %1760 = vmatpush1.msra.mxu0 0.0
    %1761 = vmatprep.subr.mxu0 0.0
    %1762 = vmatpush1.msra.mxu0 0.0
    %1763 = vmatprep.subr.mxu0 0.0
    %1764 = vmatpush1.msra.mxu0 0.0
    %1765 = vmatprep.subr.mxu0 0.0
    %1766 = vmatpush1.msra.mxu0 0.0
    %1767 = vmatprep.subr.mxu0 0.0
    %1768 = vmatpush1.msra.mxu0 0.0
    %1769 = vmatprep.subr.mxu0 0.0
    %1770 = vmatpush1.msra.mxu0 0.0
    %1771 = vmatprep.subr.mxu0 0.0
    %1772 = vmatpush1.msra.mxu0 0.0
    %1773 = vmatprep.subr.mxu0 0.0
    %1774 = vmatpush1.msra.mxu0 0.0
    %1775 = vmatprep.subr.mxu0 0.0
    %1776 = vmatpush1.msra.mxu0 0.0
    %1777 = vmatprep.subr.mxu0 0.0
    %1778 = vmatpush1.msra.mxu0 0.0
    %1779 = vmatprep.subr.mxu0 0.0
    %1780 = vmatpush1.msra.mxu0 0.0
    %1781 = vmatprep.subr.mxu0 0.0
    %1782 = vmatpush1.msra.mxu0 0.0
    %1783 = vmatprep.subr.mxu0 0.0
    %1784 = vmatpush1.msra.mxu0 0.0
    %1785 = vmatprep.subr.mxu0 0.0
    %1786 = vmatpush1.msra.mxu0 0.0
    %1787 = vmatprep.subr.mxu0 0.0
    %1788 = vmatpush1.msra.mxu0 0.0
    %1789 = vmatprep.subr.mxu0 0.0
    %1790 = vmatpush1.msra.mxu0 0.0
    %1791 = vmatprep.mubr.f32.mxu0 0.0
    %1792 = vmatmul.mubr.f32.gmra.mrb[0].mxu0 %v1725
    %v1793 = vpop.f32.mrb[0].mxu0
    %v1794 = vadd.f32 0.0, %v1793
    %v1795 = vpop.f32.mrb[0].mxu0
    %1796 = vdwg.mxu0
    %v1798 = vrot.slane %v1794, 6
    %v1800 = vadd.f32 %v1721, %v1798
    %v1801 = vxor.u32 %v1800, 2147483648
    %v1802 = vmul.f32 %v1801, 1.442695
    %v1803 = vpow.pop %v1802
    %v1804 = vadd.f32 %v1803, 1.0
    %v1805 = vrcp.pop %v1804
    %v1806 = vmul.f32 1.0, %v1805
    %v1807 = vtanh.pop %v1800
    %v1809 = vrot.slane %v1709, 2
    %v1811 = vmul.f32 %v1806, %v1809
    %1813 = vrot.lane.b32.xlu0 %v1807, 64
    %v1814 = vpop.permute.xlu0 %1813
    %v1816 = vmul.f32 %v1806, %v1814
    %1818 = vrot.lane.b32.xlu0 %v1816, 32
    %v1819 = vpop.permute.xlu0 %1818
    %v1821 = vadd.f32 %v1811, %v1819
    %v1822 = vtanh.pop %v1821
    %1824 = vrot.lane.b32.xlu0 %v1822, 64
    %v1825 = vpop.permute.xlu0 %1824
    %v1827 = vmul.f32 %v1806, %v1825
    %1829 = vrot.lane.b32.xlu0 %v1827, 32
    %v1830 = vpop.permute.xlu0 %1829
    %1832 = vst.msk [vmem:[#allocation4] sm:$0xc] %vm393, %v1830
    %v1833 = vld [vmem:[#allocation2 + $0x8] sm:$0x3]
    %v1834 = vrot.slane %v1827, 2
    %1835 = vrot.lane.b32.xlu0 %v1834, 32
    %v1836 = vpop.permute.xlu0 %1835
    %v1837 = vsel %vm180, %v1836, 0
    %1839 = vmatprep.subr.mxu0 0.0
    %1840 = vmatpush1.msra.mxu0 %v34
    %1841 = vmatprep.subr.mxu0 0.0
    %1842 = vmatpush1.msra.mxu0 %v36
    %1843 = vmatprep.subr.mxu0 0.0
    %1844 = vmatpush1.msra.mxu0 %v38
    %1845 = vmatprep.subr.mxu0 0.0
    %1846 = vmatpush1.msra.mxu0 %v40
    %1847 = vmatprep.subr.mxu0 0.0
    %1848 = vmatpush1.msra.mxu0 0.0
    %1849 = vmatprep.subr.mxu0 0.0
    %1850 = vmatpush1.msra.mxu0 0.0
    %1851 = vmatprep.subr.mxu0 0.0
    %1852 = vmatpush1.msra.mxu0 0.0
    %1853 = vmatprep.subr.mxu0 0.0
    %1854 = vmatpush1.msra.mxu0 0.0
    %1855 = vmatprep.subr.mxu0 0.0
    %1856 = vmatpush1.msra.mxu0 0.0
    %1857 = vmatprep.subr.mxu0 0.0
    %1858 = vmatpush1.msra.mxu0 0.0
    %1859 = vmatprep.subr.mxu0 0.0
    %1860 = vmatpush1.msra.mxu0 0.0
    %1861 = vmatprep.subr.mxu0 0.0
    %1862 = vmatpush1.msra.mxu0 0.0
    %1863 = vmatprep.subr.mxu0 0.0
    %1864 = vmatpush1.msra.mxu0 0.0
    %1865 = vmatprep.subr.mxu0 0.0
    %1866 = vmatpush1.msra.mxu0 0.0
    %1867 = vmatprep.subr.mxu0 0.0
    %1868 = vmatpush1.msra.mxu0 0.0
    %1869 = vmatprep.subr.mxu0 0.0
    %1870 = vmatpush1.msra.mxu0 0.0
    %1871 = vmatprep.subr.mxu0 0.0
    %1872 = vmatpush1.msra.mxu0 0.0
    %1873 = vmatprep.subr.mxu0 0.0
    %1874 = vmatpush1.msra.mxu0 0.0
    %1875 = vmatprep.subr.mxu0 0.0
    %1876 = vmatpush1.msra.mxu0 0.0
    %1877 = vmatprep.subr.mxu0 0.0
    %1878 = vmatpush1.msra.mxu0 0.0
    %1879 = vmatprep.subr.mxu0 0.0
    %1880 = vmatpush1.msra.mxu0 0.0
    %1881 = vmatprep.subr.mxu0 0.0
    %1882 = vmatpush1.msra.mxu0 0.0
    %1883 = vmatprep.subr.mxu0 0.0
    %1884 = vmatpush1.msra.mxu0 0.0
    %1885 = vmatprep.subr.mxu0 0.0
    %1886 = vmatpush1.msra.mxu0 0.0
    %1887 = vmatprep.subr.mxu0 0.0
    %1888 = vmatpush1.msra.mxu0 0.0
    %1889 = vmatprep.subr.mxu0 0.0
    %1890 = vmatpush1.msra.mxu0 0.0
    %1891 = vmatprep.subr.mxu0 0.0
    %1892 = vmatpush1.msra.mxu0 0.0
    %1893 = vmatprep.subr.mxu0 0.0
    %1894 = vmatpush1.msra.mxu0 0.0
    %1895 = vmatprep.subr.mxu0 0.0
    %1896 = vmatpush1.msra.mxu0 0.0
    %1897 = vmatprep.subr.mxu0 0.0
    %1898 = vmatpush1.msra.mxu0 0.0
    %1899 = vmatprep.subr.mxu0 0.0
    %1900 = vmatpush1.msra.mxu0 0.0
    %1901 = vmatprep.subr.mxu0 0.0
    %1902 = vmatpush1.msra.mxu0 0.0
    %1903 = vmatprep.mubr.f32.mxu0 0.0
    %1904 = vmatmul.mubr.f32.gmra.mrb[0].mxu0 %v1837
    %v1905 = vpop.f32.mrb[0].mxu0
    %v1906 = vadd.f32 0.0, %v1905
    %v1907 = vpop.f32.mrb[0].mxu0
    %1908 = vdwg.mxu0
    %v1909 = vadd.f32 %v1833, %v1906
    %v1910 = vxor.u32 %v1909, 2147483648
    %v1911 = vmul.f32 %v1910, 1.442695
    %v1912 = vpow.pop %v1911
    %v1913 = vadd.f32 %v1912, 1.0
    %v1914 = vrcp.pop %v1913
    %v1915 = vmul.f32 1.0, %v1914
    %v1916 = vtanh.pop %v1909
    %v1918 = vrot.slane %v1821, 2
    %v1920 = vmul.f32 %v1915, %v1918
    %1922 = vrot.lane.b32.xlu0 %v1916, 64
    %v1923 = vpop.permute.xlu0 %1922
    %v1925 = vmul.f32 %v1915, %v1923
    %1927 = vrot.lane.b32.xlu0 %v1925, 32
    %v1928 = vpop.permute.xlu0 %1927
    %v1930 = vadd.f32 %v1920, %v1928
    %v1931 = vtanh.pop %v1930
    %1933 = vrot.lane.b32.xlu0 %v1931, 64
    %v1934 = vpop.permute.xlu0 %1933
    %v1936 = vmul.f32 %v1915, %v1934
    %1938 = vrot.lane.b32.xlu0 %v1936, 32
    %v1939 = vpop.permute.xlu0 %1938
    %1941 = vst.msk [vmem:[#allocation4] sm:$0x3] %vm283, %v1939
    %v1942 = vld [vmem:[#allocation3] sm:$0xff]
    %v1943 = vld [vmem:[#allocation3 + $0x8] sm:$0xff]
    %v1944 = vld [vmem:[#allocation4] sm:$0xff]
    %v1945 = vld [vmem:[#allocation4 + $0x8] sm:$0xff]
    %v1947 = vsel %vm180, %v1944, 0
    %v1950 = vsel %vm180, %v1945, 0
    %1952 = vmatprep.subr.mxu0 %v58
    %1953 = vmatpush1.msra.mxu0 %v57
    %1954 = vmatprep.subr.mxu0 %v60
    %1955 = vmatpush1.msra.mxu0 %v59
    %1956 = vmatprep.subr.mxu0 %v62
    %1957 = vmatpush1.msra.mxu0 %v61
    %1958 = vmatprep.subr.mxu0 %v64
    %1959 = vmatpush1.msra.mxu0 %v63
    %1960 = vmatprep.subr.mxu0 0.0
    %1961 = vmatpush1.msra.mxu0 0.0
    %1962 = vmatprep.subr.mxu0 0.0
    %1963 = vmatpush1.msra.mxu0 0.0
    %1964 = vmatprep.subr.mxu0 0.0
    %1965 = vmatpush1.msra.mxu0 0.0
    %1966 = vmatprep.subr.mxu0 0.0
    %1967 = vmatpush1.msra.mxu0 0.0
    %1968 = vmatprep.subr.mxu0 0.0
    %1969 = vmatpush1.msra.mxu0 0.0
    %1970 = vmatprep.subr.mxu0 0.0
    %1971 = vmatpush1.msra.mxu0 0.0
    %1972 = vmatprep.subr.mxu0 0.0
    %1973 = vmatpush1.msra.mxu0 0.0
    %1974 = vmatprep.subr.mxu0 0.0
    %1975 = vmatpush1.msra.mxu0 0.0
    %1976 = vmatprep.subr.mxu0 0.0
    %1977 = vmatpush1.msra.mxu0 0.0
    %1978 = vmatprep.subr.mxu0 0.0
    %1979 = vmatpush1.msra.mxu0 0.0
    %1980 = vmatprep.subr.mxu0 0.0
    %1981 = vmatpush1.msra.mxu0 0.0
    %1982 = vmatprep.subr.mxu0 0.0
    %1983 = vmatpush1.msra.mxu0 0.0
    %1984 = vmatprep.subr.mxu0 0.0
    %1985 = vmatpush1.msra.mxu0 0.0
    %1986 = vmatprep.subr.mxu0 0.0
    %1987 = vmatpush1.msra.mxu0 0.0
    %1988 = vmatprep.subr.mxu0 0.0
    %1989 = vmatpush1.msra.mxu0 0.0
    %1990 = vmatprep.subr.mxu0 0.0
    %1991 = vmatpush1.msra.mxu0 0.0
    %1992 = vmatprep.subr.mxu0 0.0
    %1993 = vmatpush1.msra.mxu0 0.0
    %1994 = vmatprep.subr.mxu0 0.0
    %1995 = vmatpush1.msra.mxu0 0.0
    %1996 = vmatprep.subr.mxu0 0.0
    %1997 = vmatpush1.msra.mxu0 0.0
    %1998 = vmatprep.subr.mxu0 0.0
    %1999 = vmatpush1.msra.mxu0 0.0
    %2000 = vmatprep.subr.mxu0 0.0
    %2001 = vmatpush1.msra.mxu0 0.0
    %2002 = vmatprep.subr.mxu0 0.0
    %2003 = vmatpush1.msra.mxu0 0.0
    %2004 = vmatprep.subr.mxu0 0.0
    %2005 = vmatpush1.msra.mxu0 0.0
    %2006 = vmatprep.subr.mxu0 0.0
    %2007 = vmatpush1.msra.mxu0 0.0
    %2008 = vmatprep.subr.mxu0 0.0
    %2009 = vmatpush1.msra.mxu0 0.0
    %2010 = vmatprep.subr.mxu0 0.0
    %2011 = vmatpush1.msra.mxu0 0.0
    %2012 = vmatprep.subr.mxu0 0.0
    %2013 = vmatpush1.msra.mxu0 0.0
    %2014 = vmatprep.subr.mxu0 0.0
    %2015 = vmatpush1.msra.mxu0 0.0
    %2016 = vmatprep.mubr.f32.mxu0 0.0
    %2017 = vmatmul.mubr.f32.gmra.mrb[0].mxu0 %v1947
    %v2018 = vpop.f32.mrb[0].mxu0
    %v2019 = vadd.f32 0.0, %v2018
    %v2020 = vpop.f32.mrb[0].mxu0
    %v2021 = vadd.f32 0.0, %v2020
    %2022 = vmatprep.mubr.f32.mxu0 0.0
    %2023 = vmatmul.mubr.f32.gmra.mrb[0].mxu0 %v1950
    %v2024 = vpop.f32.mrb[0].mxu0
    %v2025 = vadd.f32 0.0, %v2024
    %v2026 = vpop.f32.mrb[0].mxu0
    %v2027 = vadd.f32 0.0, %v2026
    %2028 = vdwg.mxu0
    %v2030 = vsel %vm180, %v1942, 0
    %v2033 = vsel %vm180, %v1943, 0
    %2035 = vmatprep.subr.mxu0 %v50
    %2036 = vmatpush1.msra.mxu0 %v49
    %2037 = vmatprep.subr.mxu0 %v52
    %2038 = vmatpush1.msra.mxu0 %v51
    %2039 = vmatprep.subr.mxu0 %v54
    %2040 = vmatpush1.msra.mxu0 %v53
    %2041 = vmatprep.subr.mxu0 %v56
    %2042 = vmatpush1.msra.mxu0 %v55
    %2043 = vmatprep.subr.mxu0 0.0
    %2044 = vmatpush1.msra.mxu0 0.0
    %2045 = vmatprep.subr.mxu0 0.0
    %2046 = vmatpush1.msra.mxu0 0.0
    %2047 = vmatprep.subr.mxu0 0.0
    %2048 = vmatpush1.msra.mxu0 0.0
    %2049 = vmatprep.subr.mxu0 0.0
    %2050 = vmatpush1.msra.mxu0 0.0
    %2051 = vmatprep.subr.mxu0 0.0
    %2052 = vmatpush1.msra.mxu0 0.0
    %2053 = vmatprep.subr.mxu0 0.0
    %2054 = vmatpush1.msra.mxu0 0.0
    %2055 = vmatprep.subr.mxu0 0.0
    %2056 = vmatpush1.msra.mxu0 0.0
    %2057 = vmatprep.subr.mxu0 0.0
    %2058 = vmatpush1.msra.mxu0 0.0
    %2059 = vmatprep.subr.mxu0 0.0
    %2060 = vmatpush1.msra.mxu0 0.0
    %2061 = vmatprep.subr.mxu0 0.0
    %2062 = vmatpush1.msra.mxu0 0.0
    %2063 = vmatprep.subr.mxu0 0.0
    %2064 = vmatpush1.msra.mxu0 0.0
    %2065 = vmatprep.subr.mxu0 0.0
    %2066 = vmatpush1.msra.mxu0 0.0
    %2067 = vmatprep.subr.mxu0 0.0
    %2068 = vmatpush1.msra.mxu0 0.0
    %2069 = vmatprep.subr.mxu0 0.0
    %2070 = vmatpush1.msra.mxu0 0.0
    %2071 = vmatprep.subr.mxu0 0.0
    %2072 = vmatpush1.msra.mxu0 0.0
    %2073 = vmatprep.subr.mxu0 0.0
    %2074 = vmatpush1.msra.mxu0 0.0
    %2075 = vmatprep.subr.mxu0 0.0
    %2076 = vmatpush1.msra.mxu0 0.0
    %2077 = vmatprep.subr.mxu0 0.0
    %2078 = vmatpush1.msra.mxu0 0.0
    %2079 = vmatprep.subr.mxu0 0.0
    %2080 = vmatpush1.msra.mxu0 0.0
    %2081 = vmatprep.subr.mxu0 0.0
    %2082 = vmatpush1.msra.mxu0 0.0
    %2083 = vmatprep.subr.mxu0 0.0
    %2084 = vmatpush1.msra.mxu0 0.0
    %2085 = vmatprep.subr.mxu0 0.0
    %2086 = vmatpush1.msra.mxu0 0.0
    %2087 = vmatprep.subr.mxu0 0.0
    %2088 = vmatpush1.msra.mxu0 0.0
    %2089 = vmatprep.subr.mxu0 0.0
    %2090 = vmatpush1.msra.mxu0 0.0
    %2091 = vmatprep.subr.mxu0 0.0
    %2092 = vmatpush1.msra.mxu0 0.0
    %2093 = vmatprep.subr.mxu0 0.0
    %2094 = vmatpush1.msra.mxu0 0.0
    %2095 = vmatprep.subr.mxu0 0.0
    %2096 = vmatpush1.msra.mxu0 0.0
    %2097 = vmatprep.subr.mxu0 0.0
    %2098 = vmatpush1.msra.mxu0 0.0
    %2099 = vmatprep.mubr.f32.mxu0 0.0
    %2100 = vmatmul.mubr.f32.gmra.mrb[0].mxu0 %v2030
    %v2101 = vpop.f32.mrb[0].mxu0
    %v2102 = vadd.f32 %v2019, %v2101
    %v2103 = vpop.f32.mrb[0].mxu0
    %v2104 = vadd.f32 %v2021, %v2103
    %2105 = vmatprep.mubr.f32.mxu0 0.0
    %2106 = vmatmul.mubr.f32.gmra.mrb[0].mxu0 %v2033
    %v2107 = vpop.f32.mrb[0].mxu0
    %v2108 = vadd.f32 %v2025, %v2107
    %v2109 = vpop.f32.mrb[0].mxu0
    %v2110 = vadd.f32 %v2027, %v2109
    %2111 = vdwg.mxu0
    %v2112 = vld [vmem:[%s6] sm:$0x3]
    %v2114 = vlaneseq
    %v2115 = vshrl.u32 %v2114, 7
    %v2116 = vsub.s32 0, %v2115
    %v2117 = vrot.slane %v2112, %v2116
    %v2118 = vlaneseq
    %v2119 = vshrl.u32 %v2118, 7
    %v2120 = vsub.s32 1, %v2119
    %v2121 = vrot.slane %v2112, %v2120
    %v2124 = vadd.f32 %v2102, %v2117
    %v2125 = vadd.f32 %v2104, %v2121
    %v2126 = vadd.f32 %v2108, %v2117
    %v2127 = vadd.f32 %v2110, %v2121
    %2128 = vst [vmem:[#allocation2] sm:$0xff] %v2124
    %2129 = vst [vmem:[#allocation2 + $0x8] sm:$0xff] %v2125
    %2130 = vst [vmem:[#allocation2 + $0x10] sm:$0xff] %v2126
    %2131 = vst [vmem:[#allocation2 + $0x18] sm:$0xff] %v2127
    %v2132 = vld [vmem:[#allocation2] sm:$0x3]
    %2133 = vmatprep.subr.mxu0 0.0
    %2134 = vmatpush1.msra.mxu0 %v41
    %2135 = vmatprep.subr.mxu0 0.0
    %2136 = vmatpush1.msra.mxu0 %v43
    %2137 = vmatprep.subr.mxu0 0.0
    %2138 = vmatpush1.msra.mxu0 %v45
    %2139 = vmatprep.subr.mxu0 0.0
    %2140 = vmatpush1.msra.mxu0 %v47
    %2141 = vmatprep.subr.mxu0 0.0
    %2142 = vmatpush1.msra.mxu0 0.0
    %2143 = vmatprep.subr.mxu0 0.0
    %2144 = vmatpush1.msra.mxu0 0.0
    %2145 = vmatprep.subr.mxu0 0.0
    %2146 = vmatpush1.msra.mxu0 0.0
    %2147 = vmatprep.subr.mxu0 0.0
    %2148 = vmatpush1.msra.mxu0 0.0
    %2149 = vmatprep.subr.mxu0 0.0
    %2150 = vmatpush1.msra.mxu0 0.0
    %2151 = vmatprep.subr.mxu0 0.0
    %2152 = vmatpush1.msra.mxu0 0.0
    %2153 = vmatprep.subr.mxu0 0.0
    %2154 = vmatpush1.msra.mxu0 0.0
    %2155 = vmatprep.subr.mxu0 0.0
    %2156 = vmatpush1.msra.mxu0 0.0
    %2157 = vmatprep.subr.mxu0 0.0
    %2158 = vmatpush1.msra.mxu0 0.0
    %2159 = vmatprep.subr.mxu0 0.0
    %2160 = vmatpush1.msra.mxu0 0.0
    %2161 = vmatprep.subr.mxu0 0.0
    %2162 = vmatpush1.msra.mxu0 0.0
    %2163 = vmatprep.subr.mxu0 0.0
    %2164 = vmatpush1.msra.mxu0 0.0
    %2165 = vmatprep.subr.mxu0 0.0
    %2166 = vmatpush1.msra.mxu0 0.0
    %2167 = vmatprep.subr.mxu0 0.0
    %2168 = vmatpush1.msra.mxu0 0.0
    %2169 = vmatprep.subr.mxu0 0.0
    %2170 = vmatpush1.msra.mxu0 0.0
    %2171 = vmatprep.subr.mxu0 0.0
    %2172 = vmatpush1.msra.mxu0 0.0
    %2173 = vmatprep.subr.mxu0 0.0
    %2174 = vmatpush1.msra.mxu0 0.0
    %2175 = vmatprep.subr.mxu0 0.0
    %2176 = vmatpush1.msra.mxu0 0.0
    %2177 = vmatprep.subr.mxu0 0.0
    %2178 = vmatpush1.msra.mxu0 0.0
    %2179 = vmatprep.subr.mxu0 0.0
    %2180 = vmatpush1.msra.mxu0 0.0
    %2181 = vmatprep.subr.mxu0 0.0
    %2182 = vmatpush1.msra.mxu0 0.0
    %2183 = vmatprep.subr.mxu0 0.0
    %2184 = vmatpush1.msra.mxu0 0.0
    %2185 = vmatprep.subr.mxu0 0.0
    %2186 = vmatpush1.msra.mxu0 0.0
    %2187 = vmatprep.subr.mxu0 0.0
    %2188 = vmatpush1.msra.mxu0 0.0
    %2189 = vmatprep.subr.mxu0 0.0
    %2190 = vmatpush1.msra.mxu0 0.0
    %2191 = vmatprep.subr.mxu0 0.0
    %2192 = vmatpush1.msra.mxu0 0.0
    %2193 = vmatprep.subr.mxu0 0.0
    %2194 = vmatpush1.msra.mxu0 0.0
    %2195 = vmatprep.subr.mxu0 0.0
    %2196 = vmatpush1.msra.mxu0 0.0
    %2197 = vmatprep.mubr.f32.mxu0 0.0
    %2198 = vmatmul.mubr.f32.gmra.mrb[0].mxu0 %v182
    %v2199 = vpop.f32.mrb[0].mxu0
    %v2200 = vadd.f32 0.0, %v2199
    %v2201 = vpop.f32.mrb[0].mxu0
    %2202 = vdwg.mxu0
    %v2203 = vadd.f32 %v2132, %v2200
    %v2204 = vxor.u32 %v2203, 2147483648
    %v2205 = vmul.f32 %v2204, 1.442695
    %v2206 = vpow.pop %v2205
    %v2207 = vadd.f32 %v2206, 1.0
    %v2208 = vrcp.pop %v2207
    %v2209 = vmul.f32 1.0, %v2208
    %v2210 = vtanh.pop %v2203
    %v2211 = vmul.f32 %v2209, 0.0
    %2213 = vrot.lane.b32.xlu0 %v2210, 64
    %v2214 = vpop.permute.xlu0 %2213
    %v2216 = vmul.f32 %v2209, %v2214
    %2218 = vrot.lane.b32.xlu0 %v2216, 32
    %v2219 = vpop.permute.xlu0 %2218
    %v2221 = vadd.f32 %v2211, %v2219
    %v2222 = vtanh.pop %v2221
    %2224 = vrot.lane.b32.xlu0 %v2222, 64
    %v2225 = vpop.permute.xlu0 %2224
    %v2227 = vmul.f32 %v2209, %v2225
    %v2228 = vld [vmem:[#allocation2] sm:$0xc]
    %2230 = vrot.lane.b32.xlu0 %v2227, 32
    %v2231 = vpop.permute.xlu0 %2230
    %v2232 = vsel %vm180, %v2231, 0
    %2234 = vmatprep.subr.mxu0 0.0
    %2235 = vmatpush1.msra.mxu0 %v41
    %2236 = vmatprep.subr.mxu0 0.0
    %2237 = vmatpush1.msra.mxu0 %v43
    %2238 = vmatprep.subr.mxu0 0.0
    %2239 = vmatpush1.msra.mxu0 %v45
    %2240 = vmatprep.subr.mxu0 0.0
    %2241 = vmatpush1.msra.mxu0 %v47
    %2242 = vmatprep.subr.mxu0 0.0
    %2243 = vmatpush1.msra.mxu0 0.0
    %2244 = vmatprep.subr.mxu0 0.0
    %2245 = vmatpush1.msra.mxu0 0.0
    %2246 = vmatprep.subr.mxu0 0.0
    %2247 = vmatpush1.msra.mxu0 0.0
    %2248 = vmatprep.subr.mxu0 0.0
    %2249 = vmatpush1.msra.mxu0 0.0
    %2250 = vmatprep.subr.mxu0 0.0
    %2251 = vmatpush1.msra.mxu0 0.0
    %2252 = vmatprep.subr.mxu0 0.0
    %2253 = vmatpush1.msra.mxu0 0.0
    %2254 = vmatprep.subr.mxu0 0.0
    %2255 = vmatpush1.msra.mxu0 0.0
    %2256 = vmatprep.subr.mxu0 0.0
    %2257 = vmatpush1.msra.mxu0 0.0
    %2258 = vmatprep.subr.mxu0 0.0
    %2259 = vmatpush1.msra.mxu0 0.0
    %2260 = vmatprep.subr.mxu0 0.0
    %2261 = vmatpush1.msra.mxu0 0.0
    %2262 = vmatprep.subr.mxu0 0.0
    %2263 = vmatpush1.msra.mxu0 0.0
    %2264 = vmatprep.subr.mxu0 0.0
    %2265 = vmatpush1.msra.mxu0 0.0
    %2266 = vmatprep.subr.mxu0 0.0
    %2267 = vmatpush1.msra.mxu0 0.0
    %2268 = vmatprep.subr.mxu0 0.0
    %2269 = vmatpush1.msra.mxu0 0.0
    %2270 = vmatprep.subr.mxu0 0.0
    %2271 = vmatpush1.msra.mxu0 0.0
    %2272 = vmatprep.subr.mxu0 0.0
    %2273 = vmatpush1.msra.mxu0 0.0
    %2274 = vmatprep.subr.mxu0 0.0
    %2275 = vmatpush1.msra.mxu0 0.0
    %2276 = vmatprep.subr.mxu0 0.0
    %2277 = vmatpush1.msra.mxu0 0.0
    %2278 = vmatprep.subr.mxu0 0.0
    %2279 = vmatpush1.msra.mxu0 0.0
    %2280 = vmatprep.subr.mxu0 0.0
    %2281 = vmatpush1.msra.mxu0 0.0
    %2282 = vmatprep.subr.mxu0 0.0
    %2283 = vmatpush1.msra.mxu0 0.0
    %2284 = vmatprep.subr.mxu0 0.0
    %2285 = vmatpush1.msra.mxu0 0.0
    %2286 = vmatprep.subr.mxu0 0.0
    %2287 = vmatpush1.msra.mxu0 0.0
    %2288 = vmatprep.subr.mxu0 0.0
    %2289 = vmatpush1.msra.mxu0 0.0
    %2290 = vmatprep.subr.mxu0 0.0
    %2291 = vmatpush1.msra.mxu0 0.0
    %2292 = vmatprep.subr.mxu0 0.0
    %2293 = vmatpush1.msra.mxu0 0.0
    %2294 = vmatprep.subr.mxu0 0.0
    %2295 = vmatpush1.msra.mxu0 0.0
    %2296 = vmatprep.subr.mxu0 0.0
    %2297 = vmatpush1.msra.mxu0 0.0
    %2298 = vmatprep.mubr.f32.mxu0 0.0
    %2299 = vmatmul.mubr.f32.gmra.mrb[0].mxu0 %v2232
    %v2300 = vpop.f32.mrb[0].mxu0
    %v2301 = vadd.f32 0.0, %v2300
    %v2302 = vpop.f32.mrb[0].mxu0
    %2303 = vdwg.mxu0
    %v2305 = vrot.slane %v2301, 6
    %v2307 = vadd.f32 %v2228, %v2305
    %v2308 = vxor.u32 %v2307, 2147483648
    %v2309 = vmul.f32 %v2308, 1.442695
    %v2310 = vpow.pop %v2309
    %v2311 = vadd.f32 %v2310, 1.0
    %v2312 = vrcp.pop %v2311
    %v2313 = vmul.f32 1.0, %v2312
    %v2314 = vtanh.pop %v2307
    %v2316 = vrot.slane %v2221, 6
    %v2318 = vmul.f32 %v2313, %v2316
    %2320 = vrot.lane.b32.xlu0 %v2314, 64
    %v2321 = vpop.permute.xlu0 %2320
    %v2323 = vmul.f32 %v2313, %v2321
    %2325 = vrot.lane.b32.xlu0 %v2323, 32
    %v2326 = vpop.permute.xlu0 %2325
    %v2328 = vadd.f32 %v2318, %v2326
    %v2329 = vtanh.pop %v2328
    %2331 = vrot.lane.b32.xlu0 %v2329, 64
    %v2332 = vpop.permute.xlu0 %2331
    %v2334 = vmul.f32 %v2313, %v2332
    %v2335 = vld [vmem:[#allocation2] sm:$0x30]
    %v2337 = vrot.slane %v2334, 2
    %2338 = vrot.lane.b32.xlu0 %v2337, 32
    %v2339 = vpop.permute.xlu0 %2338
    %v2340 = vsel %vm180, %v2339, 0
    %2342 = vmatprep.subr.mxu0 0.0
    %2343 = vmatpush1.msra.mxu0 %v41
    %2344 = vmatprep.subr.mxu0 0.0
    %2345 = vmatpush1.msra.mxu0 %v43
    %2346 = vmatprep.subr.mxu0 0.0
    %2347 = vmatpush1.msra.mxu0 %v45
    %2348 = vmatprep.subr.mxu0 0.0
    %2349 = vmatpush1.msra.mxu0 %v47
    %2350 = vmatprep.subr.mxu0 0.0
    %2351 = vmatpush1.msra.mxu0 0.0
    %2352 = vmatprep.subr.mxu0 0.0
    %2353 = vmatpush1.msra.mxu0 0.0
    %2354 = vmatprep.subr.mxu0 0.0
    %2355 = vmatpush1.msra.mxu0 0.0
    %2356 = vmatprep.subr.mxu0 0.0
    %2357 = vmatpush1.msra.mxu0 0.0
    %2358 = vmatprep.subr.mxu0 0.0
    %2359 = vmatpush1.msra.mxu0 0.0
    %2360 = vmatprep.subr.mxu0 0.0
    %2361 = vmatpush1.msra.mxu0 0.0
    %2362 = vmatprep.subr.mxu0 0.0
    %2363 = vmatpush1.msra.mxu0 0.0
    %2364 = vmatprep.subr.mxu0 0.0
    %2365 = vmatpush1.msra.mxu0 0.0
    %2366 = vmatprep.subr.mxu0 0.0
    %2367 = vmatpush1.msra.mxu0 0.0
    %2368 = vmatprep.subr.mxu0 0.0
    %2369 = vmatpush1.msra.mxu0 0.0
    %2370 = vmatprep.subr.mxu0 0.0
    %2371 = vmatpush1.msra.mxu0 0.0
    %2372 = vmatprep.subr.mxu0 0.0
    %2373 = vmatpush1.msra.mxu0 0.0
    %2374 = vmatprep.subr.mxu0 0.0
    %2375 = vmatpush1.msra.mxu0 0.0
    %2376 = vmatprep.subr.mxu0 0.0
    %2377 = vmatpush1.msra.mxu0 0.0
    %2378 = vmatprep.subr.mxu0 0.0
    %2379 = vmatpush1.msra.mxu0 0.0
    %2380 = vmatprep.subr.mxu0 0.0
    %2381 = vmatpush1.msra.mxu0 0.0
    %2382 = vmatprep.subr.mxu0 0.0
    %2383 = vmatpush1.msra.mxu0 0.0
    %2384 = vmatprep.subr.mxu0 0.0
    %2385 = vmatpush1.msra.mxu0 0.0
    %2386 = vmatprep.subr.mxu0 0.0
    %2387 = vmatpush1.msra.mxu0 0.0
    %2388 = vmatprep.subr.mxu0 0.0
    %2389 = vmatpush1.msra.mxu0 0.0
    %2390 = vmatprep.subr.mxu0 0.0
    %2391 = vmatpush1.msra.mxu0 0.0
    %2392 = vmatprep.subr.mxu0 0.0
    %2393 = vmatpush1.msra.mxu0 0.0
    %2394 = vmatprep.subr.mxu0 0.0
    %2395 = vmatpush1.msra.mxu0 0.0
    %2396 = vmatprep.subr.mxu0 0.0
    %2397 = vmatpush1.msra.mxu0 0.0
    %2398 = vmatprep.subr.mxu0 0.0
    %2399 = vmatpush1.msra.mxu0 0.0
    %2400 = vmatprep.subr.mxu0 0.0
    %2401 = vmatpush1.msra.mxu0 0.0
    %2402 = vmatprep.subr.mxu0 0.0
    %2403 = vmatpush1.msra.mxu0 0.0
    %2404 = vmatprep.subr.mxu0 0.0
    %2405 = vmatpush1.msra.mxu0 0.0
    %2406 = vmatprep.mubr.f32.mxu0 0.0
    %2407 = vmatmul.mubr.f32.gmra.mrb[0].mxu0 %v2340
    %v2408 = vpop.f32.mrb[0].mxu0
    %v2409 = vadd.f32 0.0, %v2408
    %v2410 = vpop.f32.mrb[0].mxu0
    %2411 = vdwg.mxu0
    %v2413 = vrot.slane %v2409, 4
    %v2415 = vadd.f32 %v2335, %v2413
    %v2416 = vxor.u32 %v2415, 2147483648
    %v2417 = vmul.f32 %v2416, 1.442695
    %v2418 = vpow.pop %v2417
    %v2419 = vadd.f32 %v2418, 1.0
    %v2420 = vrcp.pop %v2419
    %v2421 = vmul.f32 1.0, %v2420
    %v2422 = vtanh.pop %v2415
    %v2424 = vrot.slane %v2328, 6
    %v2426 = vmul.f32 %v2421, %v2424
    %2428 = vrot.lane.b32.xlu0 %v2422, 64
    %v2429 = vpop.permute.xlu0 %2428
    %v2431 = vmul.f32 %v2421, %v2429
    %2433 = vrot.lane.b32.xlu0 %v2431, 32
    %v2434 = vpop.permute.xlu0 %2433
    %v2436 = vadd.f32 %v2426, %v2434
    %v2437 = vtanh.pop %v2436
    %2439 = vrot.lane.b32.xlu0 %v2437, 64
    %v2440 = vpop.permute.xlu0 %2439
    %v2442 = vmul.f32 %v2421, %v2440
    %v2443 = vld [vmem:[#allocation2] sm:$0xc0]
    %v2445 = vrot.slane %v2442, 4
    %2446 = vrot.lane.b32.xlu0 %v2445, 32
    %v2447 = vpop.permute.xlu0 %2446
    %v2448 = vsel %vm180, %v2447, 0
    %2450 = vmatprep.subr.mxu0 0.0
    %2451 = vmatpush1.msra.mxu0 %v41
    %2452 = vmatprep.subr.mxu0 0.0
    %2453 = vmatpush1.msra.mxu0 %v43
    %2454 = vmatprep.subr.mxu0 0.0
    %2455 = vmatpush1.msra.mxu0 %v45
    %2456 = vmatprep.subr.mxu0 0.0
    %2457 = vmatpush1.msra.mxu0 %v47
    %2458 = vmatprep.subr.mxu0 0.0
    %2459 = vmatpush1.msra.mxu0 0.0
    %2460 = vmatprep.subr.mxu0 0.0
    %2461 = vmatpush1.msra.mxu0 0.0
    %2462 = vmatprep.subr.mxu0 0.0
    %2463 = vmatpush1.msra.mxu0 0.0
    %2464 = vmatprep.subr.mxu0 0.0
    %2465 = vmatpush1.msra.mxu0 0.0
    %2466 = vmatprep.subr.mxu0 0.0
    %2467 = vmatpush1.msra.mxu0 0.0
    %2468 = vmatprep.subr.mxu0 0.0
    %2469 = vmatpush1.msra.mxu0 0.0
    %2470 = vmatprep.subr.mxu0 0.0
    %2471 = vmatpush1.msra.mxu0 0.0
    %2472 = vmatprep.subr.mxu0 0.0
    %2473 = vmatpush1.msra.mxu0 0.0
    %2474 = vmatprep.subr.mxu0 0.0
    %2475 = vmatpush1.msra.mxu0 0.0
    %2476 = vmatprep.subr.mxu0 0.0
    %2477 = vmatpush1.msra.mxu0 0.0
    %2478 = vmatprep.subr.mxu0 0.0
    %2479 = vmatpush1.msra.mxu0 0.0
    %2480 = vmatprep.subr.mxu0 0.0
    %2481 = vmatpush1.msra.mxu0 0.0
    %2482 = vmatprep.subr.mxu0 0.0
    %2483 = vmatpush1.msra.mxu0 0.0
    %2484 = vmatprep.subr.mxu0 0.0
    %2485 = vmatpush1.msra.mxu0 0.0
    %2486 = vmatprep.subr.mxu0 0.0
    %2487 = vmatpush1.msra.mxu0 0.0
    %2488 = vmatprep.subr.mxu0 0.0
    %2489 = vmatpush1.msra.mxu0 0.0
    %2490 = vmatprep.subr.mxu0 0.0
    %2491 = vmatpush1.msra.mxu0 0.0
    %2492 = vmatprep.subr.mxu0 0.0
    %2493 = vmatpush1.msra.mxu0 0.0
    %2494 = vmatprep.subr.mxu0 0.0
    %2495 = vmatpush1.msra.mxu0 0.0
    %2496 = vmatprep.subr.mxu0 0.0
    %2497 = vmatpush1.msra.mxu0 0.0
    %2498 = vmatprep.subr.mxu0 0.0
    %2499 = vmatpush1.msra.mxu0 0.0
    %2500 = vmatprep.subr.mxu0 0.0
    %2501 = vmatpush1.msra.mxu0 0.0
    %2502 = vmatprep.subr.mxu0 0.0
    %2503 = vmatpush1.msra.mxu0 0.0
    %2504 = vmatprep.subr.mxu0 0.0
    %2505 = vmatpush1.msra.mxu0 0.0
    %2506 = vmatprep.subr.mxu0 0.0
    %2507 = vmatpush1.msra.mxu0 0.0
    %2508 = vmatprep.subr.mxu0 0.0
    %2509 = vmatpush1.msra.mxu0 0.0
    %2510 = vmatprep.subr.mxu0 0.0
    %2511 = vmatpush1.msra.mxu0 0.0
    %2512 = vmatprep.subr.mxu0 0.0
    %2513 = vmatpush1.msra.mxu0 0.0
    %2514 = vmatprep.mubr.f32.mxu0 0.0
    %2515 = vmatmul.mubr.f32.gmra.mrb[0].mxu0 %v2448
    %v2516 = vpop.f32.mrb[0].mxu0
    %v2517 = vadd.f32 0.0, %v2516
    %v2518 = vpop.f32.mrb[0].mxu0
    %2519 = vdwg.mxu0
    %v2521 = vrot.slane %v2517, 2
    %v2523 = vadd.f32 %v2443, %v2521
    %v2524 = vxor.u32 %v2523, 2147483648
    %v2525 = vmul.f32 %v2524, 1.442695
    %v2526 = vpow.pop %v2525
    %v2527 = vadd.f32 %v2526, 1.0
    %v2528 = vrcp.pop %v2527
    %v2529 = vmul.f32 1.0, %v2528
    %v2530 = vtanh.pop %v2523
    %v2532 = vrot.slane %v2436, 6
    %v2534 = vmul.f32 %v2529, %v2532
    %2536 = vrot.lane.b32.xlu0 %v2530, 64
    %v2537 = vpop.permute.xlu0 %2536
    %v2539 = vmul.f32 %v2529, %v2537
    %2541 = vrot.lane.b32.xlu0 %v2539, 32
    %v2542 = vpop.permute.xlu0 %2541
    %v2544 = vadd.f32 %v2534, %v2542
    %v2545 = vtanh.pop %v2544
    %2547 = vrot.lane.b32.xlu0 %v2545, 64
    %v2548 = vpop.permute.xlu0 %2547
    %v2550 = vmul.f32 %v2529, %v2548
    %v2551 = vld [vmem:[#allocation2 + $0x10] sm:$0x3]
    %v2553 = vrot.slane %v2550, 6
    %2554 = vrot.lane.b32.xlu0 %v2553, 32
    %v2555 = vpop.permute.xlu0 %2554
    %v2556 = vsel %vm180, %v2555, 0
    %2558 = vmatprep.subr.mxu0 0.0
    %2559 = vmatpush1.msra.mxu0 %v41
    %2560 = vmatprep.subr.mxu0 0.0
    %2561 = vmatpush1.msra.mxu0 %v43
    %2562 = vmatprep.subr.mxu0 0.0
    %2563 = vmatpush1.msra.mxu0 %v45
    %2564 = vmatprep.subr.mxu0 0.0
    %2565 = vmatpush1.msra.mxu0 %v47
    %2566 = vmatprep.subr.mxu0 0.0
    %2567 = vmatpush1.msra.mxu0 0.0
    %2568 = vmatprep.subr.mxu0 0.0
    %2569 = vmatpush1.msra.mxu0 0.0
    %2570 = vmatprep.subr.mxu0 0.0
    %2571 = vmatpush1.msra.mxu0 0.0
    %2572 = vmatprep.subr.mxu0 0.0
    %2573 = vmatpush1.msra.mxu0 0.0
    %2574 = vmatprep.subr.mxu0 0.0
    %2575 = vmatpush1.msra.mxu0 0.0
    %2576 = vmatprep.subr.mxu0 0.0
    %2577 = vmatpush1.msra.mxu0 0.0
    %2578 = vmatprep.subr.mxu0 0.0
    %2579 = vmatpush1.msra.mxu0 0.0
    %2580 = vmatprep.subr.mxu0 0.0
    %2581 = vmatpush1.msra.mxu0 0.0
    %2582 = vmatprep.subr.mxu0 0.0
    %2583 = vmatpush1.msra.mxu0 0.0
    %2584 = vmatprep.subr.mxu0 0.0
    %2585 = vmatpush1.msra.mxu0 0.0
    %2586 = vmatprep.subr.mxu0 0.0
    %2587 = vmatpush1.msra.mxu0 0.0
    %2588 = vmatprep.subr.mxu0 0.0
    %2589 = vmatpush1.msra.mxu0 0.0
    %2590 = vmatprep.subr.mxu0 0.0
    %2591 = vmatpush1.msra.mxu0 0.0
    %2592 = vmatprep.subr.mxu0 0.0
    %2593 = vmatpush1.msra.mxu0 0.0
    %2594 = vmatprep.subr.mxu0 0.0
    %2595 = vmatpush1.msra.mxu0 0.0
    %2596 = vmatprep.subr.mxu0 0.0
    %2597 = vmatpush1.msra.mxu0 0.0
    %2598 = vmatprep.subr.mxu0 0.0
    %2599 = vmatpush1.msra.mxu0 0.0
    %2600 = vmatprep.subr.mxu0 0.0
    %2601 = vmatpush1.msra.mxu0 0.0
    %2602 = vmatprep.subr.mxu0 0.0
    %2603 = vmatpush1.msra.mxu0 0.0
    %2604 = vmatprep.subr.mxu0 0.0
    %2605 = vmatpush1.msra.mxu0 0.0
    %2606 = vmatprep.subr.mxu0 0.0
    %2607 = vmatpush1.msra.mxu0 0.0
    %2608 = vmatprep.subr.mxu0 0.0
    %2609 = vmatpush1.msra.mxu0 0.0
    %2610 = vmatprep.subr.mxu0 0.0
    %2611 = vmatpush1.msra.mxu0 0.0
    %2612 = vmatprep.subr.mxu0 0.0
    %2613 = vmatpush1.msra.mxu0 0.0
    %2614 = vmatprep.subr.mxu0 0.0
    %2615 = vmatpush1.msra.mxu0 0.0
    %2616 = vmatprep.subr.mxu0 0.0
    %2617 = vmatpush1.msra.mxu0 0.0
    %2618 = vmatprep.subr.mxu0 0.0
    %2619 = vmatpush1.msra.mxu0 0.0
    %2620 = vmatprep.subr.mxu0 0.0
    %2621 = vmatpush1.msra.mxu0 0.0
    %2622 = vmatprep.mubr.f32.mxu0 0.0
    %2623 = vmatmul.mubr.f32.gmra.mrb[0].mxu0 %v2556
    %v2624 = vpop.f32.mrb[0].mxu0
    %v2625 = vadd.f32 0.0, %v2624
    %v2626 = vpop.f32.mrb[0].mxu0
    %2627 = vdwg.mxu0
    %v2628 = vadd.f32 %v2551, %v2625
    %v2629 = vxor.u32 %v2628, 2147483648
    %v2630 = vmul.f32 %v2629, 1.442695
    %v2631 = vpow.pop %v2630
    %v2632 = vadd.f32 %v2631, 1.0
    %v2633 = vrcp.pop %v2632
    %v2634 = vmul.f32 1.0, %v2633
    %v2635 = vtanh.pop %v2628
    %v2637 = vrot.slane %v2544, 6
    %v2639 = vmul.f32 %v2634, %v2637
    %2641 = vrot.lane.b32.xlu0 %v2635, 64
    %v2642 = vpop.permute.xlu0 %2641
    %v2644 = vmul.f32 %v2634, %v2642
    %2646 = vrot.lane.b32.xlu0 %v2644, 32
    %v2647 = vpop.permute.xlu0 %2646
    %v2649 = vadd.f32 %v2639, %v2647
    %v2650 = vtanh.pop %v2649
    %2652 = vrot.lane.b32.xlu0 %v2650, 64
    %v2653 = vpop.permute.xlu0 %2652
    %v2655 = vmul.f32 %v2634, %v2653
    %v2656 = vld [vmem:[#allocation2 + $0x10] sm:$0xc]
    %2658 = vrot.lane.b32.xlu0 %v2655, 32
    %v2659 = vpop.permute.xlu0 %2658
    %v2660 = vsel %vm180, %v2659, 0
    %2662 = vmatprep.subr.mxu0 0.0
    %2663 = vmatpush1.msra.mxu0 %v41
    %2664 = vmatprep.subr.mxu0 0.0
    %2665 = vmatpush1.msra.mxu0 %v43
    %2666 = vmatprep.subr.mxu0 0.0
    %2667 = vmatpush1.msra.mxu0 %v45
    %2668 = vmatprep.subr.mxu0 0.0
    %2669 = vmatpush1.msra.mxu0 %v47
    %2670 = vmatprep.subr.mxu0 0.0
    %2671 = vmatpush1.msra.mxu0 0.0
    %2672 = vmatprep.subr.mxu0 0.0
    %2673 = vmatpush1.msra.mxu0 0.0
    %2674 = vmatprep.subr.mxu0 0.0
    %2675 = vmatpush1.msra.mxu0 0.0
    %2676 = vmatprep.subr.mxu0 0.0
    %2677 = vmatpush1.msra.mxu0 0.0
    %2678 = vmatprep.subr.mxu0 0.0
    %2679 = vmatpush1.msra.mxu0 0.0
    %2680 = vmatprep.subr.mxu0 0.0
    %2681 = vmatpush1.msra.mxu0 0.0
    %2682 = vmatprep.subr.mxu0 0.0
    %2683 = vmatpush1.msra.mxu0 0.0
    %2684 = vmatprep.subr.mxu0 0.0
    %2685 = vmatpush1.msra.mxu0 0.0
    %2686 = vmatprep.subr.mxu0 0.0
    %2687 = vmatpush1.msra.mxu0 0.0
    %2688 = vmatprep.subr.mxu0 0.0
    %2689 = vmatpush1.msra.mxu0 0.0
    %2690 = vmatprep.subr.mxu0 0.0
    %2691 = vmatpush1.msra.mxu0 0.0
    %2692 = vmatprep.subr.mxu0 0.0
    %2693 = vmatpush1.msra.mxu0 0.0
    %2694 = vmatprep.subr.mxu0 0.0
    %2695 = vmatpush1.msra.mxu0 0.0
    %2696 = vmatprep.subr.mxu0 0.0
    %2697 = vmatpush1.msra.mxu0 0.0
    %2698 = vmatprep.subr.mxu0 0.0
    %2699 = vmatpush1.msra.mxu0 0.0
    %2700 = vmatprep.subr.mxu0 0.0
    %2701 = vmatpush1.msra.mxu0 0.0
    %2702 = vmatprep.subr.mxu0 0.0
    %2703 = vmatpush1.msra.mxu0 0.0
    %2704 = vmatprep.subr.mxu0 0.0
    %2705 = vmatpush1.msra.mxu0 0.0
    %2706 = vmatprep.subr.mxu0 0.0
    %2707 = vmatpush1.msra.mxu0 0.0
    %2708 = vmatprep.subr.mxu0 0.0
    %2709 = vmatpush1.msra.mxu0 0.0
    %2710 = vmatprep.subr.mxu0 0.0
    %2711 = vmatpush1.msra.mxu0 0.0
    %2712 = vmatprep.subr.mxu0 0.0
    %2713 = vmatpush1.msra.mxu0 0.0
    %2714 = vmatprep.subr.mxu0 0.0
    %2715 = vmatpush1.msra.mxu0 0.0
    %2716 = vmatprep.subr.mxu0 0.0
    %2717 = vmatpush1.msra.mxu0 0.0
    %2718 = vmatprep.subr.mxu0 0.0
    %2719 = vmatpush1.msra.mxu0 0.0
    %2720 = vmatprep.subr.mxu0 0.0
    %2721 = vmatpush1.msra.mxu0 0.0
    %2722 = vmatprep.subr.mxu0 0.0
    %2723 = vmatpush1.msra.mxu0 0.0
    %2724 = vmatprep.subr.mxu0 0.0
    %2725 = vmatpush1.msra.mxu0 0.0
    %2726 = vmatprep.mubr.f32.mxu0 0.0
    %2727 = vmatmul.mubr.f32.gmra.mrb[0].mxu0 %v2660
    %v2728 = vpop.f32.mrb[0].mxu0
    %v2729 = vadd.f32 0.0, %v2728
    %v2730 = vpop.f32.mrb[0].mxu0
    %2731 = vdwg.mxu0
    %v2733 = vrot.slane %v2729, 6
    %v2735 = vadd.f32 %v2656, %v2733
    %v2736 = vxor.u32 %v2735, 2147483648
    %v2737 = vmul.f32 %v2736, 1.442695
    %v2738 = vpow.pop %v2737
    %v2739 = vadd.f32 %v2738, 1.0
    %v2740 = vrcp.pop %v2739
    %v2741 = vmul.f32 1.0, %v2740
    %v2742 = vtanh.pop %v2735
    %v2744 = vrot.slane %v2649, 6
    %v2746 = vmul.f32 %v2741, %v2744
    %2748 = vrot.lane.b32.xlu0 %v2742, 64
    %v2749 = vpop.permute.xlu0 %2748
    %v2751 = vmul.f32 %v2741, %v2749
    %2753 = vrot.lane.b32.xlu0 %v2751, 32
    %v2754 = vpop.permute.xlu0 %2753
    %v2756 = vadd.f32 %v2746, %v2754
    %v2757 = vtanh.pop %v2756
    %2759 = vrot.lane.b32.xlu0 %v2757, 64
    %v2760 = vpop.permute.xlu0 %2759
    %v2762 = vmul.f32 %v2741, %v2760
    %v2763 = vld [vmem:[#allocation2 + $0x10] sm:$0x30]
    %v2765 = vrot.slane %v2762, 2
    %2766 = vrot.lane.b32.xlu0 %v2765, 32
    %v2767 = vpop.permute.xlu0 %2766
    %v2768 = vsel %vm180, %v2767, 0
    %2770 = vmatprep.subr.mxu0 0.0
    %2771 = vmatpush1.msra.mxu0 %v41
    %2772 = vmatprep.subr.mxu0 0.0
    %2773 = vmatpush1.msra.mxu0 %v43
    %2774 = vmatprep.subr.mxu0 0.0
    %2775 = vmatpush1.msra.mxu0 %v45
    %2776 = vmatprep.subr.mxu0 0.0
    %2777 = vmatpush1.msra.mxu0 %v47
    %2778 = vmatprep.subr.mxu0 0.0
    %2779 = vmatpush1.msra.mxu0 0.0
    %2780 = vmatprep.subr.mxu0 0.0
    %2781 = vmatpush1.msra.mxu0 0.0
    %2782 = vmatprep.subr.mxu0 0.0
    %2783 = vmatpush1.msra.mxu0 0.0
    %2784 = vmatprep.subr.mxu0 0.0
    %2785 = vmatpush1.msra.mxu0 0.0
    %2786 = vmatprep.subr.mxu0 0.0
    %2787 = vmatpush1.msra.mxu0 0.0
    %2788 = vmatprep.subr.mxu0 0.0
    %2789 = vmatpush1.msra.mxu0 0.0
    %2790 = vmatprep.subr.mxu0 0.0
    %2791 = vmatpush1.msra.mxu0 0.0
    %2792 = vmatprep.subr.mxu0 0.0
    %2793 = vmatpush1.msra.mxu0 0.0
    %2794 = vmatprep.subr.mxu0 0.0
    %2795 = vmatpush1.msra.mxu0 0.0
    %2796 = vmatprep.subr.mxu0 0.0
    %2797 = vmatpush1.msra.mxu0 0.0
    %2798 = vmatprep.subr.mxu0 0.0
    %2799 = vmatpush1.msra.mxu0 0.0
    %2800 = vmatprep.subr.mxu0 0.0
    %2801 = vmatpush1.msra.mxu0 0.0
    %2802 = vmatprep.subr.mxu0 0.0
    %2803 = vmatpush1.msra.mxu0 0.0
    %2804 = vmatprep.subr.mxu0 0.0
    %2805 = vmatpush1.msra.mxu0 0.0
    %2806 = vmatprep.subr.mxu0 0.0
    %2807 = vmatpush1.msra.mxu0 0.0
    %2808 = vmatprep.subr.mxu0 0.0
    %2809 = vmatpush1.msra.mxu0 0.0
    %2810 = vmatprep.subr.mxu0 0.0
    %2811 = vmatpush1.msra.mxu0 0.0
    %2812 = vmatprep.subr.mxu0 0.0
    %2813 = vmatpush1.msra.mxu0 0.0
    %2814 = vmatprep.subr.mxu0 0.0
    %2815 = vmatpush1.msra.mxu0 0.0
    %2816 = vmatprep.subr.mxu0 0.0
    %2817 = vmatpush1.msra.mxu0 0.0
    %2818 = vmatprep.subr.mxu0 0.0
    %2819 = vmatpush1.msra.mxu0 0.0
    %2820 = vmatprep.subr.mxu0 0.0
    %2821 = vmatpush1.msra.mxu0 0.0
    %2822 = vmatprep.subr.mxu0 0.0
    %2823 = vmatpush1.msra.mxu0 0.0
    %2824 = vmatprep.subr.mxu0 0.0
    %2825 = vmatpush1.msra.mxu0 0.0
    %2826 = vmatprep.subr.mxu0 0.0
    %2827 = vmatpush1.msra.mxu0 0.0
    %2828 = vmatprep.subr.mxu0 0.0
    %2829 = vmatpush1.msra.mxu0 0.0
    %2830 = vmatprep.subr.mxu0 0.0
    %2831 = vmatpush1.msra.mxu0 0.0
    %2832 = vmatprep.subr.mxu0 0.0
    %2833 = vmatpush1.msra.mxu0 0.0
    %2834 = vmatprep.mubr.f32.mxu0 0.0
    %2835 = vmatmul.mubr.f32.gmra.mrb[0].mxu0 %v2768
    %v2836 = vpop.f32.mrb[0].mxu0
    %v2837 = vadd.f32 0.0, %v2836
    %v2838 = vpop.f32.mrb[0].mxu0
    %2839 = vdwg.mxu0
    %v2841 = vrot.slane %v2837, 4
    %v2843 = vadd.f32 %v2763, %v2841
    %v2844 = vxor.u32 %v2843, 2147483648
    %v2845 = vmul.f32 %v2844, 1.442695
    %v2846 = vpow.pop %v2845
    %v2847 = vadd.f32 %v2846, 1.0
    %v2848 = vrcp.pop %v2847
    %v2849 = vmul.f32 1.0, %v2848
    %v2850 = vtanh.pop %v2843
    %v2852 = vrot.slane %v2756, 6
    %v2854 = vmul.f32 %v2849, %v2852
    %2856 = vrot.lane.b32.xlu0 %v2850, 64
    %v2857 = vpop.permute.xlu0 %2856
    %v2859 = vmul.f32 %v2849, %v2857
    %2861 = vrot.lane.b32.xlu0 %v2859, 32
    %v2862 = vpop.permute.xlu0 %2861
    %v2864 = vadd.f32 %v2854, %v2862
    %v2865 = vtanh.pop %v2864
    %2867 = vrot.lane.b32.xlu0 %v2865, 64
    %v2868 = vpop.permute.xlu0 %2867
    %v2870 = vmul.f32 %v2849, %v2868
    %v2871 = vld [vmem:[#allocation2 + $0x10] sm:$0xc0]
    %v2872 = vld [vmem:[#allocation2 + $0x18] sm:$0xc0]
    %v2874 = vrot.slane %v2870, 4
    %2875 = vrot.lane.b32.xlu0 %v2874, 32
    %v2876 = vpop.permute.xlu0 %2875
    %v2877 = vsel %vm180, %v2876, 0
    %2879 = vmatprep.subr.mxu0 0.0
    %2880 = vmatpush1.msra.mxu0 %v41
    %2881 = vmatprep.subr.mxu0 0.0
    %2882 = vmatpush1.msra.mxu0 %v43
    %2883 = vmatprep.subr.mxu0 0.0
    %2884 = vmatpush1.msra.mxu0 %v45
    %2885 = vmatprep.subr.mxu0 0.0
    %2886 = vmatpush1.msra.mxu0 %v47
    %2887 = vmatprep.subr.mxu0 0.0
    %2888 = vmatpush1.msra.mxu0 0.0
    %2889 = vmatprep.subr.mxu0 0.0
    %2890 = vmatpush1.msra.mxu0 0.0
    %2891 = vmatprep.subr.mxu0 0.0
    %2892 = vmatpush1.msra.mxu0 0.0
    %2893 = vmatprep.subr.mxu0 0.0
    %2894 = vmatpush1.msra.mxu0 0.0
    %2895 = vmatprep.subr.mxu0 0.0
    %2896 = vmatpush1.msra.mxu0 0.0
    %2897 = vmatprep.subr.mxu0 0.0
    %2898 = vmatpush1.msra.mxu0 0.0
    %2899 = vmatprep.subr.mxu0 0.0
    %2900 = vmatpush1.msra.mxu0 0.0
    %2901 = vmatprep.subr.mxu0 0.0
    %2902 = vmatpush1.msra.mxu0 0.0
    %2903 = vmatprep.subr.mxu0 0.0
    %2904 = vmatpush1.msra.mxu0 0.0
    %2905 = vmatprep.subr.mxu0 0.0
    %2906 = vmatpush1.msra.mxu0 0.0
    %2907 = vmatprep.subr.mxu0 0.0
    %2908 = vmatpush1.msra.mxu0 0.0
    %2909 = vmatprep.subr.mxu0 0.0
    %2910 = vmatpush1.msra.mxu0 0.0
    %2911 = vmatprep.subr.mxu0 0.0
    %2912 = vmatpush1.msra.mxu0 0.0
    %2913 = vmatprep.subr.mxu0 0.0
    %2914 = vmatpush1.msra.mxu0 0.0
    %2915 = vmatprep.subr.mxu0 0.0
    %2916 = vmatpush1.msra.mxu0 0.0
    %2917 = vmatprep.subr.mxu0 0.0
    %2918 = vmatpush1.msra.mxu0 0.0
    %2919 = vmatprep.subr.mxu0 0.0
    %2920 = vmatpush1.msra.mxu0 0.0
    %2921 = vmatprep.subr.mxu0 0.0
    %2922 = vmatpush1.msra.mxu0 0.0
    %2923 = vmatprep.subr.mxu0 0.0
    %2924 = vmatpush1.msra.mxu0 0.0
    %2925 = vmatprep.subr.mxu0 0.0
    %2926 = vmatpush1.msra.mxu0 0.0
    %2927 = vmatprep.subr.mxu0 0.0
    %2928 = vmatpush1.msra.mxu0 0.0
    %2929 = vmatprep.subr.mxu0 0.0
    %2930 = vmatpush1.msra.mxu0 0.0
    %2931 = vmatprep.subr.mxu0 0.0
    %2932 = vmatpush1.msra.mxu0 0.0
    %2933 = vmatprep.subr.mxu0 0.0
    %2934 = vmatpush1.msra.mxu0 0.0
    %2935 = vmatprep.subr.mxu0 0.0
    %2936 = vmatpush1.msra.mxu0 0.0
    %2937 = vmatprep.subr.mxu0 0.0
    %2938 = vmatpush1.msra.mxu0 0.0
    %2939 = vmatprep.subr.mxu0 0.0
    %2940 = vmatpush1.msra.mxu0 0.0
    %2941 = vmatprep.subr.mxu0 0.0
    %2942 = vmatpush1.msra.mxu0 0.0
    %2943 = vmatprep.mubr.f32.mxu0 0.0
    %2944 = vmatmul.mubr.f32.gmra.mrb[0].mxu0 %v2877
    %v2945 = vpop.f32.mrb[0].mxu0
    %v2946 = vadd.f32 0.0, %v2945
    %v2947 = vpop.f32.mrb[0].mxu0
    %2948 = vdwg.mxu0
    %v2950 = vrot.slane %v2946, 2
    %v2952 = vadd.f32 %v2871, %v2950
    %v2953 = vxor.u32 %v2952, 2147483648
    %v2954 = vmul.f32 %v2953, 1.442695
    %v2955 = vpow.pop %v2954
    %v2956 = vadd.f32 %v2955, 1.0
    %v2957 = vrcp.pop %v2956
    %v2958 = vmul.f32 1.0, %v2957
    %v2959 = vtanh.pop %v2952
    %v2961 = vrot.slane %v2864, 6
    %v2963 = vmul.f32 %v2958, %v2961
    %2965 = vrot.lane.b32.xlu0 %v2959, 64
    %v2966 = vpop.permute.xlu0 %2965
    %v2968 = vmul.f32 %v2958, %v2966
    %2970 = vrot.lane.b32.xlu0 %v2968, 32
    %v2971 = vpop.permute.xlu0 %2970
    %v2973 = vadd.f32 %v2963, %v2971
    %v2974 = vtanh.pop %v2973
    %2976 = vrot.lane.b32.xlu0 %v2974, 64
    %v2977 = vpop.permute.xlu0 %2976
    %v2979 = vmul.f32 %v2958, %v2977
    %2980 = vmatprep.subr.mxu0 0.0
    %2981 = vmatpush1.msra.mxu0 %v42
    %2982 = vmatprep.subr.mxu0 0.0
    %2983 = vmatpush1.msra.mxu0 %v44
    %2984 = vmatprep.subr.mxu0 0.0
    %2985 = vmatpush1.msra.mxu0 %v46
    %2986 = vmatprep.subr.mxu0 0.0
    %2987 = vmatpush1.msra.mxu0 %v48
    %2988 = vmatprep.subr.mxu0 0.0
    %2989 = vmatpush1.msra.mxu0 0.0
    %2990 = vmatprep.subr.mxu0 0.0
    %2991 = vmatpush1.msra.mxu0 0.0
    %2992 = vmatprep.subr.mxu0 0.0
    %2993 = vmatpush1.msra.mxu0 0.0
    %2994 = vmatprep.subr.mxu0 0.0
    %2995 = vmatpush1.msra.mxu0 0.0
    %2996 = vmatprep.subr.mxu0 0.0
    %2997 = vmatpush1.msra.mxu0 0.0
    %2998 = vmatprep.subr.mxu0 0.0
    %2999 = vmatpush1.msra.mxu0 0.0
    %3000 = vmatprep.subr.mxu0 0.0
    %3001 = vmatpush1.msra.mxu0 0.0
    %3002 = vmatprep.subr.mxu0 0.0
    %3003 = vmatpush1.msra.mxu0 0.0
    %3004 = vmatprep.subr.mxu0 0.0
    %3005 = vmatpush1.msra.mxu0 0.0
    %3006 = vmatprep.subr.mxu0 0.0
    %3007 = vmatpush1.msra.mxu0 0.0
    %3008 = vmatprep.subr.mxu0 0.0
    %3009 = vmatpush1.msra.mxu0 0.0
    %3010 = vmatprep.subr.mxu0 0.0
    %3011 = vmatpush1.msra.mxu0 0.0
    %3012 = vmatprep.subr.mxu0 0.0
    %3013 = vmatpush1.msra.mxu0 0.0
    %3014 = vmatprep.subr.mxu0 0.0
    %3015 = vmatpush1.msra.mxu0 0.0
    %3016 = vmatprep.subr.mxu0 0.0
    %3017 = vmatpush1.msra.mxu0 0.0
    %3018 = vmatprep.subr.mxu0 0.0
    %3019 = vmatpush1.msra.mxu0 0.0
    %3020 = vmatprep.subr.mxu0 0.0
    %3021 = vmatpush1.msra.mxu0 0.0
    %3022 = vmatprep.subr.mxu0 0.0
    %3023 = vmatpush1.msra.mxu0 0.0
    %3024 = vmatprep.subr.mxu0 0.0
    %3025 = vmatpush1.msra.mxu0 0.0
    %3026 = vmatprep.subr.mxu0 0.0
    %3027 = vmatpush1.msra.mxu0 0.0
    %3028 = vmatprep.subr.mxu0 0.0
    %3029 = vmatpush1.msra.mxu0 0.0
    %3030 = vmatprep.subr.mxu0 0.0
    %3031 = vmatpush1.msra.mxu0 0.0
    %3032 = vmatprep.subr.mxu0 0.0
    %3033 = vmatpush1.msra.mxu0 0.0
    %3034 = vmatprep.subr.mxu0 0.0
    %3035 = vmatpush1.msra.mxu0 0.0
    %3036 = vmatprep.subr.mxu0 0.0
    %3037 = vmatpush1.msra.mxu0 0.0
    %3038 = vmatprep.subr.mxu0 0.0
    %3039 = vmatpush1.msra.mxu0 0.0
    %3040 = vmatprep.subr.mxu0 0.0
    %3041 = vmatpush1.msra.mxu0 0.0
    %3042 = vmatprep.subr.mxu0 0.0
    %3043 = vmatpush1.msra.mxu0 0.0
    %3044 = vmatprep.mubr.f32.mxu0 0.0
    %3045 = vmatmul.mubr.f32.gmra.mrb[0].mxu0 %v182
    %v3046 = vpop.f32.mrb[0].mxu0
    %v3047 = vadd.f32 0.0, %v3046
    %v3048 = vpop.f32.mrb[0].mxu0
    %3049 = vdwg.mxu0
    %v3051 = vrot.slane %v3047, 2
    %v3053 = vadd.f32 %v2872, %v3051
    %v3054 = vxor.u32 %v3053, 2147483648
    %v3055 = vmul.f32 %v3054, 1.442695
    %v3056 = vpow.pop %v3055
    %v3057 = vadd.f32 %v3056, 1.0
    %v3058 = vrcp.pop %v3057
    %v3059 = vmul.f32 1.0, %v3058
    %v3060 = vtanh.pop %v3053
    %v3061 = vmul.f32 %v3059, 0.0
    %3063 = vrot.lane.b32.xlu0 %v3060, 64
    %v3064 = vpop.permute.xlu0 %3063
    %v3066 = vmul.f32 %v3059, %v3064
    %3068 = vrot.lane.b32.xlu0 %v3066, 32
    %v3069 = vpop.permute.xlu0 %3068
    %v3071 = vadd.f32 %v3061, %v3069
    %v3072 = vtanh.pop %v3071
    %3074 = vrot.lane.b32.xlu0 %v3072, 64
    %v3075 = vpop.permute.xlu0 %3074
    %v3077 = vmul.f32 %v3059, %v3075
    %v3079 = vrot.slane %v3077, 6
    %3080 = vrot.lane.b32.xlu0 %v3079, 32
    %v3081 = vpop.permute.xlu0 %3080
    %v3082 = vsel %vm180, %v3081, 0
    %3084 = vmatprep.subr.mxu0 0.0
    %3085 = vmatpush1.msra.mxu0 %v69
    %3086 = vmatprep.subr.mxu0 0.0
    %3087 = vmatpush1.msra.mxu0 %v70
    %3088 = vmatprep.subr.mxu0 0.0
    %3089 = vmatpush1.msra.mxu0 %v71
    %3090 = vmatprep.subr.mxu0 0.0
    %3091 = vmatpush1.msra.mxu0 %v72
    %3092 = vmatprep.subr.mxu0 0.0
    %3093 = vmatpush1.msra.mxu0 0.0
    %3094 = vmatprep.subr.mxu0 0.0
    %3095 = vmatpush1.msra.mxu0 0.0
    %3096 = vmatprep.subr.mxu0 0.0
    %3097 = vmatpush1.msra.mxu0 0.0
    %3098 = vmatprep.subr.mxu0 0.0
    %3099 = vmatpush1.msra.mxu0 0.0
    %3100 = vmatprep.subr.mxu0 0.0
    %3101 = vmatpush1.msra.mxu0 0.0
    %3102 = vmatprep.subr.mxu0 0.0
    %3103 = vmatpush1.msra.mxu0 0.0
    %3104 = vmatprep.subr.mxu0 0.0
    %3105 = vmatpush1.msra.mxu0 0.0
    %3106 = vmatprep.subr.mxu0 0.0
    %3107 = vmatpush1.msra.mxu0 0.0
    %3108 = vmatprep.subr.mxu0 0.0
    %3109 = vmatpush1.msra.mxu0 0.0
    %3110 = vmatprep.subr.mxu0 0.0
    %3111 = vmatpush1.msra.mxu0 0.0
    %3112 = vmatprep.subr.mxu0 0.0
    %3113 = vmatpush1.msra.mxu0 0.0
    %3114 = vmatprep.subr.mxu0 0.0
    %3115 = vmatpush1.msra.mxu0 0.0
    %3116 = vmatprep.subr.mxu0 0.0
    %3117 = vmatpush1.msra.mxu0 0.0
    %3118 = vmatprep.subr.mxu0 0.0
    %3119 = vmatpush1.msra.mxu0 0.0
    %3120 = vmatprep.subr.mxu0 0.0
    %3121 = vmatpush1.msra.mxu0 0.0
    %3122 = vmatprep.subr.mxu0 0.0
    %3123 = vmatpush1.msra.mxu0 0.0
    %3124 = vmatprep.subr.mxu0 0.0
    %3125 = vmatpush1.msra.mxu0 0.0
    %3126 = vmatprep.subr.mxu0 0.0
    %3127 = vmatpush1.msra.mxu0 0.0
    %3128 = vmatprep.subr.mxu0 0.0
    %3129 = vmatpush1.msra.mxu0 0.0
    %3130 = vmatprep.subr.mxu0 0.0
    %3131 = vmatpush1.msra.mxu0 0.0
    %3132 = vmatprep.subr.mxu0 0.0
    %3133 = vmatpush1.msra.mxu0 0.0
    %3134 = vmatprep.subr.mxu0 0.0
    %3135 = vmatpush1.msra.mxu0 0.0
    %3136 = vmatprep.subr.mxu0 0.0
    %3137 = vmatpush1.msra.mxu0 0.0
    %3138 = vmatprep.subr.mxu0 0.0
    %3139 = vmatpush1.msra.mxu0 0.0
    %3140 = vmatprep.subr.mxu0 0.0
    %3141 = vmatpush1.msra.mxu0 0.0
    %3142 = vmatprep.subr.mxu0 0.0
    %3143 = vmatpush1.msra.mxu0 0.0
    %3144 = vmatprep.subr.mxu0 0.0
    %3145 = vmatpush1.msra.mxu0 0.0
    %3146 = vmatprep.subr.mxu0 0.0
    %3147 = vmatpush1.msra.mxu0 0.0
    %3148 = vmatprep.mubr.f32.mxu0 0.0
    %3149 = vmatmul.mubr.f32.gmra.mrb[0].mxu0 %v3082
    %v3150 = vpop.f32.mrb[0].mxu0
    %v3151 = vadd.f32 0.0, %v3150
    %v3152 = vpop.f32.mrb[0].mxu0
    %3153 = vdwg.mxu0
    %v3155 = vrot.slane %v2979, 6
    %3156 = vrot.lane.b32.xlu0 %v3155, 32
    %v3157 = vpop.permute.xlu0 %3156
    %v3158 = vsel %vm180, %v3157, 0
    %3160 = vmatprep.subr.mxu0 0.0
    %3161 = vmatpush1.msra.mxu0 %v65
    %3162 = vmatprep.subr.mxu0 0.0
    %3163 = vmatpush1.msra.mxu0 %v66
    %3164 = vmatprep.subr.mxu0 0.0
    %3165 = vmatpush1.msra.mxu0 %v67
    %3166 = vmatprep.subr.mxu0 0.0
    %3167 = vmatpush1.msra.mxu0 %v68
    %3168 = vmatprep.subr.mxu0 0.0
    %3169 = vmatpush1.msra.mxu0 0.0
    %3170 = vmatprep.subr.mxu0 0.0
    %3171 = vmatpush1.msra.mxu0 0.0
    %3172 = vmatprep.subr.mxu0 0.0
    %3173 = vmatpush1.msra.mxu0 0.0
    %3174 = vmatprep.subr.mxu0 0.0
    %3175 = vmatpush1.msra.mxu0 0.0
    %3176 = vmatprep.subr.mxu0 0.0
    %3177 = vmatpush1.msra.mxu0 0.0
    %3178 = vmatprep.subr.mxu0 0.0
    %3179 = vmatpush1.msra.mxu0 0.0
    %3180 = vmatprep.subr.mxu0 0.0
    %3181 = vmatpush1.msra.mxu0 0.0
    %3182 = vmatprep.subr.mxu0 0.0
    %3183 = vmatpush1.msra.mxu0 0.0
    %3184 = vmatprep.subr.mxu0 0.0
    %3185 = vmatpush1.msra.mxu0 0.0
    %3186 = vmatprep.subr.mxu0 0.0
    %3187 = vmatpush1.msra.mxu0 0.0
    %3188 = vmatprep.subr.mxu0 0.0
    %3189 = vmatpush1.msra.mxu0 0.0
    %3190 = vmatprep.subr.mxu0 0.0
    %3191 = vmatpush1.msra.mxu0 0.0
    %3192 = vmatprep.subr.mxu0 0.0
    %3193 = vmatpush1.msra.mxu0 0.0
    %3194 = vmatprep.subr.mxu0 0.0
    %3195 = vmatpush1.msra.mxu0 0.0
    %3196 = vmatprep.subr.mxu0 0.0
    %3197 = vmatpush1.msra.mxu0 0.0
    %3198 = vmatprep.subr.mxu0 0.0
    %3199 = vmatpush1.msra.mxu0 0.0
    %3200 = vmatprep.subr.mxu0 0.0
    %3201 = vmatpush1.msra.mxu0 0.0
    %3202 = vmatprep.subr.mxu0 0.0
    %3203 = vmatpush1.msra.mxu0 0.0
    %3204 = vmatprep.subr.mxu0 0.0
    %3205 = vmatpush1.msra.mxu0 0.0
    %3206 = vmatprep.subr.mxu0 0.0
    %3207 = vmatpush1.msra.mxu0 0.0
    %3208 = vmatprep.subr.mxu0 0.0
    %3209 = vmatpush1.msra.mxu0 0.0
    %3210 = vmatprep.subr.mxu0 0.0
    %3211 = vmatpush1.msra.mxu0 0.0
    %3212 = vmatprep.subr.mxu0 0.0
    %3213 = vmatpush1.msra.mxu0 0.0
    %3214 = vmatprep.subr.mxu0 0.0
    %3215 = vmatpush1.msra.mxu0 0.0
    %3216 = vmatprep.subr.mxu0 0.0
    %3217 = vmatpush1.msra.mxu0 0.0
    %3218 = vmatprep.subr.mxu0 0.0
    %3219 = vmatpush1.msra.mxu0 0.0
    %3220 = vmatprep.subr.mxu0 0.0
    %3221 = vmatpush1.msra.mxu0 0.0
    %3222 = vmatprep.subr.mxu0 0.0
    %3223 = vmatpush1.msra.mxu0 0.0
    %3224 = vmatprep.mubr.f32.mxu0 0.0
    %3225 = vmatmul.mubr.f32.gmra.mrb[0].mxu0 %v3158
    %v3226 = vpop.f32.mrb[0].mxu0
    %v3227 = vadd.f32 %v3151, %v3226
    %v3228 = vpop.f32.mrb[0].mxu0
    %3229 = vdwg.mxu0
    %v3230 = vld [vmem:[%s8] sm:$0x1]
    %v3232 = vlaneseq
    %v3233 = vshrl.u32 %v3232, 7
    %v3234 = vsub.s32 0, %v3233
    %v3235 = vrot.slane %v3230, %v3234
    %v3237 = vadd.f32 %v3227, %v3235
    %v3238 = vxor.u32 %v3237, 2147483648
    %v3239 = vmul.f32 %v3238, 1.442695
    %v3240 = vpow.pop %v3239
    %v3241 = vadd.f32 %v3240, 1.0
    %v3242 = vrcp.pop %v3241
    %v3243 = vmul.f32 1.0, %v3242
    %vm3244 = vcmask 345088
    %3245 = vst.msk [vmem:[#allocation5] sm:$0x3] %vm3244, %v3243
    // Predicated region
    $region38: #{bi_lstm_forward.1} parent=1 // pred_check
      _
    $region39: #{bi_lstm_forward.1} parent=1 // pred_check_branch
      %3247 = sbr.rel (0) target = $region41
    $region40: #{bi_lstm_forward.1} parent=1 // pred_region
      %s3249 = ssub.s32 32, 32
      %3250 = vsyncadd [#allocation6], %s3249
      %s3252 = sshll.u32 [#allocation5], 4
      %s3253 = int_to_ptr.vmem [resolvable:$true] %s3252
      %3255 = dma.vmem_to_hbm [thread:$0]  %s3253, 32, %s9, [#allocation6]
    $region41: #{bi_lstm_forward.1} parent=1 // pred_fallthru
      _
    // Predicated region
    $region42: #{bi_lstm_forward.1} parent=1 // pred_check
      _
    $region43: #{bi_lstm_forward.1} parent=1 // pred_check_branch
      %3257 = sbr.rel (0) target = $region45
    $region44: #{bi_lstm_forward.1} parent=1 // pred_region
      %3258 = dma.done [#allocation6], 32
    $region45: #{bi_lstm_forward.1} parent=1 // pred_fallthru
      _
    %3259 = vsyncpa [#allocation6], 1

</llo_original>
